<compile_context>
chip_gen: v7x
topology: tpu7x:2x2x1
jax: 0.10.0
libtpu: 0.0.40
codegen_flags: <defaults>
</compile_context>

<pallas_src>
import functools

import numpy as np
import jax
import jax.numpy as jnp
from jax import lax
from jax.experimental import pallas as pl
from jax.experimental.pallas import tpu as pltpu

# Geometry implied by the PyTorch module (fc = Linear(64*2*2, d) => 8x8 input).
H = W = 8
C_IN, C1, C2 = 3, 32, 64
FH = H + 2                 # padded frame height (rows per sample)
FW = W + 2                 # padded frame width
LX = 32                    # input lane group per dy tap: FW*C_IN = 30, padded to 32
HALO = 8                   # row halo on shift scratches
B_TILE = 32                # samples per grid step (raise for v6e, cap ~192-256 on v7x)


def cnn_encoder_kernel(x_ref, w1_ref, b1_ref, w2_ref, b2_ref, wf0_ref, wf1_ref, bf_ref,
                       out_ref, s0, p1, sA, sB, p2, sC, *, bt):
    f32 = jnp.float32
    bf16 = jnp.bfloat16
    n = bt * FH                                   # rows this step: row = b*10 + hh

    # ---- stage zero-padded input frames (lanes = ww*3+ci, lanes 30..31 are zero) ----
    s0[HALO:HALO + n, :] = x_ref[...]

    # ---- conv1: im2col over dy only (3 shifted reads -> lane blocks), one matmul ----
    # dx taps are folded into the wide weight matrix (wrapper-built block-Toeplitz).
    for t in range(3):                            # t = ky, row shift = t-1
        p1[:, t * LX:(t + 1) * LX] = s0[HALO + t - 1:HALO + t - 1 + n, :].astype(bf16)
    y1 = jnp.dot(p1[...], w1_ref[...], preferred_element_type=f32)     # (n, 256)
    y1 = jnp.maximum(y1 + b1_ref[...], 0.0)       # lane = j*128 + q*32 + co, w = 2q+j

    # ---- maxpool1: h-pair via +1-row shifted read, w-pair via 128-lane halves ----
    sA[HALO:HALO + n, :] = y1
    m1 = jnp.maximum(y1, sA[HALO + 1:HALO + 1 + n, :])
    m1 = jnp.maximum(m1[:, :128], m1[:, 128:])    # (n, 128), lane = q*32 + ci
    hh = lax.broadcasted_iota(jnp.int32, (n, 1), 0) % FH
    valid = jnp.logical_and(hh % 2 == 1, hh < 1 + H)   # pool rows hh in {1,3,5,7}
    m1 = jnp.where(valid, m1, 0.0)                # exact zeros = conv2 row padding
    sB[:HALO, :] = jnp.zeros((HALO, 128), bf16)   # halo rows act as p=-1 / p=4 padding
    sB[HALO + n:, :] = jnp.zeros((HALO, 128), bf16)
    sB[HALO:HALO + n, :] = m1.astype(bf16)

    # ---- conv2: im2col over dy (row shifts -2/0/+2 -> lane blocks), one matmul ----
    for t in range(3):
        p2[:, t * 128:(t + 1) * 128] = sB[HALO + 2 * (t - 1):HALO + 2 * (t - 1) + n, :]
    y2 = jnp.dot(p2[...], w2_ref[...], preferred_element_type=f32)     # (n, 256)
    y2 = jnp.maximum(y2 + b2_ref[...], 0.0)       # lane = j2*128 + v*64 + co2, q = 2v+j2

    # ---- maxpool2 + fc: q-pair via halves, p-pair via strided per-sample row reads ----
    sC[...] = jnp.maximum(y2[:, :128], y2[:, 128:])      # (n, 128), lane = v*64 + co2
    r1 = sC[pl.ds(1, bt, stride=FH), :]           # conv2 rows at p=0 (one per sample)
    r3 = sC[pl.ds(3, bt, stride=FH), :]           # p=1
    r5 = sC[pl.ds(5, bt, stride=FH), :]           # p=2
    r7 = sC[pl.ds(7, bt, stride=FH), :]           # p=3
    g0 = jnp.maximum(r1, r3).astype(bf16)         # pool2 u=0: (bt, 128)
    g1 = jnp.maximum(r5, r7).astype(bf16)         # pool2 u=1
    out = (jnp.dot(g0, wf0_ref[...], preferred_element_type=f32) +
           jnp.dot(g1, wf1_ref[...], preferred_element_type=f32) + bf_ref[...])
    out_ref[...] = out                            # lane-dense (bt, Dp) store


def cnn_encoder(x_nchw, kp, d_model, *, b_tile=B_TILE):
    B = x_nchw.shape[0]
    Dp = kp["wf0"].shape[-1]
    bt = b_tile
    bp = ((B + bt - 1) // bt) * bt
    n = bt * FH

    # Layout glue (XLA, outside the kernel): NCHW -> zero-padded per-sample frames,
    # rows = (b, hh), lanes = ww*C_IN + ci (padded to 32 lanes).
    x = jnp.transpose(x_nchw, (0, 2, 3, 1)).astype(jnp.float32)        # (B, 8, 8, 3)
    x = jnp.pad(x, ((0, bp - B), (1, 1), (1, 1), (0, 0)))              # (bp, 10, 10, 3)
    x = x.reshape(bp, FH, FW * C_IN)
    x = jnp.pad(x, ((0, 0), (0, 0), (0, LX - FW * C_IN)))              # lanes 30..31 = 0
    x_rows = x.reshape(bp * FH, LX)

    def whole(a):
        shape = a.shape
        return pl.BlockSpec(shape, lambda i: (0,) * len(shape))

    grid_spec = pltpu.PrefetchScalarGridSpec(
        num_scalar_prefetch=0,
        grid=(bp // bt,),
        in_specs=[
            pl.BlockSpec((n, LX), lambda i: (i, 0)),     # input frame rows for the tile
            whole(kp["w1"]), whole(kp["b1"]),            # (96,256) bf16 / (1,256) f32
            whole(kp["w2"]), whole(kp["b2"]),            # (384,256) bf16 / (1,256) f32
            whole(kp["wf0"]), whole(kp["wf1"]), whole(kp["bf"]),
        ],
        out_specs=pl.BlockSpec((bt, Dp), lambda i: (i, 0)),
        scratch_shapes=[
            pltpu.VMEM((n + 2 * HALO, LX), jnp.float32),     # s0: haloed input frames
            pltpu.VMEM((n, 3 * LX), jnp.bfloat16),           # p1: conv1 im2col patches
            pltpu.VMEM((n + 2 * HALO, 2 * 128), jnp.float32),  # sA: conv1 activations
            pltpu.VMEM((n + 2 * HALO, 128), jnp.bfloat16),   # sB: pool1 (zero-framed)
            pltpu.VMEM((n, 3 * 128), jnp.bfloat16),          # p2: conv2 im2col patches
            pltpu.VMEM((n, 128), jnp.float32),               # sC: q-pooled conv2 output
        ],
    )
    out = pl.pallas_call(
        functools.partial(cnn_encoder_kernel, bt=bt),
        out_shape=jax.ShapeDtypeStruct((bp, Dp), jnp.float32),
        grid_spec=grid_spec,
        compiler_params=pltpu.CompilerParams(
            dimension_semantics=("parallel",),           # batch tiles shard across TCs
        ),
    )(x_rows, kp["w1"], kp["b1"], kp["w2"], kp["b2"], kp["wf0"], kp["wf1"], kp["bf"])
    return out[:B, :d_model]


def init_params(key, d_model):
    ks = jax.random.split(key, 6)
    # PyTorch-layout parameters (synthetic, deterministic).
    w1 = jax.random.normal(ks[0], (C1, C_IN, 3, 3), jnp.float32) * 0.1     # (O, I, kh, kw)
    b1 = jax.random.normal(ks[1], (C1,), jnp.float32) * 0.1
    w2 = jax.random.normal(ks[2], (C2, C1, 3, 3), jnp.float32) * 0.05
    b2 = jax.random.normal(ks[3], (C2,), jnp.float32) * 0.1
    wf = jax.random.normal(ks[4], (d_model, C2 * 2 * 2), jnp.float32) * 0.05
    bf = jax.random.normal(ks[5], (d_model,), jnp.float32) * 0.1
    pt = dict(w1=w1, b1=b1, w2=w2, b2=b2, wf=wf, bf=bf)

    dp = ((d_model + 127) // 128) * 128
    w1n, b1n, w2n, b2n, wfn, bfn = (np.asarray(a) for a in (w1, b1, w2, b2, wf, bf))

    # conv1 wide weights: P1 row = ky*32 + ww*3 + ci, output lane = j*128 + q*32 + co
    # (output column w = 2q + j); kx taps become the block-Toeplitz structure.
    w1big = np.zeros((3 * LX, 2 * 128), np.float32)
    b1big = np.zeros((1, 2 * 128), np.float32)
    for w_out in range(W):
        q, j = w_out // 2, w_out % 2
        col = j * 128 + q * C1
        b1big[0, col:col + C1] = b1n
        for ky in range(3):
            for kx in range(3):
                ww = w_out + kx                       # padded input column
                for ci in range(C_IN):
                    w1big[ky * LX + ww * C_IN + ci, col:col + C1] = w1n[:, ci, ky, kx]

    # conv2 wide weights: P2 row = ky*128 + qin*32 + ci, output lane = j2*128 + v*64 + co2
    # (output column q = 2v + j2); out-of-range qin simply has no entry (zero padding).
    w2big = np.zeros((3 * 128, 2 * 128), np.float32)
    b2big = np.zeros((1, 2 * 128), np.float32)
    for q_out in range(4):
        v, j2 = q_out // 2, q_out % 2
        col = j2 * 128 + v * C2
        b2big[0, col:col + C2] = b2n
        for ky in range(3):
            for kx in range(3):
                qin = q_out + kx - 1
                if 0 <= qin < 4:
                    for ci in range(C1):
                        w2big[ky * 128 + qin * C1 + ci, col:col + C2] = w2n[:, ci, ky, kx]

    # fc weights split by pool2 row u; input lane = v*64 + co2; flatten idx = co2*4+u*2+v.
    wf0 = np.zeros((128, dp), np.float32)
    wf1 = np.zeros((128, dp), np.float32)
    for v in range(2):
        for co2 in range(C2):
            wf0[v * C2 + co2, :d_model] = wfn[:, co2 * 4 + 0 * 2 + v]
            wf1[v * C2 + co2, :d_model] = wfn[:, co2 * 4 + 1 * 2 + v]
    bfbig = np.zeros((1, dp), np.float32)
    bfbig[0, :d_model] = bfn

    kern = dict(
        w1=jnp.asarray(w1big, jnp.bfloat16), b1=jnp.asarray(b1big, jnp.float32),
        w2=jnp.asarray(w2big, jnp.bfloat16), b2=jnp.asarray(b2big, jnp.float32),
        wf0=jnp.asarray(wf0, jnp.bfloat16), wf1=jnp.asarray(wf1, jnp.bfloat16),
        bf=jnp.asarray(bfbig, jnp.float32),
    )
    return pt, kern


def ref_forward(x, pt):
    # Pure-JAX f32 reference with PyTorch NCHW/OIHW semantics.
    y = lax.conv_general_dilated(x, pt["w1"], (1, 1), [(1, 1), (1, 1)],
                                 dimension_numbers=("NCHW", "OIHW", "NCHW"))
    y = jnp.maximum(y + pt["b1"][None, :, None, None], 0.0)
    y = lax.reduce_window(y, -jnp.inf, lax.max, (1, 1, 2, 2), (1, 1, 2, 2), "VALID")
    y = lax.conv_general_dilated(y, pt["w2"], (1, 1), [(1, 1), (1, 1)],
                                 dimension_numbers=("NCHW", "OIHW", "NCHW"))
    y = jnp.maximum(y + pt["b2"][None, :, None, None], 0.0)
    y = lax.reduce_window(y, -jnp.inf, lax.max, (1, 1, 2, 2), (1, 1, 2, 2), "VALID")
    y = y.reshape(y.shape[0], -1)                     # PyTorch flatten: (C, H, W) order
    return y @ pt["wf"].T + pt["bf"][None, :]


if __name__ == "__main__":
    B, d_model = 64, 128                              # D multiple of 128 -> lane-dense out
    key = jax.random.PRNGKey(0)
    kx, kp = jax.random.split(key)
    x = jax.random.normal(kx, (B, C_IN, H, W), jnp.float32)      # PyTorch NCHW input
    params_pt, params_kernel = init_params(kp, d_model)

    out = cnn_encoder(x, params_kernel, d_model)
    out = jax.block_until_ready(out)

    ref = ref_forward(x, params_pt)
    assert out.shape == (B, d_model) and out.dtype == jnp.float32
    # bf16 MXU operands with f32 accumulation: ~1% mixed-precision error vs f32 reference.
    assert bool(jnp.allclose(out, ref, atol=5e-2, rtol=5e-2)), "mismatch vs reference"
    print("KERNEL_OK")
</pallas_src>

<mosaic_0001>
module attributes {stable_mosaic.version = 11 : i64} {
  func.func @cnn_encoder_kernel(%arg0: i32, %arg1: memref<320x32xf32, #tpu.memory_space<vmem>>, %arg2: memref<96x256xbf16, #tpu.memory_space<vmem>>, %arg3: memref<1x256xf32, #tpu.memory_space<vmem>>, %arg4: memref<384x256xbf16, #tpu.memory_space<vmem>>, %arg5: memref<1x256xf32, #tpu.memory_space<vmem>>, %arg6: memref<128x128xbf16, #tpu.memory_space<vmem>>, %arg7: memref<128x128xbf16, #tpu.memory_space<vmem>>, %arg8: memref<1x128xf32, #tpu.memory_space<vmem>>, %arg9: memref<32x128xf32, #tpu.memory_space<vmem>>, %arg10: memref<336x32xf32, #tpu.memory_space<vmem>>, %arg11: memref<320x96xbf16, #tpu.memory_space<vmem>>, %arg12: memref<336x256xf32, #tpu.memory_space<vmem>>, %arg13: memref<336x128xbf16, #tpu.memory_space<vmem>>, %arg14: memref<320x384xbf16, #tpu.memory_space<vmem>>, %arg15: memref<320x128xf32, #tpu.memory_space<vmem>>) attributes {dimension_semantics = [#tpu.dimension_semantics<parallel>], iteration_bounds = array<i64: 2>, scalar_prefetch = 0 : i64, scratch_operands = 6 : i64, tpu.core_type = #tpu.core_type<tc>, window_params = [{transform_indices = @transform_0, window_bounds = array<i64: 320, 32>}, {pipeline_mode = #tpu.pipeline_mode<synchronous>, transform_indices = @transform_1, window_bounds = array<i64: 96, 256>}, {pipeline_mode = #tpu.pipeline_mode<synchronous>, transform_indices = @transform_2, window_bounds = array<i64: 1, 256>}, {pipeline_mode = #tpu.pipeline_mode<synchronous>, transform_indices = @transform_3, window_bounds = array<i64: 384, 256>}, {pipeline_mode = #tpu.pipeline_mode<synchronous>, transform_indices = @transform_4, window_bounds = array<i64: 1, 256>}, {pipeline_mode = #tpu.pipeline_mode<synchronous>, transform_indices = @transform_5, window_bounds = array<i64: 128, 128>}, {pipeline_mode = #tpu.pipeline_mode<synchronous>, transform_indices = @transform_6, window_bounds = array<i64: 128, 128>}, {pipeline_mode = #tpu.pipeline_mode<synchronous>, transform_indices = @transform_7, window_bounds = array<i64: 1, 128>}, {transform_indices = @transform_8, window_bounds = array<i64: 32, 128>}]} {
    %c0 = arith.constant 0 : index
    %c0_0 = arith.constant 0 : index
    %0 = vector.load %arg1[%c0, %c0_0] : memref<320x32xf32, #tpu.memory_space<vmem>>, vector<320x32xf32>
    %c8 = arith.constant 8 : index
    %c0_1 = arith.constant 0 : index
    %1 = vector.load %arg10[%c8, %c0_1] : memref<336x32xf32, #tpu.memory_space<vmem>>, vector<320x32xf32>
    tpu.vector_store %arg10[%c8, %c0_1], %0 {strides = array<i32>} : memref<336x32xf32, #tpu.memory_space<vmem>>, vector<320x32xf32>,
    %c7 = arith.constant 7 : index
    %c0_2 = arith.constant 0 : index
    %2 = vector.load %arg10[%c7, %c0_2] : memref<336x32xf32, #tpu.memory_space<vmem>>, vector<320x32xf32>
    %3 = arith.truncf %2 : vector<320x32xf32> to vector<320x32xbf16>
    %c0_3 = arith.constant 0 : index
    %c0_4 = arith.constant 0 : index
    %4 = vector.load %arg11[%c0_3, %c0_4] : memref<320x96xbf16, #tpu.memory_space<vmem>>, vector<320x32xbf16>
    tpu.vector_store %arg11[%c0_3, %c0_4], %3 {strides = array<i32>} : memref<320x96xbf16, #tpu.memory_space<vmem>>, vector<320x32xbf16>,
    %c8_5 = arith.constant 8 : index
    %c0_6 = arith.constant 0 : index
    %5 = vector.load %arg10[%c8_5, %c0_6] : memref<336x32xf32, #tpu.memory_space<vmem>>, vector<320x32xf32>
    %6 = arith.truncf %5 : vector<320x32xf32> to vector<320x32xbf16>
    %c0_7 = arith.constant 0 : index
    %c32 = arith.constant 32 : index
    %7 = vector.load %arg11[%c0_7, %c32] : memref<320x96xbf16, #tpu.memory_space<vmem>>, vector<320x32xbf16>
    tpu.vector_store %arg11[%c0_7, %c32], %6 {strides = array<i32>} : memref<320x96xbf16, #tpu.memory_space<vmem>>, vector<320x32xbf16>,
    %c9 = arith.constant 9 : index
    %c0_8 = arith.constant 0 : index
    %8 = vector.load %arg10[%c9, %c0_8] : memref<336x32xf32, #tpu.memory_space<vmem>>, vector<320x32xf32>
    %9 = arith.truncf %8 : vector<320x32xf32> to vector<320x32xbf16>
    %c0_9 = arith.constant 0 : index
    %c64 = arith.constant 64 : index
    %10 = vector.load %arg11[%c0_9, %c64] : memref<320x96xbf16, #tpu.memory_space<vmem>>, vector<320x32xbf16>
    tpu.vector_store %arg11[%c0_9, %c64], %9 {strides = array<i32>} : memref<320x96xbf16, #tpu.memory_space<vmem>>, vector<320x32xbf16>,
    %c0_10 = arith.constant 0 : index
    %c0_11 = arith.constant 0 : index
    %11 = vector.load %arg11[%c0_10, %c0_11] : memref<320x96xbf16, #tpu.memory_space<vmem>>, vector<320x96xbf16>
    %c0_12 = arith.constant 0 : index
    %c0_13 = arith.constant 0 : index
    %12 = vector.load %arg2[%c0_12, %c0_13] : memref<96x256xbf16, #tpu.memory_space<vmem>>, vector<96x256xbf16>
    %cst = arith.constant dense<0.000000e+00> : vector<320x256xf32>
    %13 = tpu.matmul %11, %12, %cst {dimension_numbers = #tpu.dot_dimension_numbers<[1], [0], [0], [1], [0, 0, 1, 1], [], []>} : vector<320x96xbf16>, vector<96x256xbf16>, vector<320x256xf32> -> vector<320x256xf32>
    %c0_14 = arith.constant 0 : index
    %c0_15 = arith.constant 0 : index
    %14 = vector.load %arg3[%c0_14, %c0_15] : memref<1x256xf32, #tpu.memory_space<vmem>>, vector<1x256xf32>
    %15 = vector.broadcast %14 : vector<1x256xf32> to vector<320x256xf32>
    %16 = arith.addf %13, %15 : vector<320x256xf32>
    %cst_16 = arith.constant 0.000000e+00 : f32
    %17 = vector.broadcast %cst_16 : f32 to vector<320x256xf32>
    %18 = arith.maximumf %16, %17 : vector<320x256xf32>
    %c8_17 = arith.constant 8 : index
    %c0_18 = arith.constant 0 : index
    %19 = vector.load %arg12[%c8_17, %c0_18] : memref<336x256xf32, #tpu.memory_space<vmem>>, vector<320x256xf32>
    tpu.vector_store %arg12[%c8_17, %c0_18], %18 {strides = array<i32>} : memref<336x256xf32, #tpu.memory_space<vmem>>, vector<320x256xf32>,
    %c9_19 = arith.constant 9 : index
    %c0_20 = arith.constant 0 : index
    %20 = vector.load %arg12[%c9_19, %c0_20] : memref<336x256xf32, #tpu.memory_space<vmem>>, vector<320x256xf32>
    %21 = arith.maximumf %18, %20 : vector<320x256xf32>
    %22 = vector.extract_strided_slice %21 {offsets = [0, 0], sizes = [320, 128], strides = [1, 1]} : vector<320x256xf32> to vector<320x128xf32>
    %23 = vector.extract_strided_slice %21 {offsets = [0, 128], sizes = [320, 128], strides = [1, 1]} : vector<320x256xf32> to vector<320x128xf32>
    %24 = arith.maximumf %22, %23 : vector<320x128xf32>
    %25 = tpu.iota {dimensions = array<i32: 0>} : vector<320x1xi32>
    %c10_i32 = arith.constant 10 : i32
    %c0_i32 = arith.constant 0 : i32
    %26 = arith.cmpi eq, %c10_i32, %c0_i32 : i32
    %c1_i32 = arith.constant 1 : i32
    %27 = arith.select %26, %c1_i32, %c10_i32 : i32
    %28 = vector.broadcast %27 : i32 to vector<320x1xi32>
    %29 = arith.remsi %25, %28 : vector<320x1xi32>
    %c0_i32_21 = arith.constant 0 : i32
    %30 = vector.broadcast %c0_i32_21 : i32 to vector<320x1xi32>
    %31 = arith.cmpi ne, %29, %30 : vector<320x1xi32>
    %c0_i32_22 = arith.constant 0 : i32
    %32 = vector.broadcast %c0_i32_22 : i32 to vector<320x1xi32>
    %33 = arith.cmpi slt, %29, %32 : vector<320x1xi32>
    %c0_i32_23 = arith.constant 0 : i32
    %34 = arith.cmpi slt, %27, %c0_i32_23 : i32
    %35 = vector.broadcast %34 : i1 to vector<320x1xi1>
    %36 = vector.broadcast %35 : vector<320x1xi1> to vector<320x1xi1>
    %37 = arith.xori %33, %36 : vector<320x1xi1>
    %38 = arith.andi %37, %31 : vector<320x1xi1>
    %39 = vector.broadcast %27 : i32 to vector<320x1xi32>
    %40 = arith.addi %29, %39 : vector<320x1xi32>
    %41 = arith.select %38, %40, %29 : vector<320x1xi1>, vector<320x1xi32>
    %c2_i32 = arith.constant 2 : i32
    %c0_i32_24 = arith.constant 0 : i32
    %42 = arith.cmpi eq, %c2_i32, %c0_i32_24 : i32
    %c1_i32_25 = arith.constant 1 : i32
    %43 = arith.select %42, %c1_i32_25, %c2_i32 : i32
    %44 = vector.broadcast %43 : i32 to vector<320x1xi32>
    %45 = arith.remsi %41, %44 : vector<320x1xi32>
    %c0_i32_26 = arith.constant 0 : i32
    %46 = vector.broadcast %c0_i32_26 : i32 to vector<320x1xi32>
    %47 = arith.cmpi ne, %45, %46 : vector<320x1xi32>
    %c0_i32_27 = arith.constant 0 : i32
    %48 = vector.broadcast %c0_i32_27 : i32 to vector<320x1xi32>
    %49 = arith.cmpi slt, %45, %48 : vector<320x1xi32>
    %c0_i32_28 = arith.constant 0 : i32
    %50 = arith.cmpi slt, %43, %c0_i32_28 : i32
    %51 = vector.broadcast %50 : i1 to vector<320x1xi1>
    %52 = vector.broadcast %51 : vector<320x1xi1> to vector<320x1xi1>
    %53 = arith.xori %49, %52 : vector<320x1xi1>
    %54 = arith.andi %53, %47 : vector<320x1xi1>
    %55 = vector.broadcast %43 : i32 to vector<320x1xi32>
    %56 = arith.addi %45, %55 : vector<320x1xi32>
    %57 = arith.select %54, %56, %45 : vector<320x1xi1>, vector<320x1xi32>
    %c1_i32_29 = arith.constant 1 : i32
    %58 = vector.broadcast %c1_i32_29 : i32 to vector<320x1xi32>
    %59 = arith.cmpi eq, %57, %58 : vector<320x1xi32>
    %c9_i32 = arith.constant 9 : i32
    %60 = vector.broadcast %c9_i32 : i32 to vector<320x1xi32>
    %61 = arith.cmpi slt, %41, %60 : vector<320x1xi32>
    %62 = arith.andi %59, %61 : vector<320x1xi1>
    %cst_30 = arith.constant 0.000000e+00 : f32
    %63 = vector.shape_cast %62 : vector<320x1xi1> to vector<320x1xi1>
    %64 = vector.broadcast %63 : vector<320x1xi1> to vector<320x128xi1>
    %65 = vector.broadcast %cst_30 : f32 to vector<320x128xf32>
    %66 = arith.select %64, %24, %65 : vector<320x128xi1>, vector<320x128xf32>
    %cst_31 = arith.constant 0.000000e+00 : bf16
    %67 = vector.broadcast %cst_31 : bf16 to vector<8x128xbf16>
    %c0_32 = arith.constant 0 : index
    %c0_33 = arith.constant 0 : index
    %68 = vector.load %arg13[%c0_32, %c0_33] : memref<336x128xbf16, #tpu.memory_space<vmem>>, vector<8x128xbf16>
    tpu.vector_store %arg13[%c0_32, %c0_33], %67 {strides = array<i32>} : memref<336x128xbf16, #tpu.memory_space<vmem>>, vector<8x128xbf16>,
    %cst_34 = arith.constant 0.000000e+00 : bf16
    %69 = vector.broadcast %cst_34 : bf16 to vector<8x128xbf16>
    %c328 = arith.constant 328 : index
    %c0_35 = arith.constant 0 : index
    %70 = vector.load %arg13[%c328, %c0_35] : memref<336x128xbf16, #tpu.memory_space<vmem>>, vector<8x128xbf16>
    tpu.vector_store %arg13[%c328, %c0_35], %69 {strides = array<i32>} : memref<336x128xbf16, #tpu.memory_space<vmem>>, vector<8x128xbf16>,
    %71 = arith.truncf %66 : vector<320x128xf32> to vector<320x128xbf16>
    %c8_36 = arith.constant 8 : index
    %c0_37 = arith.constant 0 : index
    %72 = vector.load %arg13[%c8_36, %c0_37] : memref<336x128xbf16, #tpu.memory_space<vmem>>, vector<320x128xbf16>
    tpu.vector_store %arg13[%c8_36, %c0_37], %71 {strides = array<i32>} : memref<336x128xbf16, #tpu.memory_space<vmem>>, vector<320x128xbf16>,
    %c6 = arith.constant 6 : index
    %c0_38 = arith.constant 0 : index
    %73 = vector.load %arg13[%c6, %c0_38] : memref<336x128xbf16, #tpu.memory_space<vmem>>, vector<320x128xbf16>
    %c0_39 = arith.constant 0 : index
    %c0_40 = arith.constant 0 : index
    %74 = vector.load %arg14[%c0_39, %c0_40] : memref<320x384xbf16, #tpu.memory_space<vmem>>, vector<320x128xbf16>
    tpu.vector_store %arg14[%c0_39, %c0_40], %73 {strides = array<i32>} : memref<320x384xbf16, #tpu.memory_space<vmem>>, vector<320x128xbf16>,
    %c8_41 = arith.constant 8 : index
    %c0_42 = arith.constant 0 : index
    %75 = vector.load %arg13[%c8_41, %c0_42] : memref<336x128xbf16, #tpu.memory_space<vmem>>, vector<320x128xbf16>
    %c0_43 = arith.constant 0 : index
    %c128 = arith.constant 128 : index
    %76 = vector.load %arg14[%c0_43, %c128] : memref<320x384xbf16, #tpu.memory_space<vmem>>, vector<320x128xbf16>
    tpu.vector_store %arg14[%c0_43, %c128], %75 {strides = array<i32>} : memref<320x384xbf16, #tpu.memory_space<vmem>>, vector<320x128xbf16>,
    %c10 = arith.constant 10 : index
    %c0_44 = arith.constant 0 : index
    %77 = vector.load %arg13[%c10, %c0_44] : memref<336x128xbf16, #tpu.memory_space<vmem>>, vector<320x128xbf16>
    %c0_45 = arith.constant 0 : index
    %c256 = arith.constant 256 : index
    %78 = vector.load %arg14[%c0_45, %c256] : memref<320x384xbf16, #tpu.memory_space<vmem>>, vector<320x128xbf16>
    tpu.vector_store %arg14[%c0_45, %c256], %77 {strides = array<i32>} : memref<320x384xbf16, #tpu.memory_space<vmem>>, vector<320x128xbf16>,
    %c0_46 = arith.constant 0 : index
    %c0_47 = arith.constant 0 : index
    %79 = vector.load %arg14[%c0_46, %c0_47] : memref<320x384xbf16, #tpu.memory_space<vmem>>, vector<320x384xbf16>
    %c0_48 = arith.constant 0 : index
    %c0_49 = arith.constant 0 : index
    %80 = vector.load %arg4[%c0_48, %c0_49] : memref<384x256xbf16, #tpu.memory_space<vmem>>, vector<384x256xbf16>
    %cst_50 = arith.constant dense<0.000000e+00> : vector<320x256xf32>
    %81 = tpu.matmul %79, %80, %cst_50 {dimension_numbers = #tpu.dot_dimension_numbers<[1], [0], [0], [1], [0, 0, 1, 1], [], []>} : vector<320x384xbf16>, vector<384x256xbf16>, vector<320x256xf32> -> vector<320x256xf32>
    %c0_51 = arith.constant 0 : index
    %c0_52 = arith.constant 0 : index
    %82 = vector.load %arg5[%c0_51, %c0_52] : memref<1x256xf32, #tpu.memory_space<vmem>>, vector<1x256xf32>
    %83 = vector.broadcast %82 : vector<1x256xf32> to vector<320x256xf32>
    %84 = arith.addf %81, %83 : vector<320x256xf32>
    %cst_53 = arith.constant 0.000000e+00 : f32
    %85 = vector.broadcast %cst_53 : f32 to vector<320x256xf32>
    %86 = arith.maximumf %84, %85 : vector<320x256xf32>
    %87 = vector.extract_strided_slice %86 {offsets = [0, 0], sizes = [320, 128], strides = [1, 1]} : vector<320x256xf32> to vector<320x128xf32>
    %88 = vector.extract_strided_slice %86 {offsets = [0, 128], sizes = [320, 128], strides = [1, 1]} : vector<320x256xf32> to vector<320x128xf32>
    %89 = arith.maximumf %87, %88 : vector<320x128xf32>
    %c0_54 = arith.constant 0 : index
    %c0_55 = arith.constant 0 : index
    %90 = vector.load %arg15[%c0_54, %c0_55] : memref<320x128xf32, #tpu.memory_space<vmem>>, vector<320x128xf32>
    tpu.vector_store %arg15[%c0_54, %c0_55], %89 {strides = array<i32>} : memref<320x128xf32, #tpu.memory_space<vmem>>, vector<320x128xf32>,
    %c1 = arith.constant 1 : index
    %c0_56 = arith.constant 0 : index
    %91 = tpu.strided_load %arg15[%c1, %c0_56] {strides = array<i32: 10, 1>} : memref<320x128xf32, #tpu.memory_space<vmem>>, vector<32x128xf32>
    %c3 = arith.constant 3 : index
    %c0_57 = arith.constant 0 : index
    %92 = tpu.strided_load %arg15[%c3, %c0_57] {strides = array<i32: 10, 1>} : memref<320x128xf32, #tpu.memory_space<vmem>>, vector<32x128xf32>
    %c5 = arith.constant 5 : index
    %c0_58 = arith.constant 0 : index
    %93 = tpu.strided_load %arg15[%c5, %c0_58] {strides = array<i32: 10, 1>} : memref<320x128xf32, #tpu.memory_space<vmem>>, vector<32x128xf32>
    %c7_59 = arith.constant 7 : index
    %c0_60 = arith.constant 0 : index
    %94 = tpu.strided_load %arg15[%c7_59, %c0_60] {strides = array<i32: 10, 1>} : memref<320x128xf32, #tpu.memory_space<vmem>>, vector<32x128xf32>
    %95 = arith.maximumf %91, %92 : vector<32x128xf32>
    %96 = arith.truncf %95 : vector<32x128xf32> to vector<32x128xbf16>
    %97 = arith.maximumf %93, %94 : vector<32x128xf32>
    %98 = arith.truncf %97 : vector<32x128xf32> to vector<32x128xbf16>
    %c0_61 = arith.constant 0 : index
    %c0_62 = arith.constant 0 : index
    %99 = vector.load %arg6[%c0_61, %c0_62] : memref<128x128xbf16, #tpu.memory_space<vmem>>, vector<128x128xbf16>
    %cst_63 = arith.constant dense<0.000000e+00> : vector<32x128xf32>
    %100 = tpu.matmul %96, %99, %cst_63 {dimension_numbers = #tpu.dot_dimension_numbers<[1], [0], [0], [1], [0, 0, 1, 1], [], []>} : vector<32x128xbf16>, vector<128x128xbf16>, vector<32x128xf32> -> vector<32x128xf32>
    %c0_64 = arith.constant 0 : index
    %c0_65 = arith.constant 0 : index
    %101 = vector.load %arg7[%c0_64, %c0_65] : memref<128x128xbf16, #tpu.memory_space<vmem>>, vector<128x128xbf16>
    %cst_66 = arith.constant dense<0.000000e+00> : vector<32x128xf32>
    %102 = tpu.matmul %98, %101, %cst_66 {dimension_numbers = #tpu.dot_dimension_numbers<[1], [0], [0], [1], [0, 0, 1, 1], [], []>} : vector<32x128xbf16>, vector<128x128xbf16>, vector<32x128xf32> -> vector<32x128xf32>
    %103 = arith.addf %100, %102 : vector<32x128xf32>
    %c0_67 = arith.constant 0 : index
    %c0_68 = arith.constant 0 : index
    %104 = vector.load %arg8[%c0_67, %c0_68] : memref<1x128xf32, #tpu.memory_space<vmem>>, vector<1x128xf32>
    %105 = vector.broadcast %104 : vector<1x128xf32> to vector<32x128xf32>
    %106 = arith.addf %103, %105 : vector<32x128xf32>
    %c0_69 = arith.constant 0 : index
    %c0_70 = arith.constant 0 : index
    %107 = vector.load %arg9[%c0_69, %c0_70] : memref<32x128xf32, #tpu.memory_space<vmem>>, vector<32x128xf32>
    tpu.vector_store %arg9[%c0_69, %c0_70], %106 {strides = array<i32>} : memref<32x128xf32, #tpu.memory_space<vmem>>, vector<32x128xf32>,
    return
  }
  func.func @transform_0(%arg0: i32) -> (i32, i32) {
    %c0_i32 = arith.constant 0 : i32
    %c0_i32_0 = arith.constant 0 : i32
    return %arg0, %c0_i32 : i32, i32
  }
  func.func @transform_1(%arg0: i32) -> (i32, i32) {
    %c0_i32 = arith.constant 0 : i32
    %c0_i32_0 = arith.constant 0 : i32
    %c0_i32_1 = arith.constant 0 : i32
    return %c0_i32, %c0_i32_0 : i32, i32
  }
  func.func @transform_2(%arg0: i32) -> (i32, i32) {
    %c0_i32 = arith.constant 0 : i32
    %c0_i32_0 = arith.constant 0 : i32
    %c0_i32_1 = arith.constant 0 : i32
    return %c0_i32, %c0_i32_0 : i32, i32
  }
  func.func @transform_3(%arg0: i32) -> (i32, i32) {
    %c0_i32 = arith.constant 0 : i32
    %c0_i32_0 = arith.constant 0 : i32
    %c0_i32_1 = arith.constant 0 : i32
    return %c0_i32, %c0_i32_0 : i32, i32
  }
  func.func @transform_4(%arg0: i32) -> (i32, i32) {
    %c0_i32 = arith.constant 0 : i32
    %c0_i32_0 = arith.constant 0 : i32
    %c0_i32_1 = arith.constant 0 : i32
    return %c0_i32, %c0_i32_0 : i32, i32
  }
  func.func @transform_5(%arg0: i32) -> (i32, i32) {
    %c0_i32 = arith.constant 0 : i32
    %c0_i32_0 = arith.constant 0 : i32
    %c0_i32_1 = arith.constant 0 : i32
    return %c0_i32, %c0_i32_0 : i32, i32
  }
  func.func @transform_6(%arg0: i32) -> (i32, i32) {
    %c0_i32 = arith.constant 0 : i32
    %c0_i32_0 = arith.constant 0 : i32
    %c0_i32_1 = arith.constant 0 : i32
    return %c0_i32, %c0_i32_0 : i32, i32
  }
  func.func @transform_7(%arg0: i32) -> (i32, i32) {
    %c0_i32 = arith.constant 0 : i32
    %c0_i32_0 = arith.constant 0 : i32
    %c0_i32_1 = arith.constant 0 : i32
    return %c0_i32, %c0_i32_0 : i32, i32
  }
  func.func @transform_8(%arg0: i32) -> (i32, i32) {
    %c0_i32 = arith.constant 0 : i32
    %c0_i32_0 = arith.constant 0 : i32
    return %arg0, %c0_i32 : i32, i32
  }
}

</mosaic_0001>

<llo_original>
// kernel: tpu_custom_call.1
$region0: #{tpu_custom_call.1}
  #allocation0 [shape = 'u32[]', space=smem, size = 0x4, offset = 0x4, fixed_abs, tag = 'smem constant byte address 0x4 - core index']
  #allocation1 [shape = 'u32[144,128]{1,0:T(1,128)}', space=vmem, size = 0x12000, scoped, tag = 'internal scratch']
  #allocation2 [shape = 'f32[336,32]{1,0:T(8,128)}', space=vmem, size = 0x2a000, scoped, tag = 'scratch operand']
  #allocation3 [shape = 'bf16[320,96]{1,0:T(16,128)(2,1)}', space=vmem, size = 0x14000, scoped, tag = 'scratch operand']
  #allocation4 [shape = 'f32[336,256]{1,0:T(8,128)}', space=vmem, size = 0x54000, scoped, tag = 'scratch operand']
  #allocation5 [shape = 'bf16[336,128]{1,0:T(16,128)(2,1)}', space=vmem, size = 0x15000, scoped, tag = 'scratch operand']
  #allocation6 [shape = 'bf16[320,384]{1,0:T(16,128)(2,1)}', space=vmem, size = 0x3c000, scoped, tag = 'scratch operand']
  #allocation7 [shape = 'f32[320,128]{1,0:T(8,128)}', space=vmem, size = 0x28000, scoped, tag = 'scratch operand']
  %s0 = inlined_call_operand.vmem [shape: f32[640,32], index: 0, kind: input, shape index: {}]
  %s1 = inlined_call_operand.vmem [shape: bf16[96,256], index: 1, kind: input, shape index: {}]
  %s2 = inlined_call_operand.vmem [shape: f32[1,256], index: 2, kind: input, shape index: {}]
  %s3 = inlined_call_operand.vmem [shape: bf16[384,256], index: 3, kind: input, shape index: {}]
  %s4 = inlined_call_operand.vmem [shape: f32[1,256], index: 4, kind: input, shape index: {}]
  %s5 = inlined_call_operand.vmem [shape: bf16[128,128], index: 5, kind: input, shape index: {}]
  %s6 = inlined_call_operand.vmem [shape: bf16[128,128], index: 6, kind: input, shape index: {}]
  %s7 = inlined_call_operand.vmem [shape: f32[1,128], index: 7, kind: input, shape index: {}]
  %s8 = inlined_call_operand.hbm [shape: f32[64,128], index: 8, kind: output, shape index: {}]
  %s9 = sld [smem:[#allocation0]]
  $region65: #{tpu_custom_call.1} parent=0
    _
  %s11 = ssub.s32 1, %s9
  %s12 = scalar_select 0, %s11, %s9
  $region1: #{tpu_custom_call.1} parent=0
    #allocation8 [shape = 'u8[32768]{0}', space=vmem, size = 0x8000, scoped, tag = 'output window, operand 0']
    #allocation9 [shape = 's32[2]{0}', space=sflag, size = 0x8, scoped, tag = 'scoped memory for tpu_custom_call.1']
    %13 = vsyncpa [#allocation9], 0
    %s14 = scalar_lea.sflag [#allocation9], 1
    %15 = vsyncpa %s14, 0
    loop: start=0, step=1, limit=4
    $region2: #{tpu_custom_call.1} parent=1 // loop_pre_header
      _
    $region3: #{tpu_custom_call.1} parent=1 // loop_header
      %s17 = sphi 0, %s21
      %p18 = scmp.ge.s32.totalorder %s17, 4
      %s27 = sphi 0, %s29
      %s30 = sphi 0, %s27
      %s31 = sphi 0, %s30
      %s47 = sphi 0, %s31
      %s51 = sphi 0, %s51
      %s53 = sphi 0, %s51
      %s54 = sphi 0, %s53
      %s68 = sphi 0, %s54
      %s72 = sphi 0, %s72
      %s74 = sphi 0, %s72
      %s75 = sphi 0, %s74
      %s89 = sphi 0, %s75
      %s93 = sphi 0, %s93
      %s95 = sphi 0, %s93
      %s96 = sphi 0, %s95
      %s110 = sphi 0, %s96
      %s114 = sphi 0, %s114
      %s116 = sphi 0, %s114
      %s117 = sphi 0, %s116
      %s131 = sphi 0, %s117
      %s135 = sphi 0, %s135
      %s137 = sphi 0, %s135
      %s138 = sphi 0, %s137
      %s152 = sphi 0, %s138
      %s156 = sphi 0, %s156
      %s158 = sphi 0, %s156
      %s159 = sphi 0, %s158
      %s173 = sphi 0, %s159
      %s177 = sphi 0, %s177
      %s179 = sphi 0, %s177
      %s180 = sphi 0, %s179
      %s194 = sphi 0, %s180
      %s200 = sphi 0, %s202
      %s203 = sphi 0, %s200
      %s204 = sphi 0, %s203
      %s220 = sphi 0, %s204
    $region4: #{tpu_custom_call.1} parent=1 // loop_header_branch
      %20 = sbr.rel (%p18) target = $region8
    $region5: #{tpu_custom_call.1} parent=1 // loop_body
      %s22 = ssub.s32 %s17, 1
      %s23 = ssub.s32 %s17, 2
      %s24 = sadd.s32 %s17, 1
      %s25 = ssub.s32 %s17, %s24
      %p26 = scmp.eq.s32.totalorder %s25, 0
      %s28 = sadd.s32 %s27, 1
      %s29 = scalar_select %p26, %s27, %s28
      %p32 = pneg %p26
      %p33 = scmp.eq.s32.totalorder %s17, 1
      %p34 = por %p32, %p33
      %p35 = scmp.ne.s32.totalorder %s27, %s30
      %p36 = scmp.eq.s32.totalorder %s17, 0
      %p37 = por %p35, %p36
      %p38 = scmp.ne.s32.totalorder %s27, %s30
      %p39 = scmp.eq.s32.totalorder %s22, 1
      %p40 = por %p38, %p39
      %p41 = scmp.ne.s32.totalorder %s30, %s31
      %p42 = scmp.eq.s32.totalorder %s22, 0
      %p43 = por %p41, %p42
      %p44 = scmp.ne.s32.totalorder %s30, %s31
      %p45 = scmp.eq.s32.totalorder %s23, 1
      %p46 = por %p44, %p45
      %p48 = scmp.ne.s32.totalorder %s31, %s47
      %p49 = scmp.eq.s32.totalorder %s23, 0
      %p50 = por %p48, %p49
      %s52 = sadd.s32 %s51, 1
      %p55 = scmp.eq.s32.totalorder %s17, 1
      %p56 = scmp.ne.s32.totalorder %s51, %s53
      %p57 = scmp.eq.s32.totalorder %s17, 0
      %p58 = por %p56, %p57
      %p59 = scmp.ne.s32.totalorder %s51, %s53
      %p60 = scmp.eq.s32.totalorder %s22, 1
      %p61 = por %p59, %p60
      %p62 = scmp.ne.s32.totalorder %s53, %s54
      %p63 = scmp.eq.s32.totalorder %s22, 0
      %p64 = por %p62, %p63
      %p65 = scmp.ne.s32.totalorder %s53, %s54
      %p66 = scmp.eq.s32.totalorder %s23, 1
      %p67 = por %p65, %p66
      %p69 = scmp.ne.s32.totalorder %s54, %s68
      %p70 = scmp.eq.s32.totalorder %s23, 0
      %p71 = por %p69, %p70
      %s73 = sadd.s32 %s72, 1
      %p76 = scmp.eq.s32.totalorder %s17, 1
      %p77 = scmp.ne.s32.totalorder %s72, %s74
      %p78 = scmp.eq.s32.totalorder %s17, 0
      %p79 = por %p77, %p78
      %p80 = scmp.ne.s32.totalorder %s72, %s74
      %p81 = scmp.eq.s32.totalorder %s22, 1
      %p82 = por %p80, %p81
      %p83 = scmp.ne.s32.totalorder %s74, %s75
      %p84 = scmp.eq.s32.totalorder %s22, 0
      %p85 = por %p83, %p84
      %p86 = scmp.ne.s32.totalorder %s74, %s75
      %p87 = scmp.eq.s32.totalorder %s23, 1
      %p88 = por %p86, %p87
      %p90 = scmp.ne.s32.totalorder %s75, %s89
      %p91 = scmp.eq.s32.totalorder %s23, 0
      %p92 = por %p90, %p91
      %s94 = sadd.s32 %s93, 1
      %p97 = scmp.eq.s32.totalorder %s17, 1
      %p98 = scmp.ne.s32.totalorder %s93, %s95
      %p99 = scmp.eq.s32.totalorder %s17, 0
      %p100 = por %p98, %p99
      %p101 = scmp.ne.s32.totalorder %s93, %s95
      %p102 = scmp.eq.s32.totalorder %s22, 1
      %p103 = por %p101, %p102
      %p104 = scmp.ne.s32.totalorder %s95, %s96
      %p105 = scmp.eq.s32.totalorder %s22, 0
      %p106 = por %p104, %p105
      %p107 = scmp.ne.s32.totalorder %s95, %s96
      %p108 = scmp.eq.s32.totalorder %s23, 1
      %p109 = por %p107, %p108
      %p111 = scmp.ne.s32.totalorder %s96, %s110
      %p112 = scmp.eq.s32.totalorder %s23, 0
      %p113 = por %p111, %p112
      %s115 = sadd.s32 %s114, 1
      %p118 = scmp.eq.s32.totalorder %s17, 1
      %p119 = scmp.ne.s32.totalorder %s114, %s116
      %p120 = scmp.eq.s32.totalorder %s17, 0
      %p121 = por %p119, %p120
      %p122 = scmp.ne.s32.totalorder %s114, %s116
      %p123 = scmp.eq.s32.totalorder %s22, 1
      %p124 = por %p122, %p123
      %p125 = scmp.ne.s32.totalorder %s116, %s117
      %p126 = scmp.eq.s32.totalorder %s22, 0
      %p127 = por %p125, %p126
      %p128 = scmp.ne.s32.totalorder %s116, %s117
      %p129 = scmp.eq.s32.totalorder %s23, 1
      %p130 = por %p128, %p129
      %p132 = scmp.ne.s32.totalorder %s117, %s131
      %p133 = scmp.eq.s32.totalorder %s23, 0
      %p134 = por %p132, %p133
      %s136 = sadd.s32 %s135, 1
      %p139 = scmp.eq.s32.totalorder %s17, 1
      %p140 = scmp.ne.s32.totalorder %s135, %s137
      %p141 = scmp.eq.s32.totalorder %s17, 0
      %p142 = por %p140, %p141
      %p143 = scmp.ne.s32.totalorder %s135, %s137
      %p144 = scmp.eq.s32.totalorder %s22, 1
      %p145 = por %p143, %p144
      %p146 = scmp.ne.s32.totalorder %s137, %s138
      %p147 = scmp.eq.s32.totalorder %s22, 0
      %p148 = por %p146, %p147
      %p149 = scmp.ne.s32.totalorder %s137, %s138
      %p150 = scmp.eq.s32.totalorder %s23, 1
      %p151 = por %p149, %p150
      %p153 = scmp.ne.s32.totalorder %s138, %s152
      %p154 = scmp.eq.s32.totalorder %s23, 0
      %p155 = por %p153, %p154
      %s157 = sadd.s32 %s156, 1
      %p160 = scmp.eq.s32.totalorder %s17, 1
      %p161 = scmp.ne.s32.totalorder %s156, %s158
      %p162 = scmp.eq.s32.totalorder %s17, 0
      %p163 = por %p161, %p162
      %p164 = scmp.ne.s32.totalorder %s156, %s158
      %p165 = scmp.eq.s32.totalorder %s22, 1
      %p166 = por %p164, %p165
      %p167 = scmp.ne.s32.totalorder %s158, %s159
      %p168 = scmp.eq.s32.totalorder %s22, 0
      %p169 = por %p167, %p168
      %p170 = scmp.ne.s32.totalorder %s158, %s159
      %p171 = scmp.eq.s32.totalorder %s23, 1
      %p172 = por %p170, %p171
      %p174 = scmp.ne.s32.totalorder %s159, %s173
      %p175 = scmp.eq.s32.totalorder %s23, 0
      %p176 = por %p174, %p175
      %s178 = sadd.s32 %s177, 1
      %p181 = scmp.eq.s32.totalorder %s17, 1
      %p182 = scmp.ne.s32.totalorder %s177, %s179
      %p183 = scmp.eq.s32.totalorder %s17, 0
      %p184 = por %p182, %p183
      %p185 = scmp.ne.s32.totalorder %s177, %s179
      %p186 = scmp.eq.s32.totalorder %s22, 1
      %p187 = por %p185, %p186
      %p188 = scmp.ne.s32.totalorder %s179, %s180
      %p189 = scmp.eq.s32.totalorder %s22, 0
      %p190 = por %p188, %p189
      %p191 = scmp.ne.s32.totalorder %s179, %s180
      %p192 = scmp.eq.s32.totalorder %s23, 1
      %p193 = por %p191, %p192
      %p195 = scmp.ne.s32.totalorder %s180, %s194
      %p196 = scmp.eq.s32.totalorder %s23, 0
      %p197 = por %p195, %p196
      %s198 = ssub.s32 %s17, %s24
      %p199 = scmp.eq.s32.totalorder %s198, 0
      %s201 = sadd.s32 %s200, 1
      %s202 = scalar_select %p199, %s200, %s201
      %p205 = pneg %p199
      %p206 = scmp.eq.s32.totalorder %s17, 1
      %p207 = por %p205, %p206
      %p208 = scmp.ne.s32.totalorder %s200, %s203
      %p209 = scmp.eq.s32.totalorder %s17, 0
      %p210 = por %p208, %p209
      %p211 = scmp.ne.s32.totalorder %s200, %s203
      %p212 = scmp.eq.s32.totalorder %s22, 1
      %p213 = por %p211, %p212
      %p214 = scmp.ne.s32.totalorder %s203, %s204
      %p215 = scmp.eq.s32.totalorder %s22, 0
      %p216 = por %p214, %p215
      %p217 = scmp.ne.s32.totalorder %s203, %s204
      %p218 = scmp.eq.s32.totalorder %s23, 1
      %p219 = por %p217, %p218
      %p221 = scmp.ne.s32.totalorder %s204, %s220
      %p222 = scmp.eq.s32.totalorder %s23, 0
      %p223 = por %p221, %p222
      %p224 = scmp.le.s32.totalorder 1, %s17
      %p225 = scmp.lt.s32.totalorder %s17, 3
      %p226 = pnand %p224, %p225
      %p227 = pneg %p226
      // Predicated region
      $region9: #{tpu_custom_call.1} parent=5 // pred_check
        _
      $region10: #{tpu_custom_call.1} parent=5 // pred_check_branch
        %229 = sbr.rel (%p226) target = $region12
      $region11: #{tpu_custom_call.1} parent=5 // pred_region
        %s230 = ssub.s32 %s17, 1
        // Predicated region
        $region13: #{tpu_custom_call.1} parent=11 // pred_check
          %p231 = pneg %p64
        $region14: #{tpu_custom_call.1} parent=11 // pred_check_branch
          %233 = sbr.rel (%p231) target = $region16
        $region15: #{tpu_custom_call.1} parent=11 // pred_region
          _
        $region16: #{tpu_custom_call.1} parent=11 // pred_fallthru
          _
        // Predicated region
        $region17: #{tpu_custom_call.1} parent=11 // pred_check
          %p234 = pneg %p85
        $region18: #{tpu_custom_call.1} parent=11 // pred_check_branch
          %236 = sbr.rel (%p234) target = $region20
        $region19: #{tpu_custom_call.1} parent=11 // pred_region
          _
        $region20: #{tpu_custom_call.1} parent=11 // pred_fallthru
          _
        // Predicated region
        $region21: #{tpu_custom_call.1} parent=11 // pred_check
          %p237 = pneg %p106
        $region22: #{tpu_custom_call.1} parent=11 // pred_check_branch
          %239 = sbr.rel (%p237) target = $region24
        $region23: #{tpu_custom_call.1} parent=11 // pred_region
          _
        $region24: #{tpu_custom_call.1} parent=11 // pred_fallthru
          _
        // Predicated region
        $region25: #{tpu_custom_call.1} parent=11 // pred_check
          %p240 = pneg %p127
        $region26: #{tpu_custom_call.1} parent=11 // pred_check_branch
          %242 = sbr.rel (%p240) target = $region28
        $region27: #{tpu_custom_call.1} parent=11 // pred_region
          _
        $region28: #{tpu_custom_call.1} parent=11 // pred_fallthru
          _
        // Predicated region
        $region29: #{tpu_custom_call.1} parent=11 // pred_check
          %p243 = pneg %p148
        $region30: #{tpu_custom_call.1} parent=11 // pred_check_branch
          %245 = sbr.rel (%p243) target = $region32
        $region31: #{tpu_custom_call.1} parent=11 // pred_region
          _
        $region32: #{tpu_custom_call.1} parent=11 // pred_fallthru
          _
        // Predicated region
        $region33: #{tpu_custom_call.1} parent=11 // pred_check
          %p246 = pneg %p169
        $region34: #{tpu_custom_call.1} parent=11 // pred_check_branch
          %248 = sbr.rel (%p246) target = $region36
        $region35: #{tpu_custom_call.1} parent=11 // pred_region
          _
        $region36: #{tpu_custom_call.1} parent=11 // pred_fallthru
          _
        // Predicated region
        $region37: #{tpu_custom_call.1} parent=11 // pred_check
          %p249 = pneg %p190
        $region38: #{tpu_custom_call.1} parent=11 // pred_check_branch
          %251 = sbr.rel (%p249) target = $region40
        $region39: #{tpu_custom_call.1} parent=11 // pred_region
          _
        $region40: #{tpu_custom_call.1} parent=11 // pred_fallthru
          _
      $region12: #{tpu_custom_call.1} parent=5 // pred_fallthru
        _
      %p252 = scmp.lt.s32.totalorder %s17, 2
      // Predicated region
      $region41: #{tpu_custom_call.1} parent=5 // pred_check
        %p253 = pneg %p252
      $region42: #{tpu_custom_call.1} parent=5 // pred_check_branch
        %255 = sbr.rel (%p253) target = $region44
      $region43: #{tpu_custom_call.1} parent=5 // pred_region
        // Predicated region
        $region45: #{tpu_custom_call.1} parent=43 // pred_check
          %p256 = pneg %p37
        $region46: #{tpu_custom_call.1} parent=43 // pred_check_branch
          %258 = sbr.rel (%p256) target = $region48
        $region47: #{tpu_custom_call.1} parent=43 // pred_region
          %s259 = smul.u32 40, %s17
          %p260 = scmp.lt.s32.totalorder %s259, 79
          %s261 = scalar_select %p260, %s259, 79
          %s262 = smul.addr %s261, 8
          %s263 = scalar_lea.vmem %s0, %s262
          %s264 = smul.u32 40, %s17
        $region48: #{tpu_custom_call.1} parent=43 // pred_fallthru
          _
      $region44: #{tpu_custom_call.1} parent=5 // pred_fallthru
        _
      %p265 = scmp.le.s32.totalorder 1, %s17
      %p266 = scmp.lt.s32.totalorder %s17, 3
      %p267 = pnand %p265, %p266
      %p268 = pneg %p267
      // Predicated region
      $region49: #{tpu_custom_call.1} parent=5 // pred_check
        _
      $region50: #{tpu_custom_call.1} parent=5 // pred_check_branch
        %270 = sbr.rel (%p267) target = $region52
      $region51: #{tpu_custom_call.1} parent=5 // pred_region
        %s271 = ssub.s32 %s17, 1
        %s272 = smul.u32 40, %s22
        %p273 = scmp.lt.s32.totalorder %s272, 79
        %s274 = scalar_select %p273, %s272, 79
        %s275 = smul.addr %s274, 8
        %s276 = scalar_lea.vmem %s0, %s275
        %p277 = pneg %p43
        %p278 = pneg %p40
        %p279 = pneg %p64
        %p280 = pneg %p61
        %p281 = pneg %p85
        %p282 = pneg %p82
        %p283 = pneg %p106
        %p284 = pneg %p103
        %p285 = pneg %p127
        %p286 = pneg %p124
        %p287 = pneg %p148
        %p288 = pneg %p145
        %p289 = pneg %p169
        %p290 = pneg %p166
        %p291 = pneg %p190
        %p292 = pneg %p187
        %p293 = pneg %p216
        %p294 = pneg %p213
        %s295 = sand.u32 %s203, 1
        %s296 = scalar_lea.sflag [#allocation9], %s295
        %s297 = sand.u32 %s203, 1
        %s298 = smul.addr %s297, 32
        %s299 = scalar_lea.vmem [#allocation8], %s298
        %s300 = smul.u32 40, %s22
        %p301 = scmp.lt.s32.totalorder %s300, 79
        %s302 = scalar_select %p301, %s300, 79
        %s303 = smul.addr %s302, 8
        %s304 = scalar_lea.vmem %s0, %s303
        %s305 = smul.u32 40, %s22
        %s306 = smul.u32 4, %s22
        %v308 = vld [vmem:[%s304] sm:$0xff]
        %v309 = vld [vmem:[%s304 + $0x8] sm:$0xff]
        %v310 = vld [vmem:[%s304 + $0x10] sm:$0xff]
        %v311 = vld [vmem:[%s304 + $0x18] sm:$0xff]
        %v312 = vld [vmem:[%s304 + $0x20] sm:$0xff]
        %v313 = vld [vmem:[%s304 + $0x28] sm:$0xff]
        %v314 = vld [vmem:[%s304 + $0x30] sm:$0xff]
        %v315 = vld [vmem:[%s304 + $0x38] sm:$0xff]
        %v316 = vld [vmem:[%s304 + $0x40] sm:$0xff]
        %v317 = vld [vmem:[%s304 + $0x48] sm:$0xff]
        %v318 = vld [vmem:[%s304 + $0x50] sm:$0xff]
        %v319 = vld [vmem:[%s304 + $0x58] sm:$0xff]
        %v320 = vld [vmem:[%s304 + $0x60] sm:$0xff]
        %v321 = vld [vmem:[%s304 + $0x68] sm:$0xff]
        %v322 = vld [vmem:[%s304 + $0x70] sm:$0xff]
        %v323 = vld [vmem:[%s304 + $0x78] sm:$0xff]
        %v324 = vld [vmem:[%s304 + $0x80] sm:$0xff]
        %v325 = vld [vmem:[%s304 + $0x88] sm:$0xff]
        %v326 = vld [vmem:[%s304 + $0x90] sm:$0xff]
        %v327 = vld [vmem:[%s304 + $0x98] sm:$0xff]
        %v328 = vld [vmem:[%s304 + $0xa0] sm:$0xff]
        %v329 = vld [vmem:[%s304 + $0xa8] sm:$0xff]
        %v330 = vld [vmem:[%s304 + $0xb0] sm:$0xff]
        %v331 = vld [vmem:[%s304 + $0xb8] sm:$0xff]
        %v332 = vld [vmem:[%s304 + $0xc0] sm:$0xff]
        %v333 = vld [vmem:[%s304 + $0xc8] sm:$0xff]
        %v334 = vld [vmem:[%s304 + $0xd0] sm:$0xff]
        %v335 = vld [vmem:[%s304 + $0xd8] sm:$0xff]
        %v336 = vld [vmem:[%s304 + $0xe0] sm:$0xff]
        %v337 = vld [vmem:[%s304 + $0xe8] sm:$0xff]
        %v338 = vld [vmem:[%s304 + $0xf0] sm:$0xff]
        %v339 = vld [vmem:[%s304 + $0xf8] sm:$0xff]
        %v340 = vld [vmem:[%s304 + $0x100] sm:$0xff]
        %v341 = vld [vmem:[%s304 + $0x108] sm:$0xff]
        %v342 = vld [vmem:[%s304 + $0x110] sm:$0xff]
        %v343 = vld [vmem:[%s304 + $0x118] sm:$0xff]
        %v344 = vld [vmem:[%s304 + $0x120] sm:$0xff]
        %v345 = vld [vmem:[%s304 + $0x128] sm:$0xff]
        %v346 = vld [vmem:[%s304 + $0x130] sm:$0xff]
        %v347 = vld [vmem:[%s304 + $0x138] sm:$0xff]
        %vm348 = vcmask 261120
        %349 = vst.msk [vmem:[#allocation2 + $0x8] sm:$0xff] %vm348, %v308
        %350 = vst.msk [vmem:[#allocation2 + $0x10] sm:$0xff] %vm348, %v309
        %351 = vst.msk [vmem:[#allocation2 + $0x18] sm:$0xff] %vm348, %v310
        %352 = vst.msk [vmem:[#allocation2 + $0x20] sm:$0xff] %vm348, %v311
        %353 = vst.msk [vmem:[#allocation2 + $0x28] sm:$0xff] %vm348, %v312
        %354 = vst.msk [vmem:[#allocation2 + $0x30] sm:$0xff] %vm348, %v313
        %355 = vst.msk [vmem:[#allocation2 + $0x38] sm:$0xff] %vm348, %v314
        %356 = vst.msk [vmem:[#allocation2 + $0x40] sm:$0xff] %vm348, %v315
        %357 = vst.msk [vmem:[#allocation2 + $0x48] sm:$0xff] %vm348, %v316
        %358 = vst.msk [vmem:[#allocation2 + $0x50] sm:$0xff] %vm348, %v317
        %359 = vst.msk [vmem:[#allocation2 + $0x58] sm:$0xff] %vm348, %v318
        %360 = vst.msk [vmem:[#allocation2 + $0x60] sm:$0xff] %vm348, %v319
        %361 = vst.msk [vmem:[#allocation2 + $0x68] sm:$0xff] %vm348, %v320
        %362 = vst.msk [vmem:[#allocation2 + $0x70] sm:$0xff] %vm348, %v321
        %363 = vst.msk [vmem:[#allocation2 + $0x78] sm:$0xff] %vm348, %v322
        %364 = vst.msk [vmem:[#allocation2 + $0x80] sm:$0xff] %vm348, %v323
        %365 = vst.msk [vmem:[#allocation2 + $0x88] sm:$0xff] %vm348, %v324
        %366 = vst.msk [vmem:[#allocation2 + $0x90] sm:$0xff] %vm348, %v325
        %367 = vst.msk [vmem:[#allocation2 + $0x98] sm:$0xff] %vm348, %v326
        %368 = vst.msk [vmem:[#allocation2 + $0xa0] sm:$0xff] %vm348, %v327
        %369 = vst.msk [vmem:[#allocation2 + $0xa8] sm:$0xff] %vm348, %v328
        %370 = vst.msk [vmem:[#allocation2 + $0xb0] sm:$0xff] %vm348, %v329
        %371 = vst.msk [vmem:[#allocation2 + $0xb8] sm:$0xff] %vm348, %v330
        %372 = vst.msk [vmem:[#allocation2 + $0xc0] sm:$0xff] %vm348, %v331
        %373 = vst.msk [vmem:[#allocation2 + $0xc8] sm:$0xff] %vm348, %v332
        %374 = vst.msk [vmem:[#allocation2 + $0xd0] sm:$0xff] %vm348, %v333
        %375 = vst.msk [vmem:[#allocation2 + $0xd8] sm:$0xff] %vm348, %v334
        %376 = vst.msk [vmem:[#allocation2 + $0xe0] sm:$0xff] %vm348, %v335
        %377 = vst.msk [vmem:[#allocation2 + $0xe8] sm:$0xff] %vm348, %v336
        %378 = vst.msk [vmem:[#allocation2 + $0xf0] sm:$0xff] %vm348, %v337
        %379 = vst.msk [vmem:[#allocation2 + $0xf8] sm:$0xff] %vm348, %v338
        %380 = vst.msk [vmem:[#allocation2 + $0x100] sm:$0xff] %vm348, %v339
        %381 = vst.msk [vmem:[#allocation2 + $0x108] sm:$0xff] %vm348, %v340
        %382 = vst.msk [vmem:[#allocation2 + $0x110] sm:$0xff] %vm348, %v341
        %383 = vst.msk [vmem:[#allocation2 + $0x118] sm:$0xff] %vm348, %v342
        %384 = vst.msk [vmem:[#allocation2 + $0x120] sm:$0xff] %vm348, %v343
        %385 = vst.msk [vmem:[#allocation2 + $0x128] sm:$0xff] %vm348, %v344
        %386 = vst.msk [vmem:[#allocation2 + $0x130] sm:$0xff] %vm348, %v345
        %387 = vst.msk [vmem:[#allocation2 + $0x138] sm:$0xff] %vm348, %v346
        %388 = vst.msk [vmem:[#allocation2 + $0x140] sm:$0xff] %vm348, %v347
        %v389 = vld [vmem:[#allocation2 + $0x7] sm:$0xff]
        %v390 = vld [vmem:[#allocation2 + $0xf] sm:$0xff]
        %v391 = vld [vmem:[#allocation2 + $0x17] sm:$0xff]
        %v392 = vld [vmem:[#allocation2 + $0x1f] sm:$0xff]
        %v393 = vld [vmem:[#allocation2 + $0x27] sm:$0xff]
        %v394 = vld [vmem:[#allocation2 + $0x2f] sm:$0xff]
        %v395 = vld [vmem:[#allocation2 + $0x37] sm:$0xff]
        %v396 = vld [vmem:[#allocation2 + $0x3f] sm:$0xff]
        %v397 = vld [vmem:[#allocation2 + $0x47] sm:$0xff]
        %v398 = vld [vmem:[#allocation2 + $0x4f] sm:$0xff]
        %v399 = vld [vmem:[#allocation2 + $0x57] sm:$0xff]
        %v400 = vld [vmem:[#allocation2 + $0x5f] sm:$0xff]
        %v401 = vld [vmem:[#allocation2 + $0x67] sm:$0xff]
        %v402 = vld [vmem:[#allocation2 + $0x6f] sm:$0xff]
        %v403 = vld [vmem:[#allocation2 + $0x77] sm:$0xff]
        %v404 = vld [vmem:[#allocation2 + $0x7f] sm:$0xff]
        %v405 = vld [vmem:[#allocation2 + $0x87] sm:$0xff]
        %v406 = vld [vmem:[#allocation2 + $0x8f] sm:$0xff]
        %v407 = vld [vmem:[#allocation2 + $0x97] sm:$0xff]
        %v408 = vld [vmem:[#allocation2 + $0x9f] sm:$0xff]
        %v409 = vld [vmem:[#allocation2 + $0xa7] sm:$0xff]
        %v410 = vld [vmem:[#allocation2 + $0xaf] sm:$0xff]
        %v411 = vld [vmem:[#allocation2 + $0xb7] sm:$0xff]
        %v412 = vld [vmem:[#allocation2 + $0xbf] sm:$0xff]
        %v413 = vld [vmem:[#allocation2 + $0xc7] sm:$0xff]
        %v414 = vld [vmem:[#allocation2 + $0xcf] sm:$0xff]
        %v415 = vld [vmem:[#allocation2 + $0xd7] sm:$0xff]
        %v416 = vld [vmem:[#allocation2 + $0xdf] sm:$0xff]
        %v417 = vld [vmem:[#allocation2 + $0xe7] sm:$0xff]
        %v418 = vld [vmem:[#allocation2 + $0xef] sm:$0xff]
        %v419 = vld [vmem:[#allocation2 + $0xf7] sm:$0xff]
        %v420 = vld [vmem:[#allocation2 + $0xff] sm:$0xff]
        %v421 = vld [vmem:[#allocation2 + $0x107] sm:$0xff]
        %v422 = vld [vmem:[#allocation2 + $0x10f] sm:$0xff]
        %v423 = vld [vmem:[#allocation2 + $0x117] sm:$0xff]
        %v424 = vld [vmem:[#allocation2 + $0x11f] sm:$0xff]
        %v425 = vld [vmem:[#allocation2 + $0x127] sm:$0xff]
        %v426 = vld [vmem:[#allocation2 + $0x12f] sm:$0xff]
        %v427 = vld [vmem:[#allocation2 + $0x137] sm:$0xff]
        %v428 = vld [vmem:[#allocation2 + $0x13f] sm:$0xff]
        %v429 = vpack.c.bf16 %v390, %v389
        %v430 = vpack.c.bf16 %v392, %v391
        %v431 = vpack.c.bf16 %v394, %v393
        %v432 = vpack.c.bf16 %v396, %v395
        %v433 = vpack.c.bf16 %v398, %v397
        %v434 = vpack.c.bf16 %v400, %v399
        %v435 = vpack.c.bf16 %v402, %v401
        %v436 = vpack.c.bf16 %v404, %v403
        %v437 = vpack.c.bf16 %v406, %v405
        %v438 = vpack.c.bf16 %v408, %v407
        %v439 = vpack.c.bf16 %v410, %v409
        %v440 = vpack.c.bf16 %v412, %v411
        %v441 = vpack.c.bf16 %v414, %v413
        %v442 = vpack.c.bf16 %v416, %v415
        %v443 = vpack.c.bf16 %v418, %v417
        %v444 = vpack.c.bf16 %v420, %v419
        %v445 = vpack.c.bf16 %v422, %v421
        %v446 = vpack.c.bf16 %v424, %v423
        %v447 = vpack.c.bf16 %v426, %v425
        %v448 = vpack.c.bf16 %v428, %v427
        %449 = vst.msk [vmem:[#allocation3] sm:$0xff] %vm348, %v429
        %450 = vst.msk [vmem:[#allocation3 + $0x8] sm:$0xff] %vm348, %v430
        %451 = vst.msk [vmem:[#allocation3 + $0x10] sm:$0xff] %vm348, %v431
        %452 = vst.msk [vmem:[#allocation3 + $0x18] sm:$0xff] %vm348, %v432
        %453 = vst.msk [vmem:[#allocation3 + $0x20] sm:$0xff] %vm348, %v433
        %454 = vst.msk [vmem:[#allocation3 + $0x28] sm:$0xff] %vm348, %v434
        %455 = vst.msk [vmem:[#allocation3 + $0x30] sm:$0xff] %vm348, %v435
        %456 = vst.msk [vmem:[#allocation3 + $0x38] sm:$0xff] %vm348, %v436
        %457 = vst.msk [vmem:[#allocation3 + $0x40] sm:$0xff] %vm348, %v437
        %458 = vst.msk [vmem:[#allocation3 + $0x48] sm:$0xff] %vm348, %v438
        %459 = vst.msk [vmem:[#allocation3 + $0x50] sm:$0xff] %vm348, %v439
        %460 = vst.msk [vmem:[#allocation3 + $0x58] sm:$0xff] %vm348, %v440
        %461 = vst.msk [vmem:[#allocation3 + $0x60] sm:$0xff] %vm348, %v441
        %462 = vst.msk [vmem:[#allocation3 + $0x68] sm:$0xff] %vm348, %v442
        %463 = vst.msk [vmem:[#allocation3 + $0x70] sm:$0xff] %vm348, %v443
        %464 = vst.msk [vmem:[#allocation3 + $0x78] sm:$0xff] %vm348, %v444
        %465 = vst.msk [vmem:[#allocation3 + $0x80] sm:$0xff] %vm348, %v445
        %466 = vst.msk [vmem:[#allocation3 + $0x88] sm:$0xff] %vm348, %v446
        %467 = vst.msk [vmem:[#allocation3 + $0x90] sm:$0xff] %vm348, %v447
        %468 = vst.msk [vmem:[#allocation3 + $0x98] sm:$0xff] %vm348, %v448
        %v469 = vld [vmem:[#allocation2 + $0x8] sm:$0xff]
        %v470 = vld [vmem:[#allocation2 + $0x10] sm:$0xff]
        %v471 = vld [vmem:[#allocation2 + $0x18] sm:$0xff]
        %v472 = vld [vmem:[#allocation2 + $0x20] sm:$0xff]
        %v473 = vld [vmem:[#allocation2 + $0x28] sm:$0xff]
        %v474 = vld [vmem:[#allocation2 + $0x30] sm:$0xff]
        %v475 = vld [vmem:[#allocation2 + $0x38] sm:$0xff]
        %v476 = vld [vmem:[#allocation2 + $0x40] sm:$0xff]
        %v477 = vld [vmem:[#allocation2 + $0x48] sm:$0xff]
        %v478 = vld [vmem:[#allocation2 + $0x50] sm:$0xff]
        %v479 = vld [vmem:[#allocation2 + $0x58] sm:$0xff]
        %v480 = vld [vmem:[#allocation2 + $0x60] sm:$0xff]
        %v481 = vld [vmem:[#allocation2 + $0x68] sm:$0xff]
        %v482 = vld [vmem:[#allocation2 + $0x70] sm:$0xff]
        %v483 = vld [vmem:[#allocation2 + $0x78] sm:$0xff]
        %v484 = vld [vmem:[#allocation2 + $0x80] sm:$0xff]
        %v485 = vld [vmem:[#allocation2 + $0x88] sm:$0xff]
        %v486 = vld [vmem:[#allocation2 + $0x90] sm:$0xff]
        %v487 = vld [vmem:[#allocation2 + $0x98] sm:$0xff]
        %v488 = vld [vmem:[#allocation2 + $0xa0] sm:$0xff]
        %v489 = vld [vmem:[#allocation2 + $0xa8] sm:$0xff]
        %v490 = vld [vmem:[#allocation2 + $0xb0] sm:$0xff]
        %v491 = vld [vmem:[#allocation2 + $0xb8] sm:$0xff]
        %v492 = vld [vmem:[#allocation2 + $0xc0] sm:$0xff]
        %v493 = vld [vmem:[#allocation2 + $0xc8] sm:$0xff]
        %v494 = vld [vmem:[#allocation2 + $0xd0] sm:$0xff]
        %v495 = vld [vmem:[#allocation2 + $0xd8] sm:$0xff]
        %v496 = vld [vmem:[#allocation2 + $0xe0] sm:$0xff]
        %v497 = vld [vmem:[#allocation2 + $0xe8] sm:$0xff]
        %v498 = vld [vmem:[#allocation2 + $0xf0] sm:$0xff]
        %v499 = vld [vmem:[#allocation2 + $0xf8] sm:$0xff]
        %v500 = vld [vmem:[#allocation2 + $0x100] sm:$0xff]
        %v501 = vld [vmem:[#allocation2 + $0x108] sm:$0xff]
        %v502 = vld [vmem:[#allocation2 + $0x110] sm:$0xff]
        %v503 = vld [vmem:[#allocation2 + $0x118] sm:$0xff]
        %v504 = vld [vmem:[#allocation2 + $0x120] sm:$0xff]
        %v505 = vld [vmem:[#allocation2 + $0x128] sm:$0xff]
        %v506 = vld [vmem:[#allocation2 + $0x130] sm:$0xff]
        %v507 = vld [vmem:[#allocation2 + $0x138] sm:$0xff]
        %v508 = vld [vmem:[#allocation2 + $0x140] sm:$0xff]
        %v509 = vpack.c.bf16 %v470, %v469
        %v510 = vpack.c.bf16 %v472, %v471
        %v511 = vpack.c.bf16 %v474, %v473
        %v512 = vpack.c.bf16 %v476, %v475
        %v513 = vpack.c.bf16 %v478, %v477
        %v514 = vpack.c.bf16 %v480, %v479
        %v515 = vpack.c.bf16 %v482, %v481
        %v516 = vpack.c.bf16 %v484, %v483
        %v517 = vpack.c.bf16 %v486, %v485
        %v518 = vpack.c.bf16 %v488, %v487
        %v519 = vpack.c.bf16 %v490, %v489
        %v520 = vpack.c.bf16 %v492, %v491
        %v521 = vpack.c.bf16 %v494, %v493
        %v522 = vpack.c.bf16 %v496, %v495
        %v523 = vpack.c.bf16 %v498, %v497
        %v524 = vpack.c.bf16 %v500, %v499
        %v525 = vpack.c.bf16 %v502, %v501
        %v526 = vpack.c.bf16 %v504, %v503
        %v527 = vpack.c.bf16 %v506, %v505
        %v528 = vpack.c.bf16 %v508, %v507
        %549 = vrot.lane.b32.xlu0 %v509, 32
        %v550 = vpop.permute.xlu0 %549
        %551 = vrot.lane.b32.xlu0 %v510, 32
        %v552 = vpop.permute.xlu0 %551
        %553 = vrot.lane.b32.xlu0 %v511, 32
        %v554 = vpop.permute.xlu0 %553
        %555 = vrot.lane.b32.xlu0 %v512, 32
        %v556 = vpop.permute.xlu0 %555
        %557 = vrot.lane.b32.xlu0 %v513, 32
        %v558 = vpop.permute.xlu0 %557
        %559 = vrot.lane.b32.xlu0 %v514, 32
        %v560 = vpop.permute.xlu0 %559
        %561 = vrot.lane.b32.xlu0 %v515, 32
        %v562 = vpop.permute.xlu0 %561
        %563 = vrot.lane.b32.xlu0 %v516, 32
        %v564 = vpop.permute.xlu0 %563
        %565 = vrot.lane.b32.xlu0 %v517, 32
        %v566 = vpop.permute.xlu0 %565
        %567 = vrot.lane.b32.xlu0 %v518, 32
        %v568 = vpop.permute.xlu0 %567
        %569 = vrot.lane.b32.xlu0 %v519, 32
        %v570 = vpop.permute.xlu0 %569
        %571 = vrot.lane.b32.xlu0 %v520, 32
        %v572 = vpop.permute.xlu0 %571
        %573 = vrot.lane.b32.xlu0 %v521, 32
        %v574 = vpop.permute.xlu0 %573
        %575 = vrot.lane.b32.xlu0 %v522, 32
        %v576 = vpop.permute.xlu0 %575
        %577 = vrot.lane.b32.xlu0 %v523, 32
        %v578 = vpop.permute.xlu0 %577
        %579 = vrot.lane.b32.xlu0 %v524, 32
        %v580 = vpop.permute.xlu0 %579
        %581 = vrot.lane.b32.xlu0 %v525, 32
        %v582 = vpop.permute.xlu0 %581
        %583 = vrot.lane.b32.xlu0 %v526, 32
        %v584 = vpop.permute.xlu0 %583
        %585 = vrot.lane.b32.xlu0 %v527, 32
        %v586 = vpop.permute.xlu0 %585
        %587 = vrot.lane.b32.xlu0 %v528, 32
        %v588 = vpop.permute.xlu0 %587
        %vm609 = vcmask 523520
        %610 = vst.msk [vmem:[#allocation3] sm:$0xff] %vm609, %v550
        %611 = vst.msk [vmem:[#allocation3 + $0x8] sm:$0xff] %vm609, %v552
        %612 = vst.msk [vmem:[#allocation3 + $0x10] sm:$0xff] %vm609, %v554
        %613 = vst.msk [vmem:[#allocation3 + $0x18] sm:$0xff] %vm609, %v556
        %614 = vst.msk [vmem:[#allocation3 + $0x20] sm:$0xff] %vm609, %v558
        %615 = vst.msk [vmem:[#allocation3 + $0x28] sm:$0xff] %vm609, %v560
        %616 = vst.msk [vmem:[#allocation3 + $0x30] sm:$0xff] %vm609, %v562
        %617 = vst.msk [vmem:[#allocation3 + $0x38] sm:$0xff] %vm609, %v564
        %618 = vst.msk [vmem:[#allocation3 + $0x40] sm:$0xff] %vm609, %v566
        %619 = vst.msk [vmem:[#allocation3 + $0x48] sm:$0xff] %vm609, %v568
        %620 = vst.msk [vmem:[#allocation3 + $0x50] sm:$0xff] %vm609, %v570
        %621 = vst.msk [vmem:[#allocation3 + $0x58] sm:$0xff] %vm609, %v572
        %622 = vst.msk [vmem:[#allocation3 + $0x60] sm:$0xff] %vm609, %v574
        %623 = vst.msk [vmem:[#allocation3 + $0x68] sm:$0xff] %vm609, %v576
        %624 = vst.msk [vmem:[#allocation3 + $0x70] sm:$0xff] %vm609, %v578
        %625 = vst.msk [vmem:[#allocation3 + $0x78] sm:$0xff] %vm609, %v580
        %626 = vst.msk [vmem:[#allocation3 + $0x80] sm:$0xff] %vm609, %v582
        %627 = vst.msk [vmem:[#allocation3 + $0x88] sm:$0xff] %vm609, %v584
        %628 = vst.msk [vmem:[#allocation3 + $0x90] sm:$0xff] %vm609, %v586
        %629 = vst.msk [vmem:[#allocation3 + $0x98] sm:$0xff] %vm609, %v588
        %v630 = vld [vmem:[#allocation2 + $0x9] sm:$0xff]
        %v631 = vld [vmem:[#allocation2 + $0x11] sm:$0xff]
        %v632 = vld [vmem:[#allocation2 + $0x19] sm:$0xff]
        %v633 = vld [vmem:[#allocation2 + $0x21] sm:$0xff]
        %v634 = vld [vmem:[#allocation2 + $0x29] sm:$0xff]
        %v635 = vld [vmem:[#allocation2 + $0x31] sm:$0xff]
        %v636 = vld [vmem:[#allocation2 + $0x39] sm:$0xff]
        %v637 = vld [vmem:[#allocation2 + $0x41] sm:$0xff]
        %v638 = vld [vmem:[#allocation2 + $0x49] sm:$0xff]
        %v639 = vld [vmem:[#allocation2 + $0x51] sm:$0xff]
        %v640 = vld [vmem:[#allocation2 + $0x59] sm:$0xff]
        %v641 = vld [vmem:[#allocation2 + $0x61] sm:$0xff]
        %v642 = vld [vmem:[#allocation2 + $0x69] sm:$0xff]
        %v643 = vld [vmem:[#allocation2 + $0x71] sm:$0xff]
        %v644 = vld [vmem:[#allocation2 + $0x79] sm:$0xff]
        %v645 = vld [vmem:[#allocation2 + $0x81] sm:$0xff]
        %v646 = vld [vmem:[#allocation2 + $0x89] sm:$0xff]
        %v647 = vld [vmem:[#allocation2 + $0x91] sm:$0xff]
        %v648 = vld [vmem:[#allocation2 + $0x99] sm:$0xff]
        %v649 = vld [vmem:[#allocation2 + $0xa1] sm:$0xff]
        %v650 = vld [vmem:[#allocation2 + $0xa9] sm:$0xff]
        %v651 = vld [vmem:[#allocation2 + $0xb1] sm:$0xff]
        %v652 = vld [vmem:[#allocation2 + $0xb9] sm:$0xff]
        %v653 = vld [vmem:[#allocation2 + $0xc1] sm:$0xff]
        %v654 = vld [vmem:[#allocation2 + $0xc9] sm:$0xff]
        %v655 = vld [vmem:[#allocation2 + $0xd1] sm:$0xff]
        %v656 = vld [vmem:[#allocation2 + $0xd9] sm:$0xff]
        %v657 = vld [vmem:[#allocation2 + $0xe1] sm:$0xff]
        %v658 = vld [vmem:[#allocation2 + $0xe9] sm:$0xff]
        %v659 = vld [vmem:[#allocation2 + $0xf1] sm:$0xff]
        %v660 = vld [vmem:[#allocation2 + $0xf9] sm:$0xff]
        %v661 = vld [vmem:[#allocation2 + $0x101] sm:$0xff]
        %v662 = vld [vmem:[#allocation2 + $0x109] sm:$0xff]
        %v663 = vld [vmem:[#allocation2 + $0x111] sm:$0xff]
        %v664 = vld [vmem:[#allocation2 + $0x119] sm:$0xff]
        %v665 = vld [vmem:[#allocation2 + $0x121] sm:$0xff]
        %v666 = vld [vmem:[#allocation2 + $0x129] sm:$0xff]
        %v667 = vld [vmem:[#allocation2 + $0x131] sm:$0xff]
        %v668 = vld [vmem:[#allocation2 + $0x139] sm:$0xff]
        %v669 = vld [vmem:[#allocation2 + $0x141] sm:$0xff]
        %v670 = vpack.c.bf16 %v631, %v630
        %v671 = vpack.c.bf16 %v633, %v632
        %v672 = vpack.c.bf16 %v635, %v634
        %v673 = vpack.c.bf16 %v637, %v636
        %v674 = vpack.c.bf16 %v639, %v638
        %v675 = vpack.c.bf16 %v641, %v640
        %v676 = vpack.c.bf16 %v643, %v642
        %v677 = vpack.c.bf16 %v645, %v644
        %v678 = vpack.c.bf16 %v647, %v646
        %v679 = vpack.c.bf16 %v649, %v648
        %v680 = vpack.c.bf16 %v651, %v650
        %v681 = vpack.c.bf16 %v653, %v652
        %v682 = vpack.c.bf16 %v655, %v654
        %v683 = vpack.c.bf16 %v657, %v656
        %v684 = vpack.c.bf16 %v659, %v658
        %v685 = vpack.c.bf16 %v661, %v660
        %v686 = vpack.c.bf16 %v663, %v662
        %v687 = vpack.c.bf16 %v665, %v664
        %v688 = vpack.c.bf16 %v667, %v666
        %v689 = vpack.c.bf16 %v669, %v668
        %710 = vrot.lane.b32.xlu0 %v670, 64
        %v711 = vpop.permute.xlu0 %710
        %712 = vrot.lane.b32.xlu0 %v671, 64
        %v713 = vpop.permute.xlu0 %712
        %714 = vrot.lane.b32.xlu0 %v672, 64
        %v715 = vpop.permute.xlu0 %714
        %716 = vrot.lane.b32.xlu0 %v673, 64
        %v717 = vpop.permute.xlu0 %716
        %718 = vrot.lane.b32.xlu0 %v674, 64
        %v719 = vpop.permute.xlu0 %718
        %720 = vrot.lane.b32.xlu0 %v675, 64
        %v721 = vpop.permute.xlu0 %720
        %722 = vrot.lane.b32.xlu0 %v676, 64
        %v723 = vpop.permute.xlu0 %722
        %724 = vrot.lane.b32.xlu0 %v677, 64
        %v725 = vpop.permute.xlu0 %724
        %726 = vrot.lane.b32.xlu0 %v678, 64
        %v727 = vpop.permute.xlu0 %726
        %728 = vrot.lane.b32.xlu0 %v679, 64
        %v729 = vpop.permute.xlu0 %728
        %730 = vrot.lane.b32.xlu0 %v680, 64
        %v731 = vpop.permute.xlu0 %730
        %732 = vrot.lane.b32.xlu0 %v681, 64
        %v733 = vpop.permute.xlu0 %732
        %734 = vrot.lane.b32.xlu0 %v682, 64
        %v735 = vpop.permute.xlu0 %734
        %736 = vrot.lane.b32.xlu0 %v683, 64
        %v737 = vpop.permute.xlu0 %736
        %738 = vrot.lane.b32.xlu0 %v684, 64
        %v739 = vpop.permute.xlu0 %738
        %740 = vrot.lane.b32.xlu0 %v685, 64
        %v741 = vpop.permute.xlu0 %740
        %742 = vrot.lane.b32.xlu0 %v686, 64
        %v743 = vpop.permute.xlu0 %742
        %744 = vrot.lane.b32.xlu0 %v687, 64
        %v745 = vpop.permute.xlu0 %744
        %746 = vrot.lane.b32.xlu0 %v688, 64
        %v747 = vpop.permute.xlu0 %746
        %748 = vrot.lane.b32.xlu0 %v689, 64
        %v749 = vpop.permute.xlu0 %748
        %vm770 = vcmask 785920
        %771 = vst.msk [vmem:[#allocation3] sm:$0xff] %vm770, %v711
        %772 = vst.msk [vmem:[#allocation3 + $0x8] sm:$0xff] %vm770, %v713
        %773 = vst.msk [vmem:[#allocation3 + $0x10] sm:$0xff] %vm770, %v715
        %774 = vst.msk [vmem:[#allocation3 + $0x18] sm:$0xff] %vm770, %v717
        %775 = vst.msk [vmem:[#allocation3 + $0x20] sm:$0xff] %vm770, %v719
        %776 = vst.msk [vmem:[#allocation3 + $0x28] sm:$0xff] %vm770, %v721
        %777 = vst.msk [vmem:[#allocation3 + $0x30] sm:$0xff] %vm770, %v723
        %778 = vst.msk [vmem:[#allocation3 + $0x38] sm:$0xff] %vm770, %v725
        %779 = vst.msk [vmem:[#allocation3 + $0x40] sm:$0xff] %vm770, %v727
        %780 = vst.msk [vmem:[#allocation3 + $0x48] sm:$0xff] %vm770, %v729
        %781 = vst.msk [vmem:[#allocation3 + $0x50] sm:$0xff] %vm770, %v731
        %782 = vst.msk [vmem:[#allocation3 + $0x58] sm:$0xff] %vm770, %v733
        %783 = vst.msk [vmem:[#allocation3 + $0x60] sm:$0xff] %vm770, %v735
        %784 = vst.msk [vmem:[#allocation3 + $0x68] sm:$0xff] %vm770, %v737
        %785 = vst.msk [vmem:[#allocation3 + $0x70] sm:$0xff] %vm770, %v739
        %786 = vst.msk [vmem:[#allocation3 + $0x78] sm:$0xff] %vm770, %v741
        %787 = vst.msk [vmem:[#allocation3 + $0x80] sm:$0xff] %vm770, %v743
        %788 = vst.msk [vmem:[#allocation3 + $0x88] sm:$0xff] %vm770, %v745
        %789 = vst.msk [vmem:[#allocation3 + $0x90] sm:$0xff] %vm770, %v747
        %790 = vst.msk [vmem:[#allocation3 + $0x98] sm:$0xff] %vm770, %v749
        %v791 = vld [vmem:[#allocation3] sm:$0xff]
        %v792 = vld [vmem:[#allocation3 + $0x8] sm:$0xff]
        %v793 = vld [vmem:[#allocation3 + $0x10] sm:$0xff]
        %v794 = vld [vmem:[#allocation3 + $0x18] sm:$0xff]
        %v795 = vld [vmem:[#allocation3 + $0x20] sm:$0xff]
        %v796 = vld [vmem:[#allocation3 + $0x28] sm:$0xff]
        %v797 = vld [vmem:[#allocation3 + $0x30] sm:$0xff]
        %v798 = vld [vmem:[#allocation3 + $0x38] sm:$0xff]
        %v799 = vld [vmem:[#allocation3 + $0x40] sm:$0xff]
        %v800 = vld [vmem:[#allocation3 + $0x48] sm:$0xff]
        %v801 = vld [vmem:[#allocation3 + $0x50] sm:$0xff]
        %v802 = vld [vmem:[#allocation3 + $0x58] sm:$0xff]
        %v803 = vld [vmem:[#allocation3 + $0x60] sm:$0xff]
        %v804 = vld [vmem:[#allocation3 + $0x68] sm:$0xff]
        %v805 = vld [vmem:[#allocation3 + $0x70] sm:$0xff]
        %v806 = vld [vmem:[#allocation3 + $0x78] sm:$0xff]
        %v807 = vld [vmem:[#allocation3 + $0x80] sm:$0xff]
        %v808 = vld [vmem:[#allocation3 + $0x88] sm:$0xff]
        %v809 = vld [vmem:[#allocation3 + $0x90] sm:$0xff]
        %v810 = vld [vmem:[#allocation3 + $0x98] sm:$0xff]
        %v811 = vld [vmem:[%s1] sm:$0xff]
        %v812 = vld [vmem:[%s1 + $0x8] sm:$0xff]
        %v813 = vld [vmem:[%s1 + $0x10] sm:$0xff]
        %v814 = vld [vmem:[%s1 + $0x18] sm:$0xff]
        %v815 = vld [vmem:[%s1 + $0x20] sm:$0xff]
        %v816 = vld [vmem:[%s1 + $0x28] sm:$0xff]
        %v817 = vld [vmem:[%s1 + $0x30] sm:$0xff]
        %v818 = vld [vmem:[%s1 + $0x38] sm:$0xff]
        %v819 = vld [vmem:[%s1 + $0x40] sm:$0xff]
        %v820 = vld [vmem:[%s1 + $0x48] sm:$0xff]
        %v821 = vld [vmem:[%s1 + $0x50] sm:$0xff]
        %v822 = vld [vmem:[%s1 + $0x58] sm:$0xff]
        %v823 = vld [vmem:[%s2] sm:$0x3]
        %v825 = vlaneseq
        %v826 = vshrl.u32 %v825, 7
        %v827 = vsub.s32 0, %v826
        %v828 = vrot.slane %v823, %v827
        %v829 = vlaneseq
        %v830 = vshrl.u32 %v829, 7
        %v831 = vsub.s32 1, %v830
        %v832 = vrot.slane %v823, %v831
        %v847 = vunpack.c.l.b16 %v811
        %v848 = vunpack.c.h.b16 %v811
        %v849 = vunpack.c.l.b16 %v812
        %v850 = vunpack.c.h.b16 %v812
        %v851 = vunpack.c.l.b16 %v813
        %v852 = vunpack.c.h.b16 %v813
        %v853 = vunpack.c.l.b16 %v814
        %v854 = vunpack.c.h.b16 %v814
        %v855 = vunpack.c.l.b16 %v815
        %v856 = vunpack.c.h.b16 %v815
        %v857 = vunpack.c.l.b16 %v816
        %v858 = vunpack.c.h.b16 %v816
        %v859 = vunpack.c.l.b16 %v817
        %v860 = vunpack.c.h.b16 %v817
        %v861 = vunpack.c.l.b16 %v818
        %v862 = vunpack.c.h.b16 %v818
        %v863 = vunpack.c.l.b16 %v819
        %v864 = vunpack.c.h.b16 %v819
        %v865 = vunpack.c.l.b16 %v820
        %v866 = vunpack.c.h.b16 %v820
        %v867 = vunpack.c.l.b16 %v821
        %v868 = vunpack.c.h.b16 %v821
        %v869 = vunpack.c.l.b16 %v822
        %v870 = vunpack.c.h.b16 %v822
        %v871 = vpack.c.b16 %v849, %v847
        %v872 = vpack.c.b16 %v850, %v848
        %v873 = vpack.c.b16 %v853, %v851
        %v874 = vpack.c.b16 %v854, %v852
        %v875 = vpack.c.b16 %v857, %v855
        %v876 = vpack.c.b16 %v858, %v856
        %v877 = vpack.c.b16 %v861, %v859
        %v878 = vpack.c.b16 %v862, %v860
        %v879 = vpack.c.b16 %v865, %v863
        %v880 = vpack.c.b16 %v866, %v864
        %v881 = vpack.c.b16 %v869, %v867
        %v882 = vpack.c.b16 %v870, %v868
        %vm895 = vcmask 785408
        %v897 = vsel %vm895, %v791, 0
        %v900 = vsel %vm895, %v792, 0
        %v903 = vsel %vm895, %v793, 0
        %v906 = vsel %vm895, %v794, 0
        %v909 = vsel %vm895, %v795, 0
        %v912 = vsel %vm895, %v796, 0
        %v915 = vsel %vm895, %v797, 0
        %v918 = vsel %vm895, %v798, 0
        %v921 = vsel %vm895, %v799, 0
        %v924 = vsel %vm895, %v800, 0
        %v927 = vsel %vm895, %v801, 0
        %v930 = vsel %vm895, %v802, 0
        %v933 = vsel %vm895, %v803, 0
        %v936 = vsel %vm895, %v804, 0
        %v939 = vsel %vm895, %v805, 0
        %v942 = vsel %vm895, %v806, 0
        %v945 = vsel %vm895, %v807, 0
        %v948 = vsel %vm895, %v808, 0
        %v951 = vsel %vm895, %v809, 0
        %v954 = vsel %vm895, %v810, 0
        %956 = vmatprep.subr.bf16.mxu0 %v872
        %957 = vmatpush1.bf16.msra.mxu0 %v871
        %958 = vmatprep.subr.bf16.mxu0 %v874
        %959 = vmatpush1.bf16.msra.mxu0 %v873
        %960 = vmatprep.subr.bf16.mxu0 %v876
        %961 = vmatpush1.bf16.msra.mxu0 %v875
        %962 = vmatprep.subr.bf16.mxu0 %v878
        %963 = vmatpush1.bf16.msra.mxu0 %v877
        %964 = vmatprep.subr.bf16.mxu0 %v880
        %965 = vmatpush1.bf16.msra.mxu0 %v879
        %966 = vmatprep.subr.bf16.mxu0 %v882
        %967 = vmatpush1.bf16.msra.mxu0 %v881
        %968 = vmatprep.subr.bf16.mxu0 0
        %969 = vmatpush1.bf16.msra.mxu0 0
        %970 = vmatprep.subr.bf16.mxu0 0
        %971 = vmatpush1.bf16.msra.mxu0 0
        %972 = vmatprep.subr.bf16.mxu0 0
        %973 = vmatpush1.bf16.msra.mxu0 0
        %974 = vmatprep.subr.bf16.mxu0 0
        %975 = vmatpush1.bf16.msra.mxu0 0
        %976 = vmatprep.subr.bf16.mxu0 0
        %977 = vmatpush1.bf16.msra.mxu0 0
        %978 = vmatprep.subr.bf16.mxu0 0
        %979 = vmatpush1.bf16.msra.mxu0 0
        %980 = vmatprep.subr.bf16.mxu0 0
        %981 = vmatpush1.bf16.msra.mxu0 0
        %982 = vmatprep.subr.bf16.mxu0 0
        %983 = vmatpush1.bf16.msra.mxu0 0
        %984 = vmatprep.subr.bf16.mxu0 0
        %985 = vmatpush1.bf16.msra.mxu0 0
        %986 = vmatprep.subr.bf16.mxu0 0
        %987 = vmatpush1.bf16.msra.mxu0 0
        %988 = vmatprep.mubr.bf16.mxu0 0
        %989 = vmatmul.mubr.bf16.gmra.mrb[0].mxu0 %v897
        %v990 = vpop.f32.mrb[0].mxu0
        %v991 = vadd.f32 %v828, %v990
        %v992 = vpop.f32.mrb[0].mxu0
        %v993 = vadd.f32 %v832, %v992
        %v994 = vpop.f32.mrb[0].mxu0
        %v995 = vadd.f32 %v828, %v994
        %v996 = vpop.f32.mrb[0].mxu0
        %v997 = vadd.f32 %v832, %v996
        %998 = vmatprep.mubr.bf16.mxu0 0
        %999 = vmatmul.mubr.bf16.gmra.mrb[0].mxu0 %v900
        %v1000 = vpop.f32.mrb[0].mxu0
        %v1001 = vadd.f32 %v828, %v1000
        %v1002 = vpop.f32.mrb[0].mxu0
        %v1003 = vadd.f32 %v832, %v1002
        %v1004 = vpop.f32.mrb[0].mxu0
        %v1005 = vadd.f32 %v828, %v1004
        %v1006 = vpop.f32.mrb[0].mxu0
        %v1007 = vadd.f32 %v832, %v1006
        %1008 = vmatprep.mubr.bf16.mxu0 0
        %1009 = vmatmul.mubr.bf16.gmra.mrb[0].mxu0 %v903
        %v1010 = vpop.f32.mrb[0].mxu0
        %v1011 = vadd.f32 %v828, %v1010
        %v1012 = vpop.f32.mrb[0].mxu0
        %v1013 = vadd.f32 %v832, %v1012
        %v1014 = vpop.f32.mrb[0].mxu0
        %v1015 = vadd.f32 %v828, %v1014
        %v1016 = vpop.f32.mrb[0].mxu0
        %v1017 = vadd.f32 %v832, %v1016
        %1018 = vmatprep.mubr.bf16.mxu0 0
        %1019 = vmatmul.mubr.bf16.gmra.mrb[0].mxu0 %v906
        %v1020 = vpop.f32.mrb[0].mxu0
        %v1021 = vadd.f32 %v828, %v1020
        %v1022 = vpop.f32.mrb[0].mxu0
        %v1023 = vadd.f32 %v832, %v1022
        %v1024 = vpop.f32.mrb[0].mxu0
        %v1025 = vadd.f32 %v828, %v1024
        %v1026 = vpop.f32.mrb[0].mxu0
        %v1027 = vadd.f32 %v832, %v1026
        %1028 = vmatprep.mubr.bf16.mxu0 0
        %1029 = vmatmul.mubr.bf16.gmra.mrb[0].mxu0 %v909
        %v1030 = vpop.f32.mrb[0].mxu0
        %v1031 = vadd.f32 %v828, %v1030
        %v1032 = vpop.f32.mrb[0].mxu0
        %v1033 = vadd.f32 %v832, %v1032
        %v1034 = vpop.f32.mrb[0].mxu0
        %v1035 = vadd.f32 %v828, %v1034
        %v1036 = vpop.f32.mrb[0].mxu0
        %v1037 = vadd.f32 %v832, %v1036
        %1038 = vmatprep.mubr.bf16.mxu0 0
        %1039 = vmatmul.mubr.bf16.gmra.mrb[0].mxu0 %v912
        %v1040 = vpop.f32.mrb[0].mxu0
        %v1041 = vadd.f32 %v828, %v1040
        %v1042 = vpop.f32.mrb[0].mxu0
        %v1043 = vadd.f32 %v832, %v1042
        %v1044 = vpop.f32.mrb[0].mxu0
        %v1045 = vadd.f32 %v828, %v1044
        %v1046 = vpop.f32.mrb[0].mxu0
        %v1047 = vadd.f32 %v832, %v1046
        %1048 = vmatprep.mubr.bf16.mxu0 0
        %1049 = vmatmul.mubr.bf16.gmra.mrb[0].mxu0 %v915
        %v1050 = vpop.f32.mrb[0].mxu0
        %v1051 = vadd.f32 %v828, %v1050
        %v1052 = vpop.f32.mrb[0].mxu0
        %v1053 = vadd.f32 %v832, %v1052
        %v1054 = vpop.f32.mrb[0].mxu0
        %v1055 = vadd.f32 %v828, %v1054
        %v1056 = vpop.f32.mrb[0].mxu0
        %v1057 = vadd.f32 %v832, %v1056
        %1058 = vmatprep.mubr.bf16.mxu0 0
        %1059 = vmatmul.mubr.bf16.gmra.mrb[0].mxu0 %v918
        %v1060 = vpop.f32.mrb[0].mxu0
        %v1061 = vadd.f32 %v828, %v1060
        %v1062 = vpop.f32.mrb[0].mxu0
        %v1063 = vadd.f32 %v832, %v1062
        %v1064 = vpop.f32.mrb[0].mxu0
        %v1065 = vadd.f32 %v828, %v1064
        %v1066 = vpop.f32.mrb[0].mxu0
        %v1067 = vadd.f32 %v832, %v1066
        %1068 = vmatprep.mubr.bf16.mxu0 0
        %1069 = vmatmul.mubr.bf16.gmra.mrb[0].mxu0 %v921
        %v1070 = vpop.f32.mrb[0].mxu0
        %v1071 = vadd.f32 %v828, %v1070
        %v1072 = vpop.f32.mrb[0].mxu0
        %v1073 = vadd.f32 %v832, %v1072
        %v1074 = vpop.f32.mrb[0].mxu0
        %v1075 = vadd.f32 %v828, %v1074
        %v1076 = vpop.f32.mrb[0].mxu0
        %v1077 = vadd.f32 %v832, %v1076
        %1078 = vmatprep.mubr.bf16.mxu0 0
        %1079 = vmatmul.mubr.bf16.gmra.mrb[0].mxu0 %v924
        %v1080 = vpop.f32.mrb[0].mxu0
        %v1081 = vadd.f32 %v828, %v1080
        %v1082 = vpop.f32.mrb[0].mxu0
        %v1083 = vadd.f32 %v832, %v1082
        %v1084 = vpop.f32.mrb[0].mxu0
        %v1085 = vadd.f32 %v828, %v1084
        %v1086 = vpop.f32.mrb[0].mxu0
        %v1087 = vadd.f32 %v832, %v1086
        %1088 = vmatprep.mubr.bf16.mxu0 0
        %1089 = vmatmul.mubr.bf16.gmra.mrb[0].mxu0 %v927
        %v1090 = vpop.f32.mrb[0].mxu0
        %v1091 = vadd.f32 %v828, %v1090
        %v1092 = vpop.f32.mrb[0].mxu0
        %v1093 = vadd.f32 %v832, %v1092
        %v1094 = vpop.f32.mrb[0].mxu0
        %v1095 = vadd.f32 %v828, %v1094
        %v1096 = vpop.f32.mrb[0].mxu0
        %v1097 = vadd.f32 %v832, %v1096
        %1098 = vmatprep.mubr.bf16.mxu0 0
        %1099 = vmatmul.mubr.bf16.gmra.mrb[0].mxu0 %v930
        %v1100 = vpop.f32.mrb[0].mxu0
        %v1101 = vadd.f32 %v828, %v1100
        %v1102 = vpop.f32.mrb[0].mxu0
        %v1103 = vadd.f32 %v832, %v1102
        %v1104 = vpop.f32.mrb[0].mxu0
        %v1105 = vadd.f32 %v828, %v1104
        %v1106 = vpop.f32.mrb[0].mxu0
        %v1107 = vadd.f32 %v832, %v1106
        %1108 = vmatprep.mubr.bf16.mxu0 0
        %1109 = vmatmul.mubr.bf16.gmra.mrb[0].mxu0 %v933
        %v1110 = vpop.f32.mrb[0].mxu0
        %v1111 = vadd.f32 %v828, %v1110
        %v1112 = vpop.f32.mrb[0].mxu0
        %v1113 = vadd.f32 %v832, %v1112
        %v1114 = vpop.f32.mrb[0].mxu0
        %v1115 = vadd.f32 %v828, %v1114
        %v1116 = vpop.f32.mrb[0].mxu0
        %v1117 = vadd.f32 %v832, %v1116
        %1118 = vmatprep.mubr.bf16.mxu0 0
        %1119 = vmatmul.mubr.bf16.gmra.mrb[0].mxu0 %v936
        %v1120 = vpop.f32.mrb[0].mxu0
        %v1121 = vadd.f32 %v828, %v1120
        %v1122 = vpop.f32.mrb[0].mxu0
        %v1123 = vadd.f32 %v832, %v1122
        %v1124 = vpop.f32.mrb[0].mxu0
        %v1125 = vadd.f32 %v828, %v1124
        %v1126 = vpop.f32.mrb[0].mxu0
        %v1127 = vadd.f32 %v832, %v1126
        %1128 = vmatprep.mubr.bf16.mxu0 0
        %1129 = vmatmul.mubr.bf16.gmra.mrb[0].mxu0 %v939
        %v1130 = vpop.f32.mrb[0].mxu0
        %v1131 = vadd.f32 %v828, %v1130
        %v1132 = vpop.f32.mrb[0].mxu0
        %v1133 = vadd.f32 %v832, %v1132
        %v1134 = vpop.f32.mrb[0].mxu0
        %v1135 = vadd.f32 %v828, %v1134
        %v1136 = vpop.f32.mrb[0].mxu0
        %v1137 = vadd.f32 %v832, %v1136
        %1138 = vmatprep.mubr.bf16.mxu0 0
        %1139 = vmatmul.mubr.bf16.gmra.mrb[0].mxu0 %v942
        %v1140 = vpop.f32.mrb[0].mxu0
        %v1141 = vadd.f32 %v828, %v1140
        %v1142 = vpop.f32.mrb[0].mxu0
        %v1143 = vadd.f32 %v832, %v1142
        %v1144 = vpop.f32.mrb[0].mxu0
        %v1145 = vadd.f32 %v828, %v1144
        %v1146 = vpop.f32.mrb[0].mxu0
        %v1147 = vadd.f32 %v832, %v1146
        %1148 = vmatprep.mubr.bf16.mxu0 0
        %1149 = vmatmul.mubr.bf16.gmra.mrb[0].mxu0 %v945
        %v1150 = vpop.f32.mrb[0].mxu0
        %v1151 = vadd.f32 %v828, %v1150
        %v1152 = vpop.f32.mrb[0].mxu0
        %v1153 = vadd.f32 %v832, %v1152
        %v1154 = vpop.f32.mrb[0].mxu0
        %v1155 = vadd.f32 %v828, %v1154
        %v1156 = vpop.f32.mrb[0].mxu0
        %v1157 = vadd.f32 %v832, %v1156
        %1158 = vmatprep.mubr.bf16.mxu0 0
        %1159 = vmatmul.mubr.bf16.gmra.mrb[0].mxu0 %v948
        %v1160 = vpop.f32.mrb[0].mxu0
        %v1161 = vadd.f32 %v828, %v1160
        %v1162 = vpop.f32.mrb[0].mxu0
        %v1163 = vadd.f32 %v832, %v1162
        %v1164 = vpop.f32.mrb[0].mxu0
        %v1165 = vadd.f32 %v828, %v1164
        %v1166 = vpop.f32.mrb[0].mxu0
        %v1167 = vadd.f32 %v832, %v1166
        %1168 = vmatprep.mubr.bf16.mxu0 0
        %1169 = vmatmul.mubr.bf16.gmra.mrb[0].mxu0 %v951
        %v1170 = vpop.f32.mrb[0].mxu0
        %v1171 = vadd.f32 %v828, %v1170
        %v1172 = vpop.f32.mrb[0].mxu0
        %v1173 = vadd.f32 %v832, %v1172
        %v1174 = vpop.f32.mrb[0].mxu0
        %v1175 = vadd.f32 %v828, %v1174
        %v1176 = vpop.f32.mrb[0].mxu0
        %v1177 = vadd.f32 %v832, %v1176
        %1178 = vmatprep.mubr.bf16.mxu0 0
        %1179 = vmatmul.mubr.bf16.gmra.mrb[0].mxu0 %v954
        %v1180 = vpop.f32.mrb[0].mxu0
        %v1181 = vadd.f32 %v828, %v1180
        %v1182 = vpop.f32.mrb[0].mxu0
        %v1183 = vadd.f32 %v832, %v1182
        %v1184 = vpop.f32.mrb[0].mxu0
        %v1185 = vadd.f32 %v828, %v1184
        %v1186 = vpop.f32.mrb[0].mxu0
        %v1187 = vadd.f32 %v832, %v1186
        %1188 = vdwg.mxu0
        %v1189 = vmax.f32 %v991, 0.0
        %v1190 = vmax.f32 %v993, 0.0
        %v1191 = vmax.f32 %v995, 0.0
        %v1192 = vmax.f32 %v997, 0.0
        %v1193 = vmax.f32 %v1001, 0.0
        %v1194 = vmax.f32 %v1003, 0.0
        %v1195 = vmax.f32 %v1005, 0.0
        %v1196 = vmax.f32 %v1007, 0.0
        %v1197 = vmax.f32 %v1011, 0.0
        %v1198 = vmax.f32 %v1013, 0.0
        %v1199 = vmax.f32 %v1015, 0.0
        %v1200 = vmax.f32 %v1017, 0.0
        %v1201 = vmax.f32 %v1021, 0.0
        %v1202 = vmax.f32 %v1023, 0.0
        %v1203 = vmax.f32 %v1025, 0.0
        %v1204 = vmax.f32 %v1027, 0.0
        %v1205 = vmax.f32 %v1031, 0.0
        %v1206 = vmax.f32 %v1033, 0.0
        %v1207 = vmax.f32 %v1035, 0.0
        %v1208 = vmax.f32 %v1037, 0.0
        %v1209 = vmax.f32 %v1041, 0.0
        %v1210 = vmax.f32 %v1043, 0.0
        %v1211 = vmax.f32 %v1045, 0.0
        %v1212 = vmax.f32 %v1047, 0.0
        %v1213 = vmax.f32 %v1051, 0.0
        %v1214 = vmax.f32 %v1053, 0.0
        %v1215 = vmax.f32 %v1055, 0.0
        %v1216 = vmax.f32 %v1057, 0.0
        %v1217 = vmax.f32 %v1061, 0.0
        %v1218 = vmax.f32 %v1063, 0.0
        %v1219 = vmax.f32 %v1065, 0.0
        %v1220 = vmax.f32 %v1067, 0.0
        %v1221 = vmax.f32 %v1071, 0.0
        %v1222 = vmax.f32 %v1073, 0.0
        %v1223 = vmax.f32 %v1075, 0.0
        %v1224 = vmax.f32 %v1077, 0.0
        %v1225 = vmax.f32 %v1081, 0.0
        %v1226 = vmax.f32 %v1083, 0.0
        %v1227 = vmax.f32 %v1085, 0.0
        %v1228 = vmax.f32 %v1087, 0.0
        %v1229 = vmax.f32 %v1091, 0.0
        %v1230 = vmax.f32 %v1093, 0.0
        %v1231 = vmax.f32 %v1095, 0.0
        %v1232 = vmax.f32 %v1097, 0.0
        %v1233 = vmax.f32 %v1101, 0.0
        %v1234 = vmax.f32 %v1103, 0.0
        %v1235 = vmax.f32 %v1105, 0.0
        %v1236 = vmax.f32 %v1107, 0.0
        %v1237 = vmax.f32 %v1111, 0.0
        %v1238 = vmax.f32 %v1113, 0.0
        %v1239 = vmax.f32 %v1115, 0.0
        %v1240 = vmax.f32 %v1117, 0.0
        %v1241 = vmax.f32 %v1121, 0.0
        %v1242 = vmax.f32 %v1123, 0.0
        %v1243 = vmax.f32 %v1125, 0.0
        %v1244 = vmax.f32 %v1127, 0.0
        %v1245 = vmax.f32 %v1131, 0.0
        %v1246 = vmax.f32 %v1133, 0.0
        %v1247 = vmax.f32 %v1135, 0.0
        %v1248 = vmax.f32 %v1137, 0.0
        %v1249 = vmax.f32 %v1141, 0.0
        %v1250 = vmax.f32 %v1143, 0.0
        %v1251 = vmax.f32 %v1145, 0.0
        %v1252 = vmax.f32 %v1147, 0.0
        %v1253 = vmax.f32 %v1151, 0.0
        %v1254 = vmax.f32 %v1153, 0.0
        %v1255 = vmax.f32 %v1155, 0.0
        %v1256 = vmax.f32 %v1157, 0.0
        %v1257 = vmax.f32 %v1161, 0.0
        %v1258 = vmax.f32 %v1163, 0.0
        %v1259 = vmax.f32 %v1165, 0.0
        %v1260 = vmax.f32 %v1167, 0.0
        %v1261 = vmax.f32 %v1171, 0.0
        %v1262 = vmax.f32 %v1173, 0.0
        %v1263 = vmax.f32 %v1175, 0.0
        %v1264 = vmax.f32 %v1177, 0.0
        %v1265 = vmax.f32 %v1181, 0.0
        %v1266 = vmax.f32 %v1183, 0.0
        %v1267 = vmax.f32 %v1185, 0.0
        %v1268 = vmax.f32 %v1187, 0.0
        %1269 = vst [vmem:[#allocation4 + $0x10] sm:$0xff] %v1189
        %1270 = vst [vmem:[#allocation4 + $0x18] sm:$0xff] %v1190
        %1271 = vst [vmem:[#allocation4 + $0x20] sm:$0xff] %v1191
        %1272 = vst [vmem:[#allocation4 + $0x28] sm:$0xff] %v1192
        %1273 = vst [vmem:[#allocation4 + $0x30] sm:$0xff] %v1193
        %1274 = vst [vmem:[#allocation4 + $0x38] sm:$0xff] %v1194
        %1275 = vst [vmem:[#allocation4 + $0x40] sm:$0xff] %v1195
        %1276 = vst [vmem:[#allocation4 + $0x48] sm:$0xff] %v1196
        %1277 = vst [vmem:[#allocation4 + $0x50] sm:$0xff] %v1197
        %1278 = vst [vmem:[#allocation4 + $0x58] sm:$0xff] %v1198
        %1279 = vst [vmem:[#allocation4 + $0x60] sm:$0xff] %v1199
        %1280 = vst [vmem:[#allocation4 + $0x68] sm:$0xff] %v1200
        %1281 = vst [vmem:[#allocation4 + $0x70] sm:$0xff] %v1201
        %1282 = vst [vmem:[#allocation4 + $0x78] sm:$0xff] %v1202
        %1283 = vst [vmem:[#allocation4 + $0x80] sm:$0xff] %v1203
        %1284 = vst [vmem:[#allocation4 + $0x88] sm:$0xff] %v1204
        %1285 = vst [vmem:[#allocation4 + $0x90] sm:$0xff] %v1205
        %1286 = vst [vmem:[#allocation4 + $0x98] sm:$0xff] %v1206
        %1287 = vst [vmem:[#allocation4 + $0xa0] sm:$0xff] %v1207
        %1288 = vst [vmem:[#allocation4 + $0xa8] sm:$0xff] %v1208
        %1289 = vst [vmem:[#allocation4 + $0xb0] sm:$0xff] %v1209
        %1290 = vst [vmem:[#allocation4 + $0xb8] sm:$0xff] %v1210
        %1291 = vst [vmem:[#allocation4 + $0xc0] sm:$0xff] %v1211
        %1292 = vst [vmem:[#allocation4 + $0xc8] sm:$0xff] %v1212
        %1293 = vst [vmem:[#allocation4 + $0xd0] sm:$0xff] %v1213
        %1294 = vst [vmem:[#allocation4 + $0xd8] sm:$0xff] %v1214
        %1295 = vst [vmem:[#allocation4 + $0xe0] sm:$0xff] %v1215
        %1296 = vst [vmem:[#allocation4 + $0xe8] sm:$0xff] %v1216
        %1297 = vst [vmem:[#allocation4 + $0xf0] sm:$0xff] %v1217
        %1298 = vst [vmem:[#allocation4 + $0xf8] sm:$0xff] %v1218
        %1299 = vst [vmem:[#allocation4 + $0x100] sm:$0xff] %v1219
        %1300 = vst [vmem:[#allocation4 + $0x108] sm:$0xff] %v1220
        %1301 = vst [vmem:[#allocation4 + $0x110] sm:$0xff] %v1221
        %1302 = vst [vmem:[#allocation4 + $0x118] sm:$0xff] %v1222
        %1303 = vst [vmem:[#allocation4 + $0x120] sm:$0xff] %v1223
        %1304 = vst [vmem:[#allocation4 + $0x128] sm:$0xff] %v1224
        %1305 = vst [vmem:[#allocation4 + $0x130] sm:$0xff] %v1225
        %1306 = vst [vmem:[#allocation4 + $0x138] sm:$0xff] %v1226
        %1307 = vst [vmem:[#allocation4 + $0x140] sm:$0xff] %v1227
        %1308 = vst [vmem:[#allocation4 + $0x148] sm:$0xff] %v1228
        %1309 = vst [vmem:[#allocation4 + $0x150] sm:$0xff] %v1229
        %1310 = vst [vmem:[#allocation4 + $0x158] sm:$0xff] %v1230
        %1311 = vst [vmem:[#allocation4 + $0x160] sm:$0xff] %v1231
        %1312 = vst [vmem:[#allocation4 + $0x168] sm:$0xff] %v1232
        %1313 = vst [vmem:[#allocation4 + $0x170] sm:$0xff] %v1233
        %1314 = vst [vmem:[#allocation4 + $0x178] sm:$0xff] %v1234
        %1315 = vst [vmem:[#allocation4 + $0x180] sm:$0xff] %v1235
        %1316 = vst [vmem:[#allocation4 + $0x188] sm:$0xff] %v1236
        %1317 = vst [vmem:[#allocation4 + $0x190] sm:$0xff] %v1237
        %1318 = vst [vmem:[#allocation4 + $0x198] sm:$0xff] %v1238
        %1319 = vst [vmem:[#allocation4 + $0x1a0] sm:$0xff] %v1239
        %1320 = vst [vmem:[#allocation4 + $0x1a8] sm:$0xff] %v1240
        %1321 = vst [vmem:[#allocation4 + $0x1b0] sm:$0xff] %v1241
        %1322 = vst [vmem:[#allocation4 + $0x1b8] sm:$0xff] %v1242
        %1323 = vst [vmem:[#allocation4 + $0x1c0] sm:$0xff] %v1243
        %1324 = vst [vmem:[#allocation4 + $0x1c8] sm:$0xff] %v1244
        %1325 = vst [vmem:[#allocation4 + $0x1d0] sm:$0xff] %v1245
        %1326 = vst [vmem:[#allocation4 + $0x1d8] sm:$0xff] %v1246
        %1327 = vst [vmem:[#allocation4 + $0x1e0] sm:$0xff] %v1247
        %1328 = vst [vmem:[#allocation4 + $0x1e8] sm:$0xff] %v1248
        %1329 = vst [vmem:[#allocation4 + $0x1f0] sm:$0xff] %v1249
        %1330 = vst [vmem:[#allocation4 + $0x1f8] sm:$0xff] %v1250
        %1331 = vst [vmem:[#allocation4 + $0x200] sm:$0xff] %v1251
        %1332 = vst [vmem:[#allocation4 + $0x208] sm:$0xff] %v1252
        %1333 = vst [vmem:[#allocation4 + $0x210] sm:$0xff] %v1253
        %1334 = vst [vmem:[#allocation4 + $0x218] sm:$0xff] %v1254
        %1335 = vst [vmem:[#allocation4 + $0x220] sm:$0xff] %v1255
        %1336 = vst [vmem:[#allocation4 + $0x228] sm:$0xff] %v1256
        %1337 = vst [vmem:[#allocation4 + $0x230] sm:$0xff] %v1257
        %1338 = vst [vmem:[#allocation4 + $0x238] sm:$0xff] %v1258
        %1339 = vst [vmem:[#allocation4 + $0x240] sm:$0xff] %v1259
        %1340 = vst [vmem:[#allocation4 + $0x248] sm:$0xff] %v1260
        %1341 = vst [vmem:[#allocation4 + $0x250] sm:$0xff] %v1261
        %1342 = vst [vmem:[#allocation4 + $0x258] sm:$0xff] %v1262
        %1343 = vst [vmem:[#allocation4 + $0x260] sm:$0xff] %v1263
        %1344 = vst [vmem:[#allocation4 + $0x268] sm:$0xff] %v1264
        %1345 = vst [vmem:[#allocation4 + $0x270] sm:$0xff] %v1265
        %1346 = vst [vmem:[#allocation4 + $0x278] sm:$0xff] %v1266
        %1347 = vst [vmem:[#allocation4 + $0x280] sm:$0xff] %v1267
        %1348 = vst [vmem:[#allocation4 + $0x288] sm:$0xff] %v1268
        %v1349 = vld [vmem:[#allocation4 + $0x10] sm:$0xfe]
        %v1350 = vld [vmem:[#allocation4 + $0x18] sm:$0xfe]
        %v1351 = vld [vmem:[#allocation4 + $0x20] sm:$0xff]
        %v1352 = vld [vmem:[#allocation4 + $0x28] sm:$0xff]
        %v1353 = vld [vmem:[#allocation4 + $0x30] sm:$0xff]
        %v1354 = vld [vmem:[#allocation4 + $0x38] sm:$0xff]
        %v1355 = vld [vmem:[#allocation4 + $0x40] sm:$0xff]
        %v1356 = vld [vmem:[#allocation4 + $0x48] sm:$0xff]
        %v1357 = vld [vmem:[#allocation4 + $0x50] sm:$0xff]
        %v1358 = vld [vmem:[#allocation4 + $0x58] sm:$0xff]
        %v1359 = vld [vmem:[#allocation4 + $0x60] sm:$0xff]
        %v1360 = vld [vmem:[#allocation4 + $0x68] sm:$0xff]
        %v1361 = vld [vmem:[#allocation4 + $0x70] sm:$0xff]
        %v1362 = vld [vmem:[#allocation4 + $0x78] sm:$0xff]
        %v1363 = vld [vmem:[#allocation4 + $0x80] sm:$0xff]
        %v1364 = vld [vmem:[#allocation4 + $0x88] sm:$0xff]
        %v1365 = vld [vmem:[#allocation4 + $0x90] sm:$0xff]
        %v1366 = vld [vmem:[#allocation4 + $0x98] sm:$0xff]
        %v1367 = vld [vmem:[#allocation4 + $0xa0] sm:$0xff]
        %v1368 = vld [vmem:[#allocation4 + $0xa8] sm:$0xff]
        %v1369 = vld [vmem:[#allocation4 + $0xb0] sm:$0xff]
        %v1370 = vld [vmem:[#allocation4 + $0xb8] sm:$0xff]
        %v1371 = vld [vmem:[#allocation4 + $0xc0] sm:$0xff]
        %v1372 = vld [vmem:[#allocation4 + $0xc8] sm:$0xff]
        %v1373 = vld [vmem:[#allocation4 + $0xd0] sm:$0xff]
        %v1374 = vld [vmem:[#allocation4 + $0xd8] sm:$0xff]
        %v1375 = vld [vmem:[#allocation4 + $0xe0] sm:$0xff]
        %v1376 = vld [vmem:[#allocation4 + $0xe8] sm:$0xff]
        %v1377 = vld [vmem:[#allocation4 + $0xf0] sm:$0xff]
        %v1378 = vld [vmem:[#allocation4 + $0xf8] sm:$0xff]
        %v1379 = vld [vmem:[#allocation4 + $0x100] sm:$0xff]
        %v1380 = vld [vmem:[#allocation4 + $0x108] sm:$0xff]
        %v1381 = vld [vmem:[#allocation4 + $0x110] sm:$0xff]
        %v1382 = vld [vmem:[#allocation4 + $0x118] sm:$0xff]
        %v1383 = vld [vmem:[#allocation4 + $0x120] sm:$0xff]
        %v1384 = vld [vmem:[#allocation4 + $0x128] sm:$0xff]
        %v1385 = vld [vmem:[#allocation4 + $0x130] sm:$0xff]
        %v1386 = vld [vmem:[#allocation4 + $0x138] sm:$0xff]
        %v1387 = vld [vmem:[#allocation4 + $0x140] sm:$0xff]
        %v1388 = vld [vmem:[#allocation4 + $0x148] sm:$0xff]
        %v1389 = vld [vmem:[#allocation4 + $0x150] sm:$0xff]
        %v1390 = vld [vmem:[#allocation4 + $0x158] sm:$0xff]
        %v1391 = vld [vmem:[#allocation4 + $0x160] sm:$0xff]
        %v1392 = vld [vmem:[#allocation4 + $0x168] sm:$0xff]
        %v1393 = vld [vmem:[#allocation4 + $0x170] sm:$0xff]
        %v1394 = vld [vmem:[#allocation4 + $0x178] sm:$0xff]
        %v1395 = vld [vmem:[#allocation4 + $0x180] sm:$0xff]
        %v1396 = vld [vmem:[#allocation4 + $0x188] sm:$0xff]
        %v1397 = vld [vmem:[#allocation4 + $0x190] sm:$0xff]
        %v1398 = vld [vmem:[#allocation4 + $0x198] sm:$0xff]
        %v1399 = vld [vmem:[#allocation4 + $0x1a0] sm:$0xff]
        %v1400 = vld [vmem:[#allocation4 + $0x1a8] sm:$0xff]
        %v1401 = vld [vmem:[#allocation4 + $0x1b0] sm:$0xff]
        %v1402 = vld [vmem:[#allocation4 + $0x1b8] sm:$0xff]
        %v1403 = vld [vmem:[#allocation4 + $0x1c0] sm:$0xff]
        %v1404 = vld [vmem:[#allocation4 + $0x1c8] sm:$0xff]
        %v1405 = vld [vmem:[#allocation4 + $0x1d0] sm:$0xff]
        %v1406 = vld [vmem:[#allocation4 + $0x1d8] sm:$0xff]
        %v1407 = vld [vmem:[#allocation4 + $0x1e0] sm:$0xff]
        %v1408 = vld [vmem:[#allocation4 + $0x1e8] sm:$0xff]
        %v1409 = vld [vmem:[#allocation4 + $0x1f0] sm:$0xff]
        %v1410 = vld [vmem:[#allocation4 + $0x1f8] sm:$0xff]
        %v1411 = vld [vmem:[#allocation4 + $0x200] sm:$0xff]
        %v1412 = vld [vmem:[#allocation4 + $0x208] sm:$0xff]
        %v1413 = vld [vmem:[#allocation4 + $0x210] sm:$0xff]
        %v1414 = vld [vmem:[#allocation4 + $0x218] sm:$0xff]
        %v1415 = vld [vmem:[#allocation4 + $0x220] sm:$0xff]
        %v1416 = vld [vmem:[#allocation4 + $0x228] sm:$0xff]
        %v1417 = vld [vmem:[#allocation4 + $0x230] sm:$0xff]
        %v1418 = vld [vmem:[#allocation4 + $0x238] sm:$0xff]
        %v1419 = vld [vmem:[#allocation4 + $0x240] sm:$0xff]
        %v1420 = vld [vmem:[#allocation4 + $0x248] sm:$0xff]
        %v1421 = vld [vmem:[#allocation4 + $0x250] sm:$0xff]
        %v1422 = vld [vmem:[#allocation4 + $0x258] sm:$0xff]
        %v1423 = vld [vmem:[#allocation4 + $0x260] sm:$0xff]
        %v1424 = vld [vmem:[#allocation4 + $0x268] sm:$0xff]
        %v1425 = vld [vmem:[#allocation4 + $0x270] sm:$0xff]
        %v1426 = vld [vmem:[#allocation4 + $0x278] sm:$0xff]
        %v1427 = vld [vmem:[#allocation4 + $0x280] sm:$0xff]
        %v1428 = vld [vmem:[#allocation4 + $0x288] sm:$0xff]
        %v1429 = vld [vmem:[#allocation4 + $0x290] sm:$0x1]
        %v1430 = vld [vmem:[#allocation4 + $0x298] sm:$0x1]
        %vm1513 = vcmask 1046528
        %v1514 = vrot.slane %v1349, 1
        %v1515 = vrot.slane %v1351, 1
        %v1516 = vsel %vm1513, %v1514, %v1515
        %v1517 = vrot.slane %v1350, 1
        %v1518 = vrot.slane %v1352, 1
        %v1519 = vsel %vm1513, %v1517, %v1518
        %v1520 = vrot.slane %v1353, 1
        %v1521 = vsel %vm1513, %v1515, %v1520
        %v1522 = vrot.slane %v1354, 1
        %v1523 = vsel %vm1513, %v1518, %v1522
        %v1524 = vrot.slane %v1355, 1
        %v1525 = vsel %vm1513, %v1520, %v1524
        %v1526 = vrot.slane %v1356, 1
        %v1527 = vsel %vm1513, %v1522, %v1526
        %v1528 = vrot.slane %v1357, 1
        %v1529 = vsel %vm1513, %v1524, %v1528
        %v1530 = vrot.slane %v1358, 1
        %v1531 = vsel %vm1513, %v1526, %v1530
        %v1532 = vrot.slane %v1359, 1
        %v1533 = vsel %vm1513, %v1528, %v1532
        %v1534 = vrot.slane %v1360, 1
        %v1535 = vsel %vm1513, %v1530, %v1534
        %v1536 = vrot.slane %v1361, 1
        %v1537 = vsel %vm1513, %v1532, %v1536
        %v1538 = vrot.slane %v1362, 1
        %v1539 = vsel %vm1513, %v1534, %v1538
        %v1540 = vrot.slane %v1363, 1
        %v1541 = vsel %vm1513, %v1536, %v1540
        %v1542 = vrot.slane %v1364, 1
        %v1543 = vsel %vm1513, %v1538, %v1542
        %v1544 = vrot.slane %v1365, 1
        %v1545 = vsel %vm1513, %v1540, %v1544
        %v1546 = vrot.slane %v1366, 1
        %v1547 = vsel %vm1513, %v1542, %v1546
        %v1548 = vrot.slane %v1367, 1
        %v1549 = vsel %vm1513, %v1544, %v1548
        %v1550 = vrot.slane %v1368, 1
        %v1551 = vsel %vm1513, %v1546, %v1550
        %v1552 = vrot.slane %v1369, 1
        %v1553 = vsel %vm1513, %v1548, %v1552
        %v1554 = vrot.slane %v1370, 1
        %v1555 = vsel %vm1513, %v1550, %v1554
        %v1556 = vrot.slane %v1371, 1
        %v1557 = vsel %vm1513, %v1552, %v1556
        %v1558 = vrot.slane %v1372, 1
        %v1559 = vsel %vm1513, %v1554, %v1558
        %v1560 = vrot.slane %v1373, 1
        %v1561 = vsel %vm1513, %v1556, %v1560
        %v1562 = vrot.slane %v1374, 1
        %v1563 = vsel %vm1513, %v1558, %v1562
        %v1564 = vrot.slane %v1375, 1
        %v1565 = vsel %vm1513, %v1560, %v1564
        %v1566 = vrot.slane %v1376, 1
        %v1567 = vsel %vm1513, %v1562, %v1566
        %v1568 = vrot.slane %v1377, 1
        %v1569 = vsel %vm1513, %v1564, %v1568
        %v1570 = vrot.slane %v1378, 1
        %v1571 = vsel %vm1513, %v1566, %v1570
        %v1572 = vrot.slane %v1379, 1
        %v1573 = vsel %vm1513, %v1568, %v1572
        %v1574 = vrot.slane %v1380, 1
        %v1575 = vsel %vm1513, %v1570, %v1574
        %v1576 = vrot.slane %v1381, 1
        %v1577 = vsel %vm1513, %v1572, %v1576
        %v1578 = vrot.slane %v1382, 1
        %v1579 = vsel %vm1513, %v1574, %v1578
        %v1580 = vrot.slane %v1383, 1
        %v1581 = vsel %vm1513, %v1576, %v1580
        %v1582 = vrot.slane %v1384, 1
        %v1583 = vsel %vm1513, %v1578, %v1582
        %v1584 = vrot.slane %v1385, 1
        %v1585 = vsel %vm1513, %v1580, %v1584
        %v1586 = vrot.slane %v1386, 1
        %v1587 = vsel %vm1513, %v1582, %v1586
        %v1588 = vrot.slane %v1387, 1
        %v1589 = vsel %vm1513, %v1584, %v1588
        %v1590 = vrot.slane %v1388, 1
        %v1591 = vsel %vm1513, %v1586, %v1590
        %v1592 = vrot.slane %v1389, 1
        %v1593 = vsel %vm1513, %v1588, %v1592
        %v1594 = vrot.slane %v1390, 1
        %v1595 = vsel %vm1513, %v1590, %v1594
        %v1596 = vrot.slane %v1391, 1
        %v1597 = vsel %vm1513, %v1592, %v1596
        %v1598 = vrot.slane %v1392, 1
        %v1599 = vsel %vm1513, %v1594, %v1598
        %v1600 = vrot.slane %v1393, 1
        %v1601 = vsel %vm1513, %v1596, %v1600
        %v1602 = vrot.slane %v1394, 1
        %v1603 = vsel %vm1513, %v1598, %v1602
        %v1604 = vrot.slane %v1395, 1
        %v1605 = vsel %vm1513, %v1600, %v1604
        %v1606 = vrot.slane %v1396, 1
        %v1607 = vsel %vm1513, %v1602, %v1606
        %v1608 = vrot.slane %v1397, 1
        %v1609 = vsel %vm1513, %v1604, %v1608
        %v1610 = vrot.slane %v1398, 1
        %v1611 = vsel %vm1513, %v1606, %v1610
        %v1612 = vrot.slane %v1399, 1
        %v1613 = vsel %vm1513, %v1608, %v1612
        %v1614 = vrot.slane %v1400, 1
        %v1615 = vsel %vm1513, %v1610, %v1614
        %v1616 = vrot.slane %v1401, 1
        %v1617 = vsel %vm1513, %v1612, %v1616
        %v1618 = vrot.slane %v1402, 1
        %v1619 = vsel %vm1513, %v1614, %v1618
        %v1620 = vrot.slane %v1403, 1
        %v1621 = vsel %vm1513, %v1616, %v1620
        %v1622 = vrot.slane %v1404, 1
        %v1623 = vsel %vm1513, %v1618, %v1622
        %v1624 = vrot.slane %v1405, 1
        %v1625 = vsel %vm1513, %v1620, %v1624
        %v1626 = vrot.slane %v1406, 1
        %v1627 = vsel %vm1513, %v1622, %v1626
        %v1628 = vrot.slane %v1407, 1
        %v1629 = vsel %vm1513, %v1624, %v1628
        %v1630 = vrot.slane %v1408, 1
        %v1631 = vsel %vm1513, %v1626, %v1630
        %v1632 = vrot.slane %v1409, 1
        %v1633 = vsel %vm1513, %v1628, %v1632
        %v1634 = vrot.slane %v1410, 1
        %v1635 = vsel %vm1513, %v1630, %v1634
        %v1636 = vrot.slane %v1411, 1
        %v1637 = vsel %vm1513, %v1632, %v1636
        %v1638 = vrot.slane %v1412, 1
        %v1639 = vsel %vm1513, %v1634, %v1638
        %v1640 = vrot.slane %v1413, 1
        %v1641 = vsel %vm1513, %v1636, %v1640
        %v1642 = vrot.slane %v1414, 1
        %v1643 = vsel %vm1513, %v1638, %v1642
        %v1644 = vrot.slane %v1415, 1
        %v1645 = vsel %vm1513, %v1640, %v1644
        %v1646 = vrot.slane %v1416, 1
        %v1647 = vsel %vm1513, %v1642, %v1646
        %v1648 = vrot.slane %v1417, 1
        %v1649 = vsel %vm1513, %v1644, %v1648
        %v1650 = vrot.slane %v1418, 1
        %v1651 = vsel %vm1513, %v1646, %v1650
        %v1652 = vrot.slane %v1419, 1
        %v1653 = vsel %vm1513, %v1648, %v1652
        %v1654 = vrot.slane %v1420, 1
        %v1655 = vsel %vm1513, %v1650, %v1654
        %v1656 = vrot.slane %v1421, 1
        %v1657 = vsel %vm1513, %v1652, %v1656
        %v1658 = vrot.slane %v1422, 1
        %v1659 = vsel %vm1513, %v1654, %v1658
        %v1660 = vrot.slane %v1423, 1
        %v1661 = vsel %vm1513, %v1656, %v1660
        %v1662 = vrot.slane %v1424, 1
        %v1663 = vsel %vm1513, %v1658, %v1662
        %v1664 = vrot.slane %v1425, 1
        %v1665 = vsel %vm1513, %v1660, %v1664
        %v1666 = vrot.slane %v1426, 1
        %v1667 = vsel %vm1513, %v1662, %v1666
        %v1668 = vrot.slane %v1427, 1
        %v1669 = vsel %vm1513, %v1664, %v1668
        %v1670 = vrot.slane %v1428, 1
        %v1671 = vsel %vm1513, %v1666, %v1670
        %v1672 = vrot.slane %v1429, 1
        %v1673 = vsel %vm1513, %v1668, %v1672
        %v1674 = vrot.slane %v1430, 1
        %v1675 = vsel %vm1513, %v1670, %v1674
        %v1756 = vmax.f32 %v1189, %v1516
        %v1757 = vmax.f32 %v1190, %v1519
        %v1758 = vmax.f32 %v1191, %v1521
        %v1759 = vmax.f32 %v1192, %v1523
        %v1760 = vmax.f32 %v1193, %v1525
        %v1761 = vmax.f32 %v1194, %v1527
        %v1762 = vmax.f32 %v1195, %v1529
        %v1763 = vmax.f32 %v1196, %v1531
        %v1764 = vmax.f32 %v1197, %v1533
        %v1765 = vmax.f32 %v1198, %v1535
        %v1766 = vmax.f32 %v1199, %v1537
        %v1767 = vmax.f32 %v1200, %v1539
        %v1768 = vmax.f32 %v1201, %v1541
        %v1769 = vmax.f32 %v1202, %v1543
        %v1770 = vmax.f32 %v1203, %v1545
        %v1771 = vmax.f32 %v1204, %v1547
        %v1772 = vmax.f32 %v1205, %v1549
        %v1773 = vmax.f32 %v1206, %v1551
        %v1774 = vmax.f32 %v1207, %v1553
        %v1775 = vmax.f32 %v1208, %v1555
        %v1776 = vmax.f32 %v1209, %v1557
        %v1777 = vmax.f32 %v1210, %v1559
        %v1778 = vmax.f32 %v1211, %v1561
        %v1779 = vmax.f32 %v1212, %v1563
        %v1780 = vmax.f32 %v1213, %v1565
        %v1781 = vmax.f32 %v1214, %v1567
        %v1782 = vmax.f32 %v1215, %v1569
        %v1783 = vmax.f32 %v1216, %v1571
        %v1784 = vmax.f32 %v1217, %v1573
        %v1785 = vmax.f32 %v1218, %v1575
        %v1786 = vmax.f32 %v1219, %v1577
        %v1787 = vmax.f32 %v1220, %v1579
        %v1788 = vmax.f32 %v1221, %v1581
        %v1789 = vmax.f32 %v1222, %v1583
        %v1790 = vmax.f32 %v1223, %v1585
        %v1791 = vmax.f32 %v1224, %v1587
        %v1792 = vmax.f32 %v1225, %v1589
        %v1793 = vmax.f32 %v1226, %v1591
        %v1794 = vmax.f32 %v1227, %v1593
        %v1795 = vmax.f32 %v1228, %v1595
        %v1796 = vmax.f32 %v1229, %v1597
        %v1797 = vmax.f32 %v1230, %v1599
        %v1798 = vmax.f32 %v1231, %v1601
        %v1799 = vmax.f32 %v1232, %v1603
        %v1800 = vmax.f32 %v1233, %v1605
        %v1801 = vmax.f32 %v1234, %v1607
        %v1802 = vmax.f32 %v1235, %v1609
        %v1803 = vmax.f32 %v1236, %v1611
        %v1804 = vmax.f32 %v1237, %v1613
        %v1805 = vmax.f32 %v1238, %v1615
        %v1806 = vmax.f32 %v1239, %v1617
        %v1807 = vmax.f32 %v1240, %v1619
        %v1808 = vmax.f32 %v1241, %v1621
        %v1809 = vmax.f32 %v1242, %v1623
        %v1810 = vmax.f32 %v1243, %v1625
        %v1811 = vmax.f32 %v1244, %v1627
        %v1812 = vmax.f32 %v1245, %v1629
        %v1813 = vmax.f32 %v1246, %v1631
        %v1814 = vmax.f32 %v1247, %v1633
        %v1815 = vmax.f32 %v1248, %v1635
        %v1816 = vmax.f32 %v1249, %v1637
        %v1817 = vmax.f32 %v1250, %v1639
        %v1818 = vmax.f32 %v1251, %v1641
        %v1819 = vmax.f32 %v1252, %v1643
        %v1820 = vmax.f32 %v1253, %v1645
        %v1821 = vmax.f32 %v1254, %v1647
        %v1822 = vmax.f32 %v1255, %v1649
        %v1823 = vmax.f32 %v1256, %v1651
        %v1824 = vmax.f32 %v1257, %v1653
        %v1825 = vmax.f32 %v1258, %v1655
        %v1826 = vmax.f32 %v1259, %v1657
        %v1827 = vmax.f32 %v1260, %v1659
        %v1828 = vmax.f32 %v1261, %v1661
        %v1829 = vmax.f32 %v1262, %v1663
        %v1830 = vmax.f32 %v1263, %v1665
        %v1831 = vmax.f32 %v1264, %v1667
        %v1832 = vmax.f32 %v1265, %v1669
        %v1833 = vmax.f32 %v1266, %v1671
        %v1834 = vmax.f32 %v1267, %v1673
        %v1835 = vmax.f32 %v1268, %v1675
        %v1836 = vmax.f32 %v1756, %v1757
        %v1837 = vmax.f32 %v1758, %v1759
        %v1838 = vmax.f32 %v1760, %v1761
        %v1839 = vmax.f32 %v1762, %v1763
        %v1840 = vmax.f32 %v1764, %v1765
        %v1841 = vmax.f32 %v1766, %v1767
        %v1842 = vmax.f32 %v1768, %v1769
        %v1843 = vmax.f32 %v1770, %v1771
        %v1844 = vmax.f32 %v1772, %v1773
        %v1845 = vmax.f32 %v1774, %v1775
        %v1846 = vmax.f32 %v1776, %v1777
        %v1847 = vmax.f32 %v1778, %v1779
        %v1848 = vmax.f32 %v1780, %v1781
        %v1849 = vmax.f32 %v1782, %v1783
        %v1850 = vmax.f32 %v1784, %v1785
        %v1851 = vmax.f32 %v1786, %v1787
        %v1852 = vmax.f32 %v1788, %v1789
        %v1853 = vmax.f32 %v1790, %v1791
        %v1854 = vmax.f32 %v1792, %v1793
        %v1855 = vmax.f32 %v1794, %v1795
        %v1856 = vmax.f32 %v1796, %v1797
        %v1857 = vmax.f32 %v1798, %v1799
        %v1858 = vmax.f32 %v1800, %v1801
        %v1859 = vmax.f32 %v1802, %v1803
        %v1860 = vmax.f32 %v1804, %v1805
        %v1861 = vmax.f32 %v1806, %v1807
        %v1862 = vmax.f32 %v1808, %v1809
        %v1863 = vmax.f32 %v1810, %v1811
        %v1864 = vmax.f32 %v1812, %v1813
        %v1865 = vmax.f32 %v1814, %v1815
        %v1866 = vmax.f32 %v1816, %v1817
        %v1867 = vmax.f32 %v1818, %v1819
        %v1868 = vmax.f32 %v1820, %v1821
        %v1869 = vmax.f32 %v1822, %v1823
        %v1870 = vmax.f32 %v1824, %v1825
        %v1871 = vmax.f32 %v1826, %v1827
        %v1872 = vmax.f32 %v1828, %v1829
        %v1873 = vmax.f32 %v1830, %v1831
        %v1874 = vmax.f32 %v1832, %v1833
        %v1875 = vmax.f32 %v1834, %v1835
        %v1876 = vlaneseq
        %v1877 = vshrl.u32 %v1876, 7
        %v1878 = vadd.s32 %v1877, 8
        %v1879 = vadd.s32 %v1877, 16
        %v1880 = vadd.s32 %v1877, 24
        %v1881 = vadd.s32 %v1877, 32
        %v1882 = vadd.s32 %v1877, 40
        %v1883 = vadd.s32 %v1877, 48
        %v1884 = vadd.s32 %v1877, 56
        %v1885 = vadd.s32 %v1877, 64
        %v1886 = vadd.s32 %v1877, 72
        %v1887 = vadd.s32 %v1877, 80
        %v1888 = vadd.s32 %v1877, 88
        %v1889 = vadd.s32 %v1877, 96
        %v1890 = vadd.s32 %v1877, 104
        %v1891 = vadd.s32 %v1877, 112
        %v1892 = vadd.s32 %v1877, 120
        %v1893 = vadd.s32 %v1877, 128
        %v1894 = vadd.s32 %v1877, 136
        %v1895 = vadd.s32 %v1877, 144
        %v1896 = vadd.s32 %v1877, 152
        %v1897 = vadd.s32 %v1877, 160
        %v1898 = vadd.s32 %v1877, 168
        %v1899 = vadd.s32 %v1877, 176
        %v1900 = vadd.s32 %v1877, 184
        %v1901 = vadd.s32 %v1877, 192
        %v1902 = vadd.s32 %v1877, 200
        %v1903 = vadd.s32 %v1877, 208
        %v1904 = vadd.s32 %v1877, 216
        %v1905 = vadd.s32 %v1877, 224
        %v1906 = vadd.s32 %v1877, 232
        %v1907 = vadd.s32 %v1877, 240
        %v1908 = vadd.s32 %v1877, 248
        %v1909 = vadd.s32 %v1877, 256
        %v1910 = vadd.s32 %v1877, 264
        %v1911 = vadd.s32 %v1877, 272
        %v1912 = vadd.s32 %v1877, 280
        %v1913 = vadd.s32 %v1877, 288
        %v1914 = vadd.s32 %v1877, 296
        %v1915 = vadd.s32 %v1877, 304
        %v1916 = vadd.s32 %v1877, 312
        %vm1917 = vcmp.lt.s32.totalorder %v1877, 0
        %v1918 = vsub.s32 0, %v1877
        %v1919 = vsel %vm1917, %v1918, %v1877
        %v1920 = vmul.u32.u64.compose %v1919, 3435973837
        %v1921 = vextract.low.u32 %v1920
        %v1922 = vextract.high.u32 %v1920
        %v1923 = vshrl.u32 %v1922, 3
        %v1924 = vmul.u32 %v1923, 10
        %v1925 = vsub.s32 %v1919, %v1924
        %v1926 = vsub.s32 0, %v1925
        %v1927 = vsel %vm1917, %v1926, %v1925
        %vm1928 = vcmp.lt.s32.totalorder %v1878, 0
        %v1929 = vsub.s32 0, %v1878
        %v1930 = vsel %vm1928, %v1929, %v1878
        %v1931 = vmul.u32.u64.compose %v1930, 3435973837
        %v1932 = vextract.low.u32 %v1931
        %v1933 = vextract.high.u32 %v1931
        %v1934 = vshrl.u32 %v1933, 3
        %v1935 = vmul.u32 %v1934, 10
        %v1936 = vsub.s32 %v1930, %v1935
        %v1937 = vsub.s32 0, %v1936
        %v1938 = vsel %vm1928, %v1937, %v1936
        %vm1939 = vcmp.lt.s32.totalorder %v1879, 0
        %v1940 = vsub.s32 0, %v1879
        %v1941 = vsel %vm1939, %v1940, %v1879
        %v1942 = vmul.u32.u64.compose %v1941, 3435973837
        %v1943 = vextract.low.u32 %v1942
        %v1944 = vextract.high.u32 %v1942
        %v1945 = vshrl.u32 %v1944, 3
        %v1946 = vmul.u32 %v1945, 10
        %v1947 = vsub.s32 %v1941, %v1946
        %v1948 = vsub.s32 0, %v1947
        %v1949 = vsel %vm1939, %v1948, %v1947
        %vm1950 = vcmp.lt.s32.totalorder %v1880, 0
        %v1951 = vsub.s32 0, %v1880
        %v1952 = vsel %vm1950, %v1951, %v1880
        %v1953 = vmul.u32.u64.compose %v1952, 3435973837
        %v1954 = vextract.low.u32 %v1953
        %v1955 = vextract.high.u32 %v1953
        %v1956 = vshrl.u32 %v1955, 3
        %v1957 = vmul.u32 %v1956, 10
        %v1958 = vsub.s32 %v1952, %v1957
        %v1959 = vsub.s32 0, %v1958
        %v1960 = vsel %vm1950, %v1959, %v1958
        %vm1961 = vcmp.lt.s32.totalorder %v1881, 0
        %v1962 = vsub.s32 0, %v1881
        %v1963 = vsel %vm1961, %v1962, %v1881
        %v1964 = vmul.u32.u64.compose %v1963, 3435973837
        %v1965 = vextract.low.u32 %v1964
        %v1966 = vextract.high.u32 %v1964
        %v1967 = vshrl.u32 %v1966, 3
        %v1968 = vmul.u32 %v1967, 10
        %v1969 = vsub.s32 %v1963, %v1968
        %v1970 = vsub.s32 0, %v1969
        %v1971 = vsel %vm1961, %v1970, %v1969
        %vm1972 = vcmp.lt.s32.totalorder %v1882, 0
        %v1973 = vsub.s32 0, %v1882
        %v1974 = vsel %vm1972, %v1973, %v1882
        %v1975 = vmul.u32.u64.compose %v1974, 3435973837
        %v1976 = vextract.low.u32 %v1975
        %v1977 = vextract.high.u32 %v1975
        %v1978 = vshrl.u32 %v1977, 3
        %v1979 = vmul.u32 %v1978, 10
        %v1980 = vsub.s32 %v1974, %v1979
        %v1981 = vsub.s32 0, %v1980
        %v1982 = vsel %vm1972, %v1981, %v1980
        %vm1983 = vcmp.lt.s32.totalorder %v1883, 0
        %v1984 = vsub.s32 0, %v1883
        %v1985 = vsel %vm1983, %v1984, %v1883
        %v1986 = vmul.u32.u64.compose %v1985, 3435973837
        %v1987 = vextract.low.u32 %v1986
        %v1988 = vextract.high.u32 %v1986
        %v1989 = vshrl.u32 %v1988, 3
        %v1990 = vmul.u32 %v1989, 10
        %v1991 = vsub.s32 %v1985, %v1990
        %v1992 = vsub.s32 0, %v1991
        %v1993 = vsel %vm1983, %v1992, %v1991
        %vm1994 = vcmp.lt.s32.totalorder %v1884, 0
        %v1995 = vsub.s32 0, %v1884
        %v1996 = vsel %vm1994, %v1995, %v1884
        %v1997 = vmul.u32.u64.compose %v1996, 3435973837
        %v1998 = vextract.low.u32 %v1997
        %v1999 = vextract.high.u32 %v1997
        %v2000 = vshrl.u32 %v1999, 3
        %v2001 = vmul.u32 %v2000, 10
        %v2002 = vsub.s32 %v1996, %v2001
        %v2003 = vsub.s32 0, %v2002
        %v2004 = vsel %vm1994, %v2003, %v2002
        %vm2005 = vcmp.lt.s32.totalorder %v1885, 0
        %v2006 = vsub.s32 0, %v1885
        %v2007 = vsel %vm2005, %v2006, %v1885
        %v2008 = vmul.u32.u64.compose %v2007, 3435973837
        %v2009 = vextract.low.u32 %v2008
        %v2010 = vextract.high.u32 %v2008
        %v2011 = vshrl.u32 %v2010, 3
        %v2012 = vmul.u32 %v2011, 10
        %v2013 = vsub.s32 %v2007, %v2012
        %v2014 = vsub.s32 0, %v2013
        %v2015 = vsel %vm2005, %v2014, %v2013
        %vm2016 = vcmp.lt.s32.totalorder %v1886, 0
        %v2017 = vsub.s32 0, %v1886
        %v2018 = vsel %vm2016, %v2017, %v1886
        %v2019 = vmul.u32.u64.compose %v2018, 3435973837
        %v2020 = vextract.low.u32 %v2019
        %v2021 = vextract.high.u32 %v2019
        %v2022 = vshrl.u32 %v2021, 3
        %v2023 = vmul.u32 %v2022, 10
        %v2024 = vsub.s32 %v2018, %v2023
        %v2025 = vsub.s32 0, %v2024
        %v2026 = vsel %vm2016, %v2025, %v2024
        %vm2027 = vcmp.lt.s32.totalorder %v1887, 0
        %v2028 = vsub.s32 0, %v1887
        %v2029 = vsel %vm2027, %v2028, %v1887
        %v2030 = vmul.u32.u64.compose %v2029, 3435973837
        %v2031 = vextract.low.u32 %v2030
        %v2032 = vextract.high.u32 %v2030
        %v2033 = vshrl.u32 %v2032, 3
        %v2034 = vmul.u32 %v2033, 10
        %v2035 = vsub.s32 %v2029, %v2034
        %v2036 = vsub.s32 0, %v2035
        %v2037 = vsel %vm2027, %v2036, %v2035
        %vm2038 = vcmp.lt.s32.totalorder %v1888, 0
        %v2039 = vsub.s32 0, %v1888
        %v2040 = vsel %vm2038, %v2039, %v1888
        %v2041 = vmul.u32.u64.compose %v2040, 3435973837
        %v2042 = vextract.low.u32 %v2041
        %v2043 = vextract.high.u32 %v2041
        %v2044 = vshrl.u32 %v2043, 3
        %v2045 = vmul.u32 %v2044, 10
        %v2046 = vsub.s32 %v2040, %v2045
        %v2047 = vsub.s32 0, %v2046
        %v2048 = vsel %vm2038, %v2047, %v2046
        %vm2049 = vcmp.lt.s32.totalorder %v1889, 0
        %v2050 = vsub.s32 0, %v1889
        %v2051 = vsel %vm2049, %v2050, %v1889
        %v2052 = vmul.u32.u64.compose %v2051, 3435973837
        %v2053 = vextract.low.u32 %v2052
        %v2054 = vextract.high.u32 %v2052
        %v2055 = vshrl.u32 %v2054, 3
        %v2056 = vmul.u32 %v2055, 10
        %v2057 = vsub.s32 %v2051, %v2056
        %v2058 = vsub.s32 0, %v2057
        %v2059 = vsel %vm2049, %v2058, %v2057
        %vm2060 = vcmp.lt.s32.totalorder %v1890, 0
        %v2061 = vsub.s32 0, %v1890
        %v2062 = vsel %vm2060, %v2061, %v1890
        %v2063 = vmul.u32.u64.compose %v2062, 3435973837
        %v2064 = vextract.low.u32 %v2063
        %v2065 = vextract.high.u32 %v2063
        %v2066 = vshrl.u32 %v2065, 3
        %v2067 = vmul.u32 %v2066, 10
        %v2068 = vsub.s32 %v2062, %v2067
        %v2069 = vsub.s32 0, %v2068
        %v2070 = vsel %vm2060, %v2069, %v2068
        %vm2071 = vcmp.lt.s32.totalorder %v1891, 0
        %v2072 = vsub.s32 0, %v1891
        %v2073 = vsel %vm2071, %v2072, %v1891
        %v2074 = vmul.u32.u64.compose %v2073, 3435973837
        %v2075 = vextract.low.u32 %v2074
        %v2076 = vextract.high.u32 %v2074
        %v2077 = vshrl.u32 %v2076, 3
        %v2078 = vmul.u32 %v2077, 10
        %v2079 = vsub.s32 %v2073, %v2078
        %v2080 = vsub.s32 0, %v2079
        %v2081 = vsel %vm2071, %v2080, %v2079
        %vm2082 = vcmp.lt.s32.totalorder %v1892, 0
        %v2083 = vsub.s32 0, %v1892
        %v2084 = vsel %vm2082, %v2083, %v1892
        %v2085 = vmul.u32.u64.compose %v2084, 3435973837
        %v2086 = vextract.low.u32 %v2085
        %v2087 = vextract.high.u32 %v2085
        %v2088 = vshrl.u32 %v2087, 3
        %v2089 = vmul.u32 %v2088, 10
        %v2090 = vsub.s32 %v2084, %v2089
        %v2091 = vsub.s32 0, %v2090
        %v2092 = vsel %vm2082, %v2091, %v2090
        %vm2093 = vcmp.lt.s32.totalorder %v1893, 0
        %v2094 = vsub.s32 0, %v1893
        %v2095 = vsel %vm2093, %v2094, %v1893
        %v2096 = vmul.u32.u64.compose %v2095, 3435973837
        %v2097 = vextract.low.u32 %v2096
        %v2098 = vextract.high.u32 %v2096
        %v2099 = vshrl.u32 %v2098, 3
        %v2100 = vmul.u32 %v2099, 10
        %v2101 = vsub.s32 %v2095, %v2100
        %v2102 = vsub.s32 0, %v2101
        %v2103 = vsel %vm2093, %v2102, %v2101
        %vm2104 = vcmp.lt.s32.totalorder %v1894, 0
        %v2105 = vsub.s32 0, %v1894
        %v2106 = vsel %vm2104, %v2105, %v1894
        %v2107 = vmul.u32.u64.compose %v2106, 3435973837
        %v2108 = vextract.low.u32 %v2107
        %v2109 = vextract.high.u32 %v2107
        %v2110 = vshrl.u32 %v2109, 3
        %v2111 = vmul.u32 %v2110, 10
        %v2112 = vsub.s32 %v2106, %v2111
        %v2113 = vsub.s32 0, %v2112
        %v2114 = vsel %vm2104, %v2113, %v2112
        %vm2115 = vcmp.lt.s32.totalorder %v1895, 0
        %v2116 = vsub.s32 0, %v1895
        %v2117 = vsel %vm2115, %v2116, %v1895
        %v2118 = vmul.u32.u64.compose %v2117, 3435973837
        %v2119 = vextract.low.u32 %v2118
        %v2120 = vextract.high.u32 %v2118
        %v2121 = vshrl.u32 %v2120, 3
        %v2122 = vmul.u32 %v2121, 10
        %v2123 = vsub.s32 %v2117, %v2122
        %v2124 = vsub.s32 0, %v2123
        %v2125 = vsel %vm2115, %v2124, %v2123
        %vm2126 = vcmp.lt.s32.totalorder %v1896, 0
        %v2127 = vsub.s32 0, %v1896
        %v2128 = vsel %vm2126, %v2127, %v1896
        %v2129 = vmul.u32.u64.compose %v2128, 3435973837
        %v2130 = vextract.low.u32 %v2129
        %v2131 = vextract.high.u32 %v2129
        %v2132 = vshrl.u32 %v2131, 3
        %v2133 = vmul.u32 %v2132, 10
        %v2134 = vsub.s32 %v2128, %v2133
        %v2135 = vsub.s32 0, %v2134
        %v2136 = vsel %vm2126, %v2135, %v2134
        %vm2137 = vcmp.lt.s32.totalorder %v1897, 0
        %v2138 = vsub.s32 0, %v1897
        %v2139 = vsel %vm2137, %v2138, %v1897
        %v2140 = vmul.u32.u64.compose %v2139, 3435973837
        %v2141 = vextract.low.u32 %v2140
        %v2142 = vextract.high.u32 %v2140
        %v2143 = vshrl.u32 %v2142, 3
        %v2144 = vmul.u32 %v2143, 10
        %v2145 = vsub.s32 %v2139, %v2144
        %v2146 = vsub.s32 0, %v2145
        %v2147 = vsel %vm2137, %v2146, %v2145
        %vm2148 = vcmp.lt.s32.totalorder %v1898, 0
        %v2149 = vsub.s32 0, %v1898
        %v2150 = vsel %vm2148, %v2149, %v1898
        %v2151 = vmul.u32.u64.compose %v2150, 3435973837
        %v2152 = vextract.low.u32 %v2151
        %v2153 = vextract.high.u32 %v2151
        %v2154 = vshrl.u32 %v2153, 3
        %v2155 = vmul.u32 %v2154, 10
        %v2156 = vsub.s32 %v2150, %v2155
        %v2157 = vsub.s32 0, %v2156
        %v2158 = vsel %vm2148, %v2157, %v2156
        %vm2159 = vcmp.lt.s32.totalorder %v1899, 0
        %v2160 = vsub.s32 0, %v1899
        %v2161 = vsel %vm2159, %v2160, %v1899
        %v2162 = vmul.u32.u64.compose %v2161, 3435973837
        %v2163 = vextract.low.u32 %v2162
        %v2164 = vextract.high.u32 %v2162
        %v2165 = vshrl.u32 %v2164, 3
        %v2166 = vmul.u32 %v2165, 10
        %v2167 = vsub.s32 %v2161, %v2166
        %v2168 = vsub.s32 0, %v2167
        %v2169 = vsel %vm2159, %v2168, %v2167
        %vm2170 = vcmp.lt.s32.totalorder %v1900, 0
        %v2171 = vsub.s32 0, %v1900
        %v2172 = vsel %vm2170, %v2171, %v1900
        %v2173 = vmul.u32.u64.compose %v2172, 3435973837
        %v2174 = vextract.low.u32 %v2173
        %v2175 = vextract.high.u32 %v2173
        %v2176 = vshrl.u32 %v2175, 3
        %v2177 = vmul.u32 %v2176, 10
        %v2178 = vsub.s32 %v2172, %v2177
        %v2179 = vsub.s32 0, %v2178
        %v2180 = vsel %vm2170, %v2179, %v2178
        %vm2181 = vcmp.lt.s32.totalorder %v1901, 0
        %v2182 = vsub.s32 0, %v1901
        %v2183 = vsel %vm2181, %v2182, %v1901
        %v2184 = vmul.u32.u64.compose %v2183, 3435973837
        %v2185 = vextract.low.u32 %v2184
        %v2186 = vextract.high.u32 %v2184
        %v2187 = vshrl.u32 %v2186, 3
        %v2188 = vmul.u32 %v2187, 10
        %v2189 = vsub.s32 %v2183, %v2188
        %v2190 = vsub.s32 0, %v2189
        %v2191 = vsel %vm2181, %v2190, %v2189
        %vm2192 = vcmp.lt.s32.totalorder %v1902, 0
        %v2193 = vsub.s32 0, %v1902
        %v2194 = vsel %vm2192, %v2193, %v1902
        %v2195 = vmul.u32.u64.compose %v2194, 3435973837
        %v2196 = vextract.low.u32 %v2195
        %v2197 = vextract.high.u32 %v2195
        %v2198 = vshrl.u32 %v2197, 3
        %v2199 = vmul.u32 %v2198, 10
        %v2200 = vsub.s32 %v2194, %v2199
        %v2201 = vsub.s32 0, %v2200
        %v2202 = vsel %vm2192, %v2201, %v2200
        %vm2203 = vcmp.lt.s32.totalorder %v1903, 0
        %v2204 = vsub.s32 0, %v1903
        %v2205 = vsel %vm2203, %v2204, %v1903
        %v2206 = vmul.u32.u64.compose %v2205, 3435973837
        %v2207 = vextract.low.u32 %v2206
        %v2208 = vextract.high.u32 %v2206
        %v2209 = vshrl.u32 %v2208, 3
        %v2210 = vmul.u32 %v2209, 10
        %v2211 = vsub.s32 %v2205, %v2210
        %v2212 = vsub.s32 0, %v2211
        %v2213 = vsel %vm2203, %v2212, %v2211
        %vm2214 = vcmp.lt.s32.totalorder %v1904, 0
        %v2215 = vsub.s32 0, %v1904
        %v2216 = vsel %vm2214, %v2215, %v1904
        %v2217 = vmul.u32.u64.compose %v2216, 3435973837
        %v2218 = vextract.low.u32 %v2217
        %v2219 = vextract.high.u32 %v2217
        %v2220 = vshrl.u32 %v2219, 3
        %v2221 = vmul.u32 %v2220, 10
        %v2222 = vsub.s32 %v2216, %v2221
        %v2223 = vsub.s32 0, %v2222
        %v2224 = vsel %vm2214, %v2223, %v2222
        %vm2225 = vcmp.lt.s32.totalorder %v1905, 0
        %v2226 = vsub.s32 0, %v1905
        %v2227 = vsel %vm2225, %v2226, %v1905
        %v2228 = vmul.u32.u64.compose %v2227, 3435973837
        %v2229 = vextract.low.u32 %v2228
        %v2230 = vextract.high.u32 %v2228
        %v2231 = vshrl.u32 %v2230, 3
        %v2232 = vmul.u32 %v2231, 10
        %v2233 = vsub.s32 %v2227, %v2232
        %v2234 = vsub.s32 0, %v2233
        %v2235 = vsel %vm2225, %v2234, %v2233
        %vm2236 = vcmp.lt.s32.totalorder %v1906, 0
        %v2237 = vsub.s32 0, %v1906
        %v2238 = vsel %vm2236, %v2237, %v1906
        %v2239 = vmul.u32.u64.compose %v2238, 3435973837
        %v2240 = vextract.low.u32 %v2239
        %v2241 = vextract.high.u32 %v2239
        %v2242 = vshrl.u32 %v2241, 3
        %v2243 = vmul.u32 %v2242, 10
        %v2244 = vsub.s32 %v2238, %v2243
        %v2245 = vsub.s32 0, %v2244
        %v2246 = vsel %vm2236, %v2245, %v2244
        %vm2247 = vcmp.lt.s32.totalorder %v1907, 0
        %v2248 = vsub.s32 0, %v1907
        %v2249 = vsel %vm2247, %v2248, %v1907
        %v2250 = vmul.u32.u64.compose %v2249, 3435973837
        %v2251 = vextract.low.u32 %v2250
        %v2252 = vextract.high.u32 %v2250
        %v2253 = vshrl.u32 %v2252, 3
        %v2254 = vmul.u32 %v2253, 10
        %v2255 = vsub.s32 %v2249, %v2254
        %v2256 = vsub.s32 0, %v2255
        %v2257 = vsel %vm2247, %v2256, %v2255
        %vm2258 = vcmp.lt.s32.totalorder %v1908, 0
        %v2259 = vsub.s32 0, %v1908
        %v2260 = vsel %vm2258, %v2259, %v1908
        %v2261 = vmul.u32.u64.compose %v2260, 3435973837
        %v2262 = vextract.low.u32 %v2261
        %v2263 = vextract.high.u32 %v2261
        %v2264 = vshrl.u32 %v2263, 3
        %v2265 = vmul.u32 %v2264, 10
        %v2266 = vsub.s32 %v2260, %v2265
        %v2267 = vsub.s32 0, %v2266
        %v2268 = vsel %vm2258, %v2267, %v2266
        %vm2269 = vcmp.lt.s32.totalorder %v1909, 0
        %v2270 = vsub.s32 0, %v1909
        %v2271 = vsel %vm2269, %v2270, %v1909
        %v2272 = vmul.u32.u64.compose %v2271, 3435973837
        %v2273 = vextract.low.u32 %v2272
        %v2274 = vextract.high.u32 %v2272
        %v2275 = vshrl.u32 %v2274, 3
        %v2276 = vmul.u32 %v2275, 10
        %v2277 = vsub.s32 %v2271, %v2276
        %v2278 = vsub.s32 0, %v2277
        %v2279 = vsel %vm2269, %v2278, %v2277
        %vm2280 = vcmp.lt.s32.totalorder %v1910, 0
        %v2281 = vsub.s32 0, %v1910
        %v2282 = vsel %vm2280, %v2281, %v1910
        %v2283 = vmul.u32.u64.compose %v2282, 3435973837
        %v2284 = vextract.low.u32 %v2283
        %v2285 = vextract.high.u32 %v2283
        %v2286 = vshrl.u32 %v2285, 3
        %v2287 = vmul.u32 %v2286, 10
        %v2288 = vsub.s32 %v2282, %v2287
        %v2289 = vsub.s32 0, %v2288
        %v2290 = vsel %vm2280, %v2289, %v2288
        %vm2291 = vcmp.lt.s32.totalorder %v1911, 0
        %v2292 = vsub.s32 0, %v1911
        %v2293 = vsel %vm2291, %v2292, %v1911
        %v2294 = vmul.u32.u64.compose %v2293, 3435973837
        %v2295 = vextract.low.u32 %v2294
        %v2296 = vextract.high.u32 %v2294
        %v2297 = vshrl.u32 %v2296, 3
        %v2298 = vmul.u32 %v2297, 10
        %v2299 = vsub.s32 %v2293, %v2298
        %v2300 = vsub.s32 0, %v2299
        %v2301 = vsel %vm2291, %v2300, %v2299
        %vm2302 = vcmp.lt.s32.totalorder %v1912, 0
        %v2303 = vsub.s32 0, %v1912
        %v2304 = vsel %vm2302, %v2303, %v1912
        %v2305 = vmul.u32.u64.compose %v2304, 3435973837
        %v2306 = vextract.low.u32 %v2305
        %v2307 = vextract.high.u32 %v2305
        %v2308 = vshrl.u32 %v2307, 3
        %v2309 = vmul.u32 %v2308, 10
        %v2310 = vsub.s32 %v2304, %v2309
        %v2311 = vsub.s32 0, %v2310
        %v2312 = vsel %vm2302, %v2311, %v2310
        %vm2313 = vcmp.lt.s32.totalorder %v1913, 0
        %v2314 = vsub.s32 0, %v1913
        %v2315 = vsel %vm2313, %v2314, %v1913
        %v2316 = vmul.u32.u64.compose %v2315, 3435973837
        %v2317 = vextract.low.u32 %v2316
        %v2318 = vextract.high.u32 %v2316
        %v2319 = vshrl.u32 %v2318, 3
        %v2320 = vmul.u32 %v2319, 10
        %v2321 = vsub.s32 %v2315, %v2320
        %v2322 = vsub.s32 0, %v2321
        %v2323 = vsel %vm2313, %v2322, %v2321
        %vm2324 = vcmp.lt.s32.totalorder %v1914, 0
        %v2325 = vsub.s32 0, %v1914
        %v2326 = vsel %vm2324, %v2325, %v1914
        %v2327 = vmul.u32.u64.compose %v2326, 3435973837
        %v2328 = vextract.low.u32 %v2327
        %v2329 = vextract.high.u32 %v2327
        %v2330 = vshrl.u32 %v2329, 3
        %v2331 = vmul.u32 %v2330, 10
        %v2332 = vsub.s32 %v2326, %v2331
        %v2333 = vsub.s32 0, %v2332
        %v2334 = vsel %vm2324, %v2333, %v2332
        %vm2335 = vcmp.lt.s32.totalorder %v1915, 0
        %v2336 = vsub.s32 0, %v1915
        %v2337 = vsel %vm2335, %v2336, %v1915
        %v2338 = vmul.u32.u64.compose %v2337, 3435973837
        %v2339 = vextract.low.u32 %v2338
        %v2340 = vextract.high.u32 %v2338
        %v2341 = vshrl.u32 %v2340, 3
        %v2342 = vmul.u32 %v2341, 10
        %v2343 = vsub.s32 %v2337, %v2342
        %v2344 = vsub.s32 0, %v2343
        %v2345 = vsel %vm2335, %v2344, %v2343
        %vm2346 = vcmp.lt.s32.totalorder %v1916, 0
        %v2347 = vsub.s32 0, %v1916
        %v2348 = vsel %vm2346, %v2347, %v1916
        %v2349 = vmul.u32.u64.compose %v2348, 3435973837
        %v2350 = vextract.low.u32 %v2349
        %v2351 = vextract.high.u32 %v2349
        %v2352 = vshrl.u32 %v2351, 3
        %v2353 = vmul.u32 %v2352, 10
        %v2354 = vsub.s32 %v2348, %v2353
        %v2355 = vsub.s32 0, %v2354
        %v2356 = vsel %vm2346, %v2355, %v2354
        %vm2357 = vcmp.ne.s32.totalorder %v1927, 0
        %vm2358 = vcmp.ne.s32.totalorder %v1938, 0
        %vm2359 = vcmp.ne.s32.totalorder %v1949, 0
        %vm2360 = vcmp.ne.s32.totalorder %v1960, 0
        %vm2361 = vcmp.ne.s32.totalorder %v1971, 0
        %vm2362 = vcmp.ne.s32.totalorder %v1982, 0
        %vm2363 = vcmp.ne.s32.totalorder %v1993, 0
        %vm2364 = vcmp.ne.s32.totalorder %v2004, 0
        %vm2365 = vcmp.ne.s32.totalorder %v2015, 0
        %vm2366 = vcmp.ne.s32.totalorder %v2026, 0
        %vm2367 = vcmp.ne.s32.totalorder %v2037, 0
        %vm2368 = vcmp.ne.s32.totalorder %v2048, 0
        %vm2369 = vcmp.ne.s32.totalorder %v2059, 0
        %vm2370 = vcmp.ne.s32.totalorder %v2070, 0
        %vm2371 = vcmp.ne.s32.totalorder %v2081, 0
        %vm2372 = vcmp.ne.s32.totalorder %v2092, 0
        %vm2373 = vcmp.ne.s32.totalorder %v2103, 0
        %vm2374 = vcmp.ne.s32.totalorder %v2114, 0
        %vm2375 = vcmp.ne.s32.totalorder %v2125, 0
        %vm2376 = vcmp.ne.s32.totalorder %v2136, 0
        %vm2377 = vcmp.ne.s32.totalorder %v2147, 0
        %vm2378 = vcmp.ne.s32.totalorder %v2158, 0
        %vm2379 = vcmp.ne.s32.totalorder %v2169, 0
        %vm2380 = vcmp.ne.s32.totalorder %v2180, 0
        %vm2381 = vcmp.ne.s32.totalorder %v2191, 0
        %vm2382 = vcmp.ne.s32.totalorder %v2202, 0
        %vm2383 = vcmp.ne.s32.totalorder %v2213, 0
        %vm2384 = vcmp.ne.s32.totalorder %v2224, 0
        %vm2385 = vcmp.ne.s32.totalorder %v2235, 0
        %vm2386 = vcmp.ne.s32.totalorder %v2246, 0
        %vm2387 = vcmp.ne.s32.totalorder %v2257, 0
        %vm2388 = vcmp.ne.s32.totalorder %v2268, 0
        %vm2389 = vcmp.ne.s32.totalorder %v2279, 0
        %vm2390 = vcmp.ne.s32.totalorder %v2290, 0
        %vm2391 = vcmp.ne.s32.totalorder %v2301, 0
        %vm2392 = vcmp.ne.s32.totalorder %v2312, 0
        %vm2393 = vcmp.ne.s32.totalorder %v2323, 0
        %vm2394 = vcmp.ne.s32.totalorder %v2334, 0
        %vm2395 = vcmp.ne.s32.totalorder %v2345, 0
        %vm2396 = vcmp.ne.s32.totalorder %v2356, 0
        %vm2397 = vcmp.lt.s32.totalorder %v1927, 0
        %vm2398 = vcmp.lt.s32.totalorder %v1938, 0
        %vm2399 = vcmp.lt.s32.totalorder %v1949, 0
        %vm2400 = vcmp.lt.s32.totalorder %v1960, 0
        %vm2401 = vcmp.lt.s32.totalorder %v1971, 0
        %vm2402 = vcmp.lt.s32.totalorder %v1982, 0
        %vm2403 = vcmp.lt.s32.totalorder %v1993, 0
        %vm2404 = vcmp.lt.s32.totalorder %v2004, 0
        %vm2405 = vcmp.lt.s32.totalorder %v2015, 0
        %vm2406 = vcmp.lt.s32.totalorder %v2026, 0
        %vm2407 = vcmp.lt.s32.totalorder %v2037, 0
        %vm2408 = vcmp.lt.s32.totalorder %v2048, 0
        %vm2409 = vcmp.lt.s32.totalorder %v2059, 0
        %vm2410 = vcmp.lt.s32.totalorder %v2070, 0
        %vm2411 = vcmp.lt.s32.totalorder %v2081, 0
        %vm2412 = vcmp.lt.s32.totalorder %v2092, 0
        %vm2413 = vcmp.lt.s32.totalorder %v2103, 0
        %vm2414 = vcmp.lt.s32.totalorder %v2114, 0
        %vm2415 = vcmp.lt.s32.totalorder %v2125, 0
        %vm2416 = vcmp.lt.s32.totalorder %v2136, 0
        %vm2417 = vcmp.lt.s32.totalorder %v2147, 0
        %vm2418 = vcmp.lt.s32.totalorder %v2158, 0
        %vm2419 = vcmp.lt.s32.totalorder %v2169, 0
        %vm2420 = vcmp.lt.s32.totalorder %v2180, 0
        %vm2421 = vcmp.lt.s32.totalorder %v2191, 0
        %vm2422 = vcmp.lt.s32.totalorder %v2202, 0
        %vm2423 = vcmp.lt.s32.totalorder %v2213, 0
        %vm2424 = vcmp.lt.s32.totalorder %v2224, 0
        %vm2425 = vcmp.lt.s32.totalorder %v2235, 0
        %vm2426 = vcmp.lt.s32.totalorder %v2246, 0
        %vm2427 = vcmp.lt.s32.totalorder %v2257, 0
        %vm2428 = vcmp.lt.s32.totalorder %v2268, 0
        %vm2429 = vcmp.lt.s32.totalorder %v2279, 0
        %vm2430 = vcmp.lt.s32.totalorder %v2290, 0
        %vm2431 = vcmp.lt.s32.totalorder %v2301, 0
        %vm2432 = vcmp.lt.s32.totalorder %v2312, 0
        %vm2433 = vcmp.lt.s32.totalorder %v2323, 0
        %vm2434 = vcmp.lt.s32.totalorder %v2334, 0
        %vm2435 = vcmp.lt.s32.totalorder %v2345, 0
        %vm2436 = vcmp.lt.s32.totalorder %v2356, 0
        %vm2437 = vmand %vm2397, %vm2357
        %vm2438 = vmand %vm2398, %vm2358
        %vm2439 = vmand %vm2399, %vm2359
        %vm2440 = vmand %vm2400, %vm2360
        %vm2441 = vmand %vm2401, %vm2361
        %vm2442 = vmand %vm2402, %vm2362
        %vm2443 = vmand %vm2403, %vm2363
        %vm2444 = vmand %vm2404, %vm2364
        %vm2445 = vmand %vm2405, %vm2365
        %vm2446 = vmand %vm2406, %vm2366
        %vm2447 = vmand %vm2407, %vm2367
        %vm2448 = vmand %vm2408, %vm2368
        %vm2449 = vmand %vm2409, %vm2369
        %vm2450 = vmand %vm2410, %vm2370
        %vm2451 = vmand %vm2411, %vm2371
        %vm2452 = vmand %vm2412, %vm2372
        %vm2453 = vmand %vm2413, %vm2373
        %vm2454 = vmand %vm2414, %vm2374
        %vm2455 = vmand %vm2415, %vm2375
        %vm2456 = vmand %vm2416, %vm2376
        %vm2457 = vmand %vm2417, %vm2377
        %vm2458 = vmand %vm2418, %vm2378
        %vm2459 = vmand %vm2419, %vm2379
        %vm2460 = vmand %vm2420, %vm2380
        %vm2461 = vmand %vm2421, %vm2381
        %vm2462 = vmand %vm2422, %vm2382
        %vm2463 = vmand %vm2423, %vm2383
        %vm2464 = vmand %vm2424, %vm2384
        %vm2465 = vmand %vm2425, %vm2385
        %vm2466 = vmand %vm2426, %vm2386
        %vm2467 = vmand %vm2427, %vm2387
        %vm2468 = vmand %vm2428, %vm2388
        %vm2469 = vmand %vm2429, %vm2389
        %vm2470 = vmand %vm2430, %vm2390
        %vm2471 = vmand %vm2431, %vm2391
        %vm2472 = vmand %vm2432, %vm2392
        %vm2473 = vmand %vm2433, %vm2393
        %vm2474 = vmand %vm2434, %vm2394
        %vm2475 = vmand %vm2435, %vm2395
        %vm2476 = vmand %vm2436, %vm2396
        %v2477 = vadd.s32 %v1927, 10
        %v2478 = vadd.s32 %v1938, 10
        %v2479 = vadd.s32 %v1949, 10
        %v2480 = vadd.s32 %v1960, 10
        %v2481 = vadd.s32 %v1971, 10
        %v2482 = vadd.s32 %v1982, 10
        %v2483 = vadd.s32 %v1993, 10
        %v2484 = vadd.s32 %v2004, 10
        %v2485 = vadd.s32 %v2015, 10
        %v2486 = vadd.s32 %v2026, 10
        %v2487 = vadd.s32 %v2037, 10
        %v2488 = vadd.s32 %v2048, 10
        %v2489 = vadd.s32 %v2059, 10
        %v2490 = vadd.s32 %v2070, 10
        %v2491 = vadd.s32 %v2081, 10
        %v2492 = vadd.s32 %v2092, 10
        %v2493 = vadd.s32 %v2103, 10
        %v2494 = vadd.s32 %v2114, 10
        %v2495 = vadd.s32 %v2125, 10
        %v2496 = vadd.s32 %v2136, 10
        %v2497 = vadd.s32 %v2147, 10
        %v2498 = vadd.s32 %v2158, 10
        %v2499 = vadd.s32 %v2169, 10
        %v2500 = vadd.s32 %v2180, 10
        %v2501 = vadd.s32 %v2191, 10
        %v2502 = vadd.s32 %v2202, 10
        %v2503 = vadd.s32 %v2213, 10
        %v2504 = vadd.s32 %v2224, 10
        %v2505 = vadd.s32 %v2235, 10
        %v2506 = vadd.s32 %v2246, 10
        %v2507 = vadd.s32 %v2257, 10
        %v2508 = vadd.s32 %v2268, 10
        %v2509 = vadd.s32 %v2279, 10
        %v2510 = vadd.s32 %v2290, 10
        %v2511 = vadd.s32 %v2301, 10
        %v2512 = vadd.s32 %v2312, 10
        %v2513 = vadd.s32 %v2323, 10
        %v2514 = vadd.s32 %v2334, 10
        %v2515 = vadd.s32 %v2345, 10
        %v2516 = vadd.s32 %v2356, 10
        %v2517 = vsel %vm2437, %v2477, %v1927
        %v2518 = vsel %vm2438, %v2478, %v1938
        %v2519 = vsel %vm2439, %v2479, %v1949
        %v2520 = vsel %vm2440, %v2480, %v1960
        %v2521 = vsel %vm2441, %v2481, %v1971
        %v2522 = vsel %vm2442, %v2482, %v1982
        %v2523 = vsel %vm2443, %v2483, %v1993
        %v2524 = vsel %vm2444, %v2484, %v2004
        %v2525 = vsel %vm2445, %v2485, %v2015
        %v2526 = vsel %vm2446, %v2486, %v2026
        %v2527 = vsel %vm2447, %v2487, %v2037
        %v2528 = vsel %vm2448, %v2488, %v2048
        %v2529 = vsel %vm2449, %v2489, %v2059
        %v2530 = vsel %vm2450, %v2490, %v2070
        %v2531 = vsel %vm2451, %v2491, %v2081
        %v2532 = vsel %vm2452, %v2492, %v2092
        %v2533 = vsel %vm2453, %v2493, %v2103
        %v2534 = vsel %vm2454, %v2494, %v2114
        %v2535 = vsel %vm2455, %v2495, %v2125
        %v2536 = vsel %vm2456, %v2496, %v2136
        %v2537 = vsel %vm2457, %v2497, %v2147
        %v2538 = vsel %vm2458, %v2498, %v2158
        %v2539 = vsel %vm2459, %v2499, %v2169
        %v2540 = vsel %vm2460, %v2500, %v2180
        %v2541 = vsel %vm2461, %v2501, %v2191
        %v2542 = vsel %vm2462, %v2502, %v2202
        %v2543 = vsel %vm2463, %v2503, %v2213
        %v2544 = vsel %vm2464, %v2504, %v2224
        %v2545 = vsel %vm2465, %v2505, %v2235
        %v2546 = vsel %vm2466, %v2506, %v2246
        %v2547 = vsel %vm2467, %v2507, %v2257
        %v2548 = vsel %vm2468, %v2508, %v2268
        %v2549 = vsel %vm2469, %v2509, %v2279
        %v2550 = vsel %vm2470, %v2510, %v2290
        %v2551 = vsel %vm2471, %v2511, %v2301
        %v2552 = vsel %vm2472, %v2512, %v2312
        %v2553 = vsel %vm2473, %v2513, %v2323
        %v2554 = vsel %vm2474, %v2514, %v2334
        %v2555 = vsel %vm2475, %v2515, %v2345
        %v2556 = vsel %vm2476, %v2516, %v2356
        %vm2557 = vcmp.lt.s32.totalorder %v2517, 0
        %v2558 = vsub.s32 0, %v2517
        %v2559 = vsel %vm2557, %v2558, %v2517
        %v2560 = vshrl.u32 %v2559, 1
        %v2561 = vand.u32 %v2559, 1
        %v2562 = vsub.s32 0, %v2561
        %v2563 = vsel %vm2557, %v2562, %v2561
        %vm2564 = vcmp.lt.s32.totalorder %v2518, 0
        %v2565 = vsub.s32 0, %v2518
        %v2566 = vsel %vm2564, %v2565, %v2518
        %v2567 = vshrl.u32 %v2566, 1
        %v2568 = vand.u32 %v2566, 1
        %v2569 = vsub.s32 0, %v2568
        %v2570 = vsel %vm2564, %v2569, %v2568
        %vm2571 = vcmp.lt.s32.totalorder %v2519, 0
        %v2572 = vsub.s32 0, %v2519
        %v2573 = vsel %vm2571, %v2572, %v2519
        %v2574 = vshrl.u32 %v2573, 1
        %v2575 = vand.u32 %v2573, 1
        %v2576 = vsub.s32 0, %v2575
        %v2577 = vsel %vm2571, %v2576, %v2575
        %vm2578 = vcmp.lt.s32.totalorder %v2520, 0
        %v2579 = vsub.s32 0, %v2520
        %v2580 = vsel %vm2578, %v2579, %v2520
        %v2581 = vshrl.u32 %v2580, 1
        %v2582 = vand.u32 %v2580, 1
        %v2583 = vsub.s32 0, %v2582
        %v2584 = vsel %vm2578, %v2583, %v2582
        %vm2585 = vcmp.lt.s32.totalorder %v2521, 0
        %v2586 = vsub.s32 0, %v2521
        %v2587 = vsel %vm2585, %v2586, %v2521
        %v2588 = vshrl.u32 %v2587, 1
        %v2589 = vand.u32 %v2587, 1
        %v2590 = vsub.s32 0, %v2589
        %v2591 = vsel %vm2585, %v2590, %v2589
        %vm2592 = vcmp.lt.s32.totalorder %v2522, 0
        %v2593 = vsub.s32 0, %v2522
        %v2594 = vsel %vm2592, %v2593, %v2522
        %v2595 = vshrl.u32 %v2594, 1
        %v2596 = vand.u32 %v2594, 1
        %v2597 = vsub.s32 0, %v2596
        %v2598 = vsel %vm2592, %v2597, %v2596
        %vm2599 = vcmp.lt.s32.totalorder %v2523, 0
        %v2600 = vsub.s32 0, %v2523
        %v2601 = vsel %vm2599, %v2600, %v2523
        %v2602 = vshrl.u32 %v2601, 1
        %v2603 = vand.u32 %v2601, 1
        %v2604 = vsub.s32 0, %v2603
        %v2605 = vsel %vm2599, %v2604, %v2603
        %vm2606 = vcmp.lt.s32.totalorder %v2524, 0
        %v2607 = vsub.s32 0, %v2524
        %v2608 = vsel %vm2606, %v2607, %v2524
        %v2609 = vshrl.u32 %v2608, 1
        %v2610 = vand.u32 %v2608, 1
        %v2611 = vsub.s32 0, %v2610
        %v2612 = vsel %vm2606, %v2611, %v2610
        %vm2613 = vcmp.lt.s32.totalorder %v2525, 0
        %v2614 = vsub.s32 0, %v2525
        %v2615 = vsel %vm2613, %v2614, %v2525
        %v2616 = vshrl.u32 %v2615, 1
        %v2617 = vand.u32 %v2615, 1
        %v2618 = vsub.s32 0, %v2617
        %v2619 = vsel %vm2613, %v2618, %v2617
        %vm2620 = vcmp.lt.s32.totalorder %v2526, 0
        %v2621 = vsub.s32 0, %v2526
        %v2622 = vsel %vm2620, %v2621, %v2526
        %v2623 = vshrl.u32 %v2622, 1
        %v2624 = vand.u32 %v2622, 1
        %v2625 = vsub.s32 0, %v2624
        %v2626 = vsel %vm2620, %v2625, %v2624
        %vm2627 = vcmp.lt.s32.totalorder %v2527, 0
        %v2628 = vsub.s32 0, %v2527
        %v2629 = vsel %vm2627, %v2628, %v2527
        %v2630 = vshrl.u32 %v2629, 1
        %v2631 = vand.u32 %v2629, 1
        %v2632 = vsub.s32 0, %v2631
        %v2633 = vsel %vm2627, %v2632, %v2631
        %vm2634 = vcmp.lt.s32.totalorder %v2528, 0
        %v2635 = vsub.s32 0, %v2528
        %v2636 = vsel %vm2634, %v2635, %v2528
        %v2637 = vshrl.u32 %v2636, 1
        %v2638 = vand.u32 %v2636, 1
        %v2639 = vsub.s32 0, %v2638
        %v2640 = vsel %vm2634, %v2639, %v2638
        %vm2641 = vcmp.lt.s32.totalorder %v2529, 0
        %v2642 = vsub.s32 0, %v2529
        %v2643 = vsel %vm2641, %v2642, %v2529
        %v2644 = vshrl.u32 %v2643, 1
        %v2645 = vand.u32 %v2643, 1
        %v2646 = vsub.s32 0, %v2645
        %v2647 = vsel %vm2641, %v2646, %v2645
        %vm2648 = vcmp.lt.s32.totalorder %v2530, 0
        %v2649 = vsub.s32 0, %v2530
        %v2650 = vsel %vm2648, %v2649, %v2530
        %v2651 = vshrl.u32 %v2650, 1
        %v2652 = vand.u32 %v2650, 1
        %v2653 = vsub.s32 0, %v2652
        %v2654 = vsel %vm2648, %v2653, %v2652
        %vm2655 = vcmp.lt.s32.totalorder %v2531, 0
        %v2656 = vsub.s32 0, %v2531
        %v2657 = vsel %vm2655, %v2656, %v2531
        %v2658 = vshrl.u32 %v2657, 1
        %v2659 = vand.u32 %v2657, 1
        %v2660 = vsub.s32 0, %v2659
        %v2661 = vsel %vm2655, %v2660, %v2659
        %vm2662 = vcmp.lt.s32.totalorder %v2532, 0
        %v2663 = vsub.s32 0, %v2532
        %v2664 = vsel %vm2662, %v2663, %v2532
        %v2665 = vshrl.u32 %v2664, 1
        %v2666 = vand.u32 %v2664, 1
        %v2667 = vsub.s32 0, %v2666
        %v2668 = vsel %vm2662, %v2667, %v2666
        %vm2669 = vcmp.lt.s32.totalorder %v2533, 0
        %v2670 = vsub.s32 0, %v2533
        %v2671 = vsel %vm2669, %v2670, %v2533
        %v2672 = vshrl.u32 %v2671, 1
        %v2673 = vand.u32 %v2671, 1
        %v2674 = vsub.s32 0, %v2673
        %v2675 = vsel %vm2669, %v2674, %v2673
        %vm2676 = vcmp.lt.s32.totalorder %v2534, 0
        %v2677 = vsub.s32 0, %v2534
        %v2678 = vsel %vm2676, %v2677, %v2534
        %v2679 = vshrl.u32 %v2678, 1
        %v2680 = vand.u32 %v2678, 1
        %v2681 = vsub.s32 0, %v2680
        %v2682 = vsel %vm2676, %v2681, %v2680
        %vm2683 = vcmp.lt.s32.totalorder %v2535, 0
        %v2684 = vsub.s32 0, %v2535
        %v2685 = vsel %vm2683, %v2684, %v2535
        %v2686 = vshrl.u32 %v2685, 1
        %v2687 = vand.u32 %v2685, 1
        %v2688 = vsub.s32 0, %v2687
        %v2689 = vsel %vm2683, %v2688, %v2687
        %vm2690 = vcmp.lt.s32.totalorder %v2536, 0
        %v2691 = vsub.s32 0, %v2536
        %v2692 = vsel %vm2690, %v2691, %v2536
        %v2693 = vshrl.u32 %v2692, 1
        %v2694 = vand.u32 %v2692, 1
        %v2695 = vsub.s32 0, %v2694
        %v2696 = vsel %vm2690, %v2695, %v2694
        %vm2697 = vcmp.lt.s32.totalorder %v2537, 0
        %v2698 = vsub.s32 0, %v2537
        %v2699 = vsel %vm2697, %v2698, %v2537
        %v2700 = vshrl.u32 %v2699, 1
        %v2701 = vand.u32 %v2699, 1
        %v2702 = vsub.s32 0, %v2701
        %v2703 = vsel %vm2697, %v2702, %v2701
        %vm2704 = vcmp.lt.s32.totalorder %v2538, 0
        %v2705 = vsub.s32 0, %v2538
        %v2706 = vsel %vm2704, %v2705, %v2538
        %v2707 = vshrl.u32 %v2706, 1
        %v2708 = vand.u32 %v2706, 1
        %v2709 = vsub.s32 0, %v2708
        %v2710 = vsel %vm2704, %v2709, %v2708
        %vm2711 = vcmp.lt.s32.totalorder %v2539, 0
        %v2712 = vsub.s32 0, %v2539
        %v2713 = vsel %vm2711, %v2712, %v2539
        %v2714 = vshrl.u32 %v2713, 1
        %v2715 = vand.u32 %v2713, 1
        %v2716 = vsub.s32 0, %v2715
        %v2717 = vsel %vm2711, %v2716, %v2715
        %vm2718 = vcmp.lt.s32.totalorder %v2540, 0
        %v2719 = vsub.s32 0, %v2540
        %v2720 = vsel %vm2718, %v2719, %v2540
        %v2721 = vshrl.u32 %v2720, 1
        %v2722 = vand.u32 %v2720, 1
        %v2723 = vsub.s32 0, %v2722
        %v2724 = vsel %vm2718, %v2723, %v2722
        %vm2725 = vcmp.lt.s32.totalorder %v2541, 0
        %v2726 = vsub.s32 0, %v2541
        %v2727 = vsel %vm2725, %v2726, %v2541
        %v2728 = vshrl.u32 %v2727, 1
        %v2729 = vand.u32 %v2727, 1
        %v2730 = vsub.s32 0, %v2729
        %v2731 = vsel %vm2725, %v2730, %v2729
        %vm2732 = vcmp.lt.s32.totalorder %v2542, 0
        %v2733 = vsub.s32 0, %v2542
        %v2734 = vsel %vm2732, %v2733, %v2542
        %v2735 = vshrl.u32 %v2734, 1
        %v2736 = vand.u32 %v2734, 1
        %v2737 = vsub.s32 0, %v2736
        %v2738 = vsel %vm2732, %v2737, %v2736
        %vm2739 = vcmp.lt.s32.totalorder %v2543, 0
        %v2740 = vsub.s32 0, %v2543
        %v2741 = vsel %vm2739, %v2740, %v2543
        %v2742 = vshrl.u32 %v2741, 1
        %v2743 = vand.u32 %v2741, 1
        %v2744 = vsub.s32 0, %v2743
        %v2745 = vsel %vm2739, %v2744, %v2743
        %vm2746 = vcmp.lt.s32.totalorder %v2544, 0
        %v2747 = vsub.s32 0, %v2544
        %v2748 = vsel %vm2746, %v2747, %v2544
        %v2749 = vshrl.u32 %v2748, 1
        %v2750 = vand.u32 %v2748, 1
        %v2751 = vsub.s32 0, %v2750
        %v2752 = vsel %vm2746, %v2751, %v2750
        %vm2753 = vcmp.lt.s32.totalorder %v2545, 0
        %v2754 = vsub.s32 0, %v2545
        %v2755 = vsel %vm2753, %v2754, %v2545
        %v2756 = vshrl.u32 %v2755, 1
        %v2757 = vand.u32 %v2755, 1
        %v2758 = vsub.s32 0, %v2757
        %v2759 = vsel %vm2753, %v2758, %v2757
        %vm2760 = vcmp.lt.s32.totalorder %v2546, 0
        %v2761 = vsub.s32 0, %v2546
        %v2762 = vsel %vm2760, %v2761, %v2546
        %v2763 = vshrl.u32 %v2762, 1
        %v2764 = vand.u32 %v2762, 1
        %v2765 = vsub.s32 0, %v2764
        %v2766 = vsel %vm2760, %v2765, %v2764
        %vm2767 = vcmp.lt.s32.totalorder %v2547, 0
        %v2768 = vsub.s32 0, %v2547
        %v2769 = vsel %vm2767, %v2768, %v2547
        %v2770 = vshrl.u32 %v2769, 1
        %v2771 = vand.u32 %v2769, 1
        %v2772 = vsub.s32 0, %v2771
        %v2773 = vsel %vm2767, %v2772, %v2771
        %vm2774 = vcmp.lt.s32.totalorder %v2548, 0
        %v2775 = vsub.s32 0, %v2548
        %v2776 = vsel %vm2774, %v2775, %v2548
        %v2777 = vshrl.u32 %v2776, 1
        %v2778 = vand.u32 %v2776, 1
        %v2779 = vsub.s32 0, %v2778
        %v2780 = vsel %vm2774, %v2779, %v2778
        %vm2781 = vcmp.lt.s32.totalorder %v2549, 0
        %v2782 = vsub.s32 0, %v2549
        %v2783 = vsel %vm2781, %v2782, %v2549
        %v2784 = vshrl.u32 %v2783, 1
        %v2785 = vand.u32 %v2783, 1
        %v2786 = vsub.s32 0, %v2785
        %v2787 = vsel %vm2781, %v2786, %v2785
        %vm2788 = vcmp.lt.s32.totalorder %v2550, 0
        %v2789 = vsub.s32 0, %v2550
        %v2790 = vsel %vm2788, %v2789, %v2550
        %v2791 = vshrl.u32 %v2790, 1
        %v2792 = vand.u32 %v2790, 1
        %v2793 = vsub.s32 0, %v2792
        %v2794 = vsel %vm2788, %v2793, %v2792
        %vm2795 = vcmp.lt.s32.totalorder %v2551, 0
        %v2796 = vsub.s32 0, %v2551
        %v2797 = vsel %vm2795, %v2796, %v2551
        %v2798 = vshrl.u32 %v2797, 1
        %v2799 = vand.u32 %v2797, 1
        %v2800 = vsub.s32 0, %v2799
        %v2801 = vsel %vm2795, %v2800, %v2799
        %vm2802 = vcmp.lt.s32.totalorder %v2552, 0
        %v2803 = vsub.s32 0, %v2552
        %v2804 = vsel %vm2802, %v2803, %v2552
        %v2805 = vshrl.u32 %v2804, 1
        %v2806 = vand.u32 %v2804, 1
        %v2807 = vsub.s32 0, %v2806
        %v2808 = vsel %vm2802, %v2807, %v2806
        %vm2809 = vcmp.lt.s32.totalorder %v2553, 0
        %v2810 = vsub.s32 0, %v2553
        %v2811 = vsel %vm2809, %v2810, %v2553
        %v2812 = vshrl.u32 %v2811, 1
        %v2813 = vand.u32 %v2811, 1
        %v2814 = vsub.s32 0, %v2813
        %v2815 = vsel %vm2809, %v2814, %v2813
        %vm2816 = vcmp.lt.s32.totalorder %v2554, 0
        %v2817 = vsub.s32 0, %v2554
        %v2818 = vsel %vm2816, %v2817, %v2554
        %v2819 = vshrl.u32 %v2818, 1
        %v2820 = vand.u32 %v2818, 1
        %v2821 = vsub.s32 0, %v2820
        %v2822 = vsel %vm2816, %v2821, %v2820
        %vm2823 = vcmp.lt.s32.totalorder %v2555, 0
        %v2824 = vsub.s32 0, %v2555
        %v2825 = vsel %vm2823, %v2824, %v2555
        %v2826 = vshrl.u32 %v2825, 1
        %v2827 = vand.u32 %v2825, 1
        %v2828 = vsub.s32 0, %v2827
        %v2829 = vsel %vm2823, %v2828, %v2827
        %vm2830 = vcmp.lt.s32.totalorder %v2556, 0
        %v2831 = vsub.s32 0, %v2556
        %v2832 = vsel %vm2830, %v2831, %v2556
        %v2833 = vshrl.u32 %v2832, 1
        %v2834 = vand.u32 %v2832, 1
        %v2835 = vsub.s32 0, %v2834
        %v2836 = vsel %vm2830, %v2835, %v2834
        %vm2837 = vcmp.ne.s32.totalorder %v2563, 0
        %vm2838 = vcmp.ne.s32.totalorder %v2570, 0
        %vm2839 = vcmp.ne.s32.totalorder %v2577, 0
        %vm2840 = vcmp.ne.s32.totalorder %v2584, 0
        %vm2841 = vcmp.ne.s32.totalorder %v2591, 0
        %vm2842 = vcmp.ne.s32.totalorder %v2598, 0
        %vm2843 = vcmp.ne.s32.totalorder %v2605, 0
        %vm2844 = vcmp.ne.s32.totalorder %v2612, 0
        %vm2845 = vcmp.ne.s32.totalorder %v2619, 0
        %vm2846 = vcmp.ne.s32.totalorder %v2626, 0
        %vm2847 = vcmp.ne.s32.totalorder %v2633, 0
        %vm2848 = vcmp.ne.s32.totalorder %v2640, 0
        %vm2849 = vcmp.ne.s32.totalorder %v2647, 0
        %vm2850 = vcmp.ne.s32.totalorder %v2654, 0
        %vm2851 = vcmp.ne.s32.totalorder %v2661, 0
        %vm2852 = vcmp.ne.s32.totalorder %v2668, 0
        %vm2853 = vcmp.ne.s32.totalorder %v2675, 0
        %vm2854 = vcmp.ne.s32.totalorder %v2682, 0
        %vm2855 = vcmp.ne.s32.totalorder %v2689, 0
        %vm2856 = vcmp.ne.s32.totalorder %v2696, 0
        %vm2857 = vcmp.ne.s32.totalorder %v2703, 0
        %vm2858 = vcmp.ne.s32.totalorder %v2710, 0
        %vm2859 = vcmp.ne.s32.totalorder %v2717, 0
        %vm2860 = vcmp.ne.s32.totalorder %v2724, 0
        %vm2861 = vcmp.ne.s32.totalorder %v2731, 0
        %vm2862 = vcmp.ne.s32.totalorder %v2738, 0
        %vm2863 = vcmp.ne.s32.totalorder %v2745, 0
        %vm2864 = vcmp.ne.s32.totalorder %v2752, 0
        %vm2865 = vcmp.ne.s32.totalorder %v2759, 0
        %vm2866 = vcmp.ne.s32.totalorder %v2766, 0
        %vm2867 = vcmp.ne.s32.totalorder %v2773, 0
        %vm2868 = vcmp.ne.s32.totalorder %v2780, 0
        %vm2869 = vcmp.ne.s32.totalorder %v2787, 0
        %vm2870 = vcmp.ne.s32.totalorder %v2794, 0
        %vm2871 = vcmp.ne.s32.totalorder %v2801, 0
        %vm2872 = vcmp.ne.s32.totalorder %v2808, 0
        %vm2873 = vcmp.ne.s32.totalorder %v2815, 0
        %vm2874 = vcmp.ne.s32.totalorder %v2822, 0
        %vm2875 = vcmp.ne.s32.totalorder %v2829, 0
        %vm2876 = vcmp.ne.s32.totalorder %v2836, 0
        %vm2877 = vcmp.lt.s32.totalorder %v2563, 0
        %vm2878 = vcmp.lt.s32.totalorder %v2570, 0
        %vm2879 = vcmp.lt.s32.totalorder %v2577, 0
        %vm2880 = vcmp.lt.s32.totalorder %v2584, 0
        %vm2881 = vcmp.lt.s32.totalorder %v2591, 0
        %vm2882 = vcmp.lt.s32.totalorder %v2598, 0
        %vm2883 = vcmp.lt.s32.totalorder %v2605, 0
        %vm2884 = vcmp.lt.s32.totalorder %v2612, 0
        %vm2885 = vcmp.lt.s32.totalorder %v2619, 0
        %vm2886 = vcmp.lt.s32.totalorder %v2626, 0
        %vm2887 = vcmp.lt.s32.totalorder %v2633, 0
        %vm2888 = vcmp.lt.s32.totalorder %v2640, 0
        %vm2889 = vcmp.lt.s32.totalorder %v2647, 0
        %vm2890 = vcmp.lt.s32.totalorder %v2654, 0
        %vm2891 = vcmp.lt.s32.totalorder %v2661, 0
        %vm2892 = vcmp.lt.s32.totalorder %v2668, 0
        %vm2893 = vcmp.lt.s32.totalorder %v2675, 0
        %vm2894 = vcmp.lt.s32.totalorder %v2682, 0
        %vm2895 = vcmp.lt.s32.totalorder %v2689, 0
        %vm2896 = vcmp.lt.s32.totalorder %v2696, 0
        %vm2897 = vcmp.lt.s32.totalorder %v2703, 0
        %vm2898 = vcmp.lt.s32.totalorder %v2710, 0
        %vm2899 = vcmp.lt.s32.totalorder %v2717, 0
        %vm2900 = vcmp.lt.s32.totalorder %v2724, 0
        %vm2901 = vcmp.lt.s32.totalorder %v2731, 0
        %vm2902 = vcmp.lt.s32.totalorder %v2738, 0
        %vm2903 = vcmp.lt.s32.totalorder %v2745, 0
        %vm2904 = vcmp.lt.s32.totalorder %v2752, 0
        %vm2905 = vcmp.lt.s32.totalorder %v2759, 0
        %vm2906 = vcmp.lt.s32.totalorder %v2766, 0
        %vm2907 = vcmp.lt.s32.totalorder %v2773, 0
        %vm2908 = vcmp.lt.s32.totalorder %v2780, 0
        %vm2909 = vcmp.lt.s32.totalorder %v2787, 0
        %vm2910 = vcmp.lt.s32.totalorder %v2794, 0
        %vm2911 = vcmp.lt.s32.totalorder %v2801, 0
        %vm2912 = vcmp.lt.s32.totalorder %v2808, 0
        %vm2913 = vcmp.lt.s32.totalorder %v2815, 0
        %vm2914 = vcmp.lt.s32.totalorder %v2822, 0
        %vm2915 = vcmp.lt.s32.totalorder %v2829, 0
        %vm2916 = vcmp.lt.s32.totalorder %v2836, 0
        %vm2917 = vmand %vm2877, %vm2837
        %vm2918 = vmand %vm2878, %vm2838
        %vm2919 = vmand %vm2879, %vm2839
        %vm2920 = vmand %vm2880, %vm2840
        %vm2921 = vmand %vm2881, %vm2841
        %vm2922 = vmand %vm2882, %vm2842
        %vm2923 = vmand %vm2883, %vm2843
        %vm2924 = vmand %vm2884, %vm2844
        %vm2925 = vmand %vm2885, %vm2845
        %vm2926 = vmand %vm2886, %vm2846
        %vm2927 = vmand %vm2887, %vm2847
        %vm2928 = vmand %vm2888, %vm2848
        %vm2929 = vmand %vm2889, %vm2849
        %vm2930 = vmand %vm2890, %vm2850
        %vm2931 = vmand %vm2891, %vm2851
        %vm2932 = vmand %vm2892, %vm2852
        %vm2933 = vmand %vm2893, %vm2853
        %vm2934 = vmand %vm2894, %vm2854
        %vm2935 = vmand %vm2895, %vm2855
        %vm2936 = vmand %vm2896, %vm2856
        %vm2937 = vmand %vm2897, %vm2857
        %vm2938 = vmand %vm2898, %vm2858
        %vm2939 = vmand %vm2899, %vm2859
        %vm2940 = vmand %vm2900, %vm2860
        %vm2941 = vmand %vm2901, %vm2861
        %vm2942 = vmand %vm2902, %vm2862
        %vm2943 = vmand %vm2903, %vm2863
        %vm2944 = vmand %vm2904, %vm2864
        %vm2945 = vmand %vm2905, %vm2865
        %vm2946 = vmand %vm2906, %vm2866
        %vm2947 = vmand %vm2907, %vm2867
        %vm2948 = vmand %vm2908, %vm2868
        %vm2949 = vmand %vm2909, %vm2869
        %vm2950 = vmand %vm2910, %vm2870
        %vm2951 = vmand %vm2911, %vm2871
        %vm2952 = vmand %vm2912, %vm2872
        %vm2953 = vmand %vm2913, %vm2873
        %vm2954 = vmand %vm2914, %vm2874
        %vm2955 = vmand %vm2915, %vm2875
        %vm2956 = vmand %vm2916, %vm2876
        %v2957 = vadd.s32 %v2563, 2
        %v2958 = vadd.s32 %v2570, 2
        %v2959 = vadd.s32 %v2577, 2
        %v2960 = vadd.s32 %v2584, 2
        %v2961 = vadd.s32 %v2591, 2
        %v2962 = vadd.s32 %v2598, 2
        %v2963 = vadd.s32 %v2605, 2
        %v2964 = vadd.s32 %v2612, 2
        %v2965 = vadd.s32 %v2619, 2
        %v2966 = vadd.s32 %v2626, 2
        %v2967 = vadd.s32 %v2633, 2
        %v2968 = vadd.s32 %v2640, 2
        %v2969 = vadd.s32 %v2647, 2
        %v2970 = vadd.s32 %v2654, 2
        %v2971 = vadd.s32 %v2661, 2
        %v2972 = vadd.s32 %v2668, 2
        %v2973 = vadd.s32 %v2675, 2
        %v2974 = vadd.s32 %v2682, 2
        %v2975 = vadd.s32 %v2689, 2
        %v2976 = vadd.s32 %v2696, 2
        %v2977 = vadd.s32 %v2703, 2
        %v2978 = vadd.s32 %v2710, 2
        %v2979 = vadd.s32 %v2717, 2
        %v2980 = vadd.s32 %v2724, 2
        %v2981 = vadd.s32 %v2731, 2
        %v2982 = vadd.s32 %v2738, 2
        %v2983 = vadd.s32 %v2745, 2
        %v2984 = vadd.s32 %v2752, 2
        %v2985 = vadd.s32 %v2759, 2
        %v2986 = vadd.s32 %v2766, 2
        %v2987 = vadd.s32 %v2773, 2
        %v2988 = vadd.s32 %v2780, 2
        %v2989 = vadd.s32 %v2787, 2
        %v2990 = vadd.s32 %v2794, 2
        %v2991 = vadd.s32 %v2801, 2
        %v2992 = vadd.s32 %v2808, 2
        %v2993 = vadd.s32 %v2815, 2
        %v2994 = vadd.s32 %v2822, 2
        %v2995 = vadd.s32 %v2829, 2
        %v2996 = vadd.s32 %v2836, 2
        %v2997 = vsel %vm2917, %v2957, %v2563
        %v2998 = vsel %vm2918, %v2958, %v2570
        %v2999 = vsel %vm2919, %v2959, %v2577
        %v3000 = vsel %vm2920, %v2960, %v2584
        %v3001 = vsel %vm2921, %v2961, %v2591
        %v3002 = vsel %vm2922, %v2962, %v2598
        %v3003 = vsel %vm2923, %v2963, %v2605
        %v3004 = vsel %vm2924, %v2964, %v2612
        %v3005 = vsel %vm2925, %v2965, %v2619
        %v3006 = vsel %vm2926, %v2966, %v2626
        %v3007 = vsel %vm2927, %v2967, %v2633
        %v3008 = vsel %vm2928, %v2968, %v2640
        %v3009 = vsel %vm2929, %v2969, %v2647
        %v3010 = vsel %vm2930, %v2970, %v2654
        %v3011 = vsel %vm2931, %v2971, %v2661
        %v3012 = vsel %vm2932, %v2972, %v2668
        %v3013 = vsel %vm2933, %v2973, %v2675
        %v3014 = vsel %vm2934, %v2974, %v2682
        %v3015 = vsel %vm2935, %v2975, %v2689
        %v3016 = vsel %vm2936, %v2976, %v2696
        %v3017 = vsel %vm2937, %v2977, %v2703
        %v3018 = vsel %vm2938, %v2978, %v2710
        %v3019 = vsel %vm2939, %v2979, %v2717
        %v3020 = vsel %vm2940, %v2980, %v2724
        %v3021 = vsel %vm2941, %v2981, %v2731
        %v3022 = vsel %vm2942, %v2982, %v2738
        %v3023 = vsel %vm2943, %v2983, %v2745
        %v3024 = vsel %vm2944, %v2984, %v2752
        %v3025 = vsel %vm2945, %v2985, %v2759
        %v3026 = vsel %vm2946, %v2986, %v2766
        %v3027 = vsel %vm2947, %v2987, %v2773
        %v3028 = vsel %vm2948, %v2988, %v2780
        %v3029 = vsel %vm2949, %v2989, %v2787
        %v3030 = vsel %vm2950, %v2990, %v2794
        %v3031 = vsel %vm2951, %v2991, %v2801
        %v3032 = vsel %vm2952, %v2992, %v2808
        %v3033 = vsel %vm2953, %v2993, %v2815
        %v3034 = vsel %vm2954, %v2994, %v2822
        %v3035 = vsel %vm2955, %v2995, %v2829
        %v3036 = vsel %vm2956, %v2996, %v2836
        %vm3037 = vcmp.eq.s32.totalorder %v2997, 1
        %vm3038 = vcmp.eq.s32.totalorder %v2998, 1
        %vm3039 = vcmp.eq.s32.totalorder %v2999, 1
        %vm3040 = vcmp.eq.s32.totalorder %v3000, 1
        %vm3041 = vcmp.eq.s32.totalorder %v3001, 1
        %vm3042 = vcmp.eq.s32.totalorder %v3002, 1
        %vm3043 = vcmp.eq.s32.totalorder %v3003, 1
        %vm3044 = vcmp.eq.s32.totalorder %v3004, 1
        %vm3045 = vcmp.eq.s32.totalorder %v3005, 1
        %vm3046 = vcmp.eq.s32.totalorder %v3006, 1
        %vm3047 = vcmp.eq.s32.totalorder %v3007, 1
        %vm3048 = vcmp.eq.s32.totalorder %v3008, 1
        %vm3049 = vcmp.eq.s32.totalorder %v3009, 1
        %vm3050 = vcmp.eq.s32.totalorder %v3010, 1
        %vm3051 = vcmp.eq.s32.totalorder %v3011, 1
        %vm3052 = vcmp.eq.s32.totalorder %v3012, 1
        %vm3053 = vcmp.eq.s32.totalorder %v3013, 1
        %vm3054 = vcmp.eq.s32.totalorder %v3014, 1
        %vm3055 = vcmp.eq.s32.totalorder %v3015, 1
        %vm3056 = vcmp.eq.s32.totalorder %v3016, 1
        %vm3057 = vcmp.eq.s32.totalorder %v3017, 1
        %vm3058 = vcmp.eq.s32.totalorder %v3018, 1
        %vm3059 = vcmp.eq.s32.totalorder %v3019, 1
        %vm3060 = vcmp.eq.s32.totalorder %v3020, 1
        %vm3061 = vcmp.eq.s32.totalorder %v3021, 1
        %vm3062 = vcmp.eq.s32.totalorder %v3022, 1
        %vm3063 = vcmp.eq.s32.totalorder %v3023, 1
        %vm3064 = vcmp.eq.s32.totalorder %v3024, 1
        %vm3065 = vcmp.eq.s32.totalorder %v3025, 1
        %vm3066 = vcmp.eq.s32.totalorder %v3026, 1
        %vm3067 = vcmp.eq.s32.totalorder %v3027, 1
        %vm3068 = vcmp.eq.s32.totalorder %v3028, 1
        %vm3069 = vcmp.eq.s32.totalorder %v3029, 1
        %vm3070 = vcmp.eq.s32.totalorder %v3030, 1
        %vm3071 = vcmp.eq.s32.totalorder %v3031, 1
        %vm3072 = vcmp.eq.s32.totalorder %v3032, 1
        %vm3073 = vcmp.eq.s32.totalorder %v3033, 1
        %vm3074 = vcmp.eq.s32.totalorder %v3034, 1
        %vm3075 = vcmp.eq.s32.totalorder %v3035, 1
        %vm3076 = vcmp.eq.s32.totalorder %v3036, 1
        %vm3077 = vcmp.lt.s32.totalorder %v2517, 9
        %vm3078 = vcmp.lt.s32.totalorder %v2518, 9
        %vm3079 = vcmp.lt.s32.totalorder %v2519, 9
        %vm3080 = vcmp.lt.s32.totalorder %v2520, 9
        %vm3081 = vcmp.lt.s32.totalorder %v2521, 9
        %vm3082 = vcmp.lt.s32.totalorder %v2522, 9
        %vm3083 = vcmp.lt.s32.totalorder %v2523, 9
        %vm3084 = vcmp.lt.s32.totalorder %v2524, 9
        %vm3085 = vcmp.lt.s32.totalorder %v2525, 9
        %vm3086 = vcmp.lt.s32.totalorder %v2526, 9
        %vm3087 = vcmp.lt.s32.totalorder %v2527, 9
        %vm3088 = vcmp.lt.s32.totalorder %v2528, 9
        %vm3089 = vcmp.lt.s32.totalorder %v2529, 9
        %vm3090 = vcmp.lt.s32.totalorder %v2530, 9
        %vm3091 = vcmp.lt.s32.totalorder %v2531, 9
        %vm3092 = vcmp.lt.s32.totalorder %v2532, 9
        %vm3093 = vcmp.lt.s32.totalorder %v2533, 9
        %vm3094 = vcmp.lt.s32.totalorder %v2534, 9
        %vm3095 = vcmp.lt.s32.totalorder %v2535, 9
        %vm3096 = vcmp.lt.s32.totalorder %v2536, 9
        %vm3097 = vcmp.lt.s32.totalorder %v2537, 9
        %vm3098 = vcmp.lt.s32.totalorder %v2538, 9
        %vm3099 = vcmp.lt.s32.totalorder %v2539, 9
        %vm3100 = vcmp.lt.s32.totalorder %v2540, 9
        %vm3101 = vcmp.lt.s32.totalorder %v2541, 9
        %vm3102 = vcmp.lt.s32.totalorder %v2542, 9
        %vm3103 = vcmp.lt.s32.totalorder %v2543, 9
        %vm3104 = vcmp.lt.s32.totalorder %v2544, 9
        %vm3105 = vcmp.lt.s32.totalorder %v2545, 9
        %vm3106 = vcmp.lt.s32.totalorder %v2546, 9
        %vm3107 = vcmp.lt.s32.totalorder %v2547, 9
        %vm3108 = vcmp.lt.s32.totalorder %v2548, 9
        %vm3109 = vcmp.lt.s32.totalorder %v2549, 9
        %vm3110 = vcmp.lt.s32.totalorder %v2550, 9
        %vm3111 = vcmp.lt.s32.totalorder %v2551, 9
        %vm3112 = vcmp.lt.s32.totalorder %v2552, 9
        %vm3113 = vcmp.lt.s32.totalorder %v2553, 9
        %vm3114 = vcmp.lt.s32.totalorder %v2554, 9
        %vm3115 = vcmp.lt.s32.totalorder %v2555, 9
        %vm3116 = vcmp.lt.s32.totalorder %v2556, 9
        %vm3117 = vmand %vm3037, %vm3077
        %vm3118 = vmand %vm3038, %vm3078
        %vm3119 = vmand %vm3039, %vm3079
        %vm3120 = vmand %vm3040, %vm3080
        %vm3121 = vmand %vm3041, %vm3081
        %vm3122 = vmand %vm3042, %vm3082
        %vm3123 = vmand %vm3043, %vm3083
        %vm3124 = vmand %vm3044, %vm3084
        %vm3125 = vmand %vm3045, %vm3085
        %vm3126 = vmand %vm3046, %vm3086
        %vm3127 = vmand %vm3047, %vm3087
        %vm3128 = vmand %vm3048, %vm3088
        %vm3129 = vmand %vm3049, %vm3089
        %vm3130 = vmand %vm3050, %vm3090
        %vm3131 = vmand %vm3051, %vm3091
        %vm3132 = vmand %vm3052, %vm3092
        %vm3133 = vmand %vm3053, %vm3093
        %vm3134 = vmand %vm3054, %vm3094
        %vm3135 = vmand %vm3055, %vm3095
        %vm3136 = vmand %vm3056, %vm3096
        %vm3137 = vmand %vm3057, %vm3097
        %vm3138 = vmand %vm3058, %vm3098
        %vm3139 = vmand %vm3059, %vm3099
        %vm3140 = vmand %vm3060, %vm3100
        %vm3141 = vmand %vm3061, %vm3101
        %vm3142 = vmand %vm3062, %vm3102
        %vm3143 = vmand %vm3063, %vm3103
        %vm3144 = vmand %vm3064, %vm3104
        %vm3145 = vmand %vm3065, %vm3105
        %vm3146 = vmand %vm3066, %vm3106
        %vm3147 = vmand %vm3067, %vm3107
        %vm3148 = vmand %vm3068, %vm3108
        %vm3149 = vmand %vm3069, %vm3109
        %vm3150 = vmand %vm3070, %vm3110
        %vm3151 = vmand %vm3071, %vm3111
        %vm3152 = vmand %vm3072, %vm3112
        %vm3153 = vmand %vm3073, %vm3113
        %vm3154 = vmand %vm3074, %vm3114
        %vm3155 = vmand %vm3075, %vm3115
        %vm3156 = vmand %vm3076, %vm3116
        %v3157 = vsel %vm3117, 1, 0
        %v3158 = vsel %vm3118, 1, 0
        %v3159 = vsel %vm3119, 1, 0
        %v3160 = vsel %vm3120, 1, 0
        %v3161 = vsel %vm3121, 1, 0
        %v3162 = vsel %vm3122, 1, 0
        %v3163 = vsel %vm3123, 1, 0
        %v3164 = vsel %vm3124, 1, 0
        %v3165 = vsel %vm3125, 1, 0
        %v3166 = vsel %vm3126, 1, 0
        %v3167 = vsel %vm3127, 1, 0
        %v3168 = vsel %vm3128, 1, 0
        %v3169 = vsel %vm3129, 1, 0
        %v3170 = vsel %vm3130, 1, 0
        %v3171 = vsel %vm3131, 1, 0
        %v3172 = vsel %vm3132, 1, 0
        %v3173 = vsel %vm3133, 1, 0
        %v3174 = vsel %vm3134, 1, 0
        %v3175 = vsel %vm3135, 1, 0
        %v3176 = vsel %vm3136, 1, 0
        %v3177 = vsel %vm3137, 1, 0
        %v3178 = vsel %vm3138, 1, 0
        %v3179 = vsel %vm3139, 1, 0
        %v3180 = vsel %vm3140, 1, 0
        %v3181 = vsel %vm3141, 1, 0
        %v3182 = vsel %vm3142, 1, 0
        %v3183 = vsel %vm3143, 1, 0
        %v3184 = vsel %vm3144, 1, 0
        %v3185 = vsel %vm3145, 1, 0
        %v3186 = vsel %vm3146, 1, 0
        %v3187 = vsel %vm3147, 1, 0
        %v3188 = vsel %vm3148, 1, 0
        %v3189 = vsel %vm3149, 1, 0
        %v3190 = vsel %vm3150, 1, 0
        %v3191 = vsel %vm3151, 1, 0
        %v3192 = vsel %vm3152, 1, 0
        %v3193 = vsel %vm3153, 1, 0
        %v3194 = vsel %vm3154, 1, 0
        %v3195 = vsel %vm3155, 1, 0
        %v3196 = vsel %vm3156, 1, 0
        %vm3197 = vcmp.eq.s32.totalorder %v3157, 1
        %vm3198 = vcmp.eq.s32.totalorder %v3158, 1
        %vm3199 = vcmp.eq.s32.totalorder %v3159, 1
        %vm3200 = vcmp.eq.s32.totalorder %v3160, 1
        %vm3201 = vcmp.eq.s32.totalorder %v3161, 1
        %vm3202 = vcmp.eq.s32.totalorder %v3162, 1
        %vm3203 = vcmp.eq.s32.totalorder %v3163, 1
        %vm3204 = vcmp.eq.s32.totalorder %v3164, 1
        %vm3205 = vcmp.eq.s32.totalorder %v3165, 1
        %vm3206 = vcmp.eq.s32.totalorder %v3166, 1
        %vm3207 = vcmp.eq.s32.totalorder %v3167, 1
        %vm3208 = vcmp.eq.s32.totalorder %v3168, 1
        %vm3209 = vcmp.eq.s32.totalorder %v3169, 1
        %vm3210 = vcmp.eq.s32.totalorder %v3170, 1
        %vm3211 = vcmp.eq.s32.totalorder %v3171, 1
        %vm3212 = vcmp.eq.s32.totalorder %v3172, 1
        %vm3213 = vcmp.eq.s32.totalorder %v3173, 1
        %vm3214 = vcmp.eq.s32.totalorder %v3174, 1
        %vm3215 = vcmp.eq.s32.totalorder %v3175, 1
        %vm3216 = vcmp.eq.s32.totalorder %v3176, 1
        %vm3217 = vcmp.eq.s32.totalorder %v3177, 1
        %vm3218 = vcmp.eq.s32.totalorder %v3178, 1
        %vm3219 = vcmp.eq.s32.totalorder %v3179, 1
        %vm3220 = vcmp.eq.s32.totalorder %v3180, 1
        %vm3221 = vcmp.eq.s32.totalorder %v3181, 1
        %vm3222 = vcmp.eq.s32.totalorder %v3182, 1
        %vm3223 = vcmp.eq.s32.totalorder %v3183, 1
        %vm3224 = vcmp.eq.s32.totalorder %v3184, 1
        %vm3225 = vcmp.eq.s32.totalorder %v3185, 1
        %vm3226 = vcmp.eq.s32.totalorder %v3186, 1
        %vm3227 = vcmp.eq.s32.totalorder %v3187, 1
        %vm3228 = vcmp.eq.s32.totalorder %v3188, 1
        %vm3229 = vcmp.eq.s32.totalorder %v3189, 1
        %vm3230 = vcmp.eq.s32.totalorder %v3190, 1
        %vm3231 = vcmp.eq.s32.totalorder %v3191, 1
        %vm3232 = vcmp.eq.s32.totalorder %v3192, 1
        %vm3233 = vcmp.eq.s32.totalorder %v3193, 1
        %vm3234 = vcmp.eq.s32.totalorder %v3194, 1
        %vm3235 = vcmp.eq.s32.totalorder %v3195, 1
        %vm3236 = vcmp.eq.s32.totalorder %v3196, 1
        %v3237 = vsel %vm3197, %v1836, 0.0
        %v3238 = vsel %vm3198, %v1837, 0.0
        %v3239 = vsel %vm3199, %v1838, 0.0
        %v3240 = vsel %vm3200, %v1839, 0.0
        %v3241 = vsel %vm3201, %v1840, 0.0
        %v3242 = vsel %vm3202, %v1841, 0.0
        %v3243 = vsel %vm3203, %v1842, 0.0
        %v3244 = vsel %vm3204, %v1843, 0.0
        %v3245 = vsel %vm3205, %v1844, 0.0
        %v3246 = vsel %vm3206, %v1845, 0.0
        %v3247 = vsel %vm3207, %v1846, 0.0
        %v3248 = vsel %vm3208, %v1847, 0.0
        %v3249 = vsel %vm3209, %v1848, 0.0
        %v3250 = vsel %vm3210, %v1849, 0.0
        %v3251 = vsel %vm3211, %v1850, 0.0
        %v3252 = vsel %vm3212, %v1851, 0.0
        %v3253 = vsel %vm3213, %v1852, 0.0
        %v3254 = vsel %vm3214, %v1853, 0.0
        %v3255 = vsel %vm3215, %v1854, 0.0
        %v3256 = vsel %vm3216, %v1855, 0.0
        %v3257 = vsel %vm3217, %v1856, 0.0
        %v3258 = vsel %vm3218, %v1857, 0.0
        %v3259 = vsel %vm3219, %v1858, 0.0
        %v3260 = vsel %vm3220, %v1859, 0.0
        %v3261 = vsel %vm3221, %v1860, 0.0
        %v3262 = vsel %vm3222, %v1861, 0.0
        %v3263 = vsel %vm3223, %v1862, 0.0
        %v3264 = vsel %vm3224, %v1863, 0.0
        %v3265 = vsel %vm3225, %v1864, 0.0
        %v3266 = vsel %vm3226, %v1865, 0.0
        %v3267 = vsel %vm3227, %v1866, 0.0
        %v3268 = vsel %vm3228, %v1867, 0.0
        %v3269 = vsel %vm3229, %v1868, 0.0
        %v3270 = vsel %vm3230, %v1869, 0.0
        %v3271 = vsel %vm3231, %v1870, 0.0
        %v3272 = vsel %vm3232, %v1871, 0.0
        %v3273 = vsel %vm3233, %v1872, 0.0
        %v3274 = vsel %vm3234, %v1873, 0.0
        %v3275 = vsel %vm3235, %v1874, 0.0
        %v3276 = vsel %vm3236, %v1875, 0.0
        %3277 = vst [vmem:[#allocation5] sm:$0xf] 0
        %3278 = vst [vmem:[#allocation5 + $0xa0] sm:$0xf0] 0
        %v3279 = vpack.c.bf16 %v3238, %v3237
        %v3280 = vpack.c.bf16 %v3240, %v3239
        %v3281 = vpack.c.bf16 %v3242, %v3241
        %v3282 = vpack.c.bf16 %v3244, %v3243
        %v3283 = vpack.c.bf16 %v3246, %v3245
        %v3284 = vpack.c.bf16 %v3248, %v3247
        %v3285 = vpack.c.bf16 %v3250, %v3249
        %v3286 = vpack.c.bf16 %v3252, %v3251
        %v3287 = vpack.c.bf16 %v3254, %v3253
        %v3288 = vpack.c.bf16 %v3256, %v3255
        %v3289 = vpack.c.bf16 %v3258, %v3257
        %v3290 = vpack.c.bf16 %v3260, %v3259
        %v3291 = vpack.c.bf16 %v3262, %v3261
        %v3292 = vpack.c.bf16 %v3264, %v3263
        %v3293 = vpack.c.bf16 %v3266, %v3265
        %v3294 = vpack.c.bf16 %v3268, %v3267
        %v3295 = vpack.c.bf16 %v3270, %v3269
        %v3296 = vpack.c.bf16 %v3272, %v3271
        %v3297 = vpack.c.bf16 %v3274, %v3273
        %v3298 = vpack.c.bf16 %v3276, %v3275
        %vm3319 = vcmask 1043456
        %v3320 = vrot.slane %v3279, 4
        %v3321 = vrot.slane %v3280, 4
        %v3322 = vsel %vm3319, %v3320, %v3321
        %v3323 = vrot.slane %v3281, 4
        %v3324 = vsel %vm3319, %v3321, %v3323
        %v3325 = vrot.slane %v3282, 4
        %v3326 = vsel %vm3319, %v3323, %v3325
        %v3327 = vrot.slane %v3283, 4
        %v3328 = vsel %vm3319, %v3325, %v3327
        %v3329 = vrot.slane %v3284, 4
        %v3330 = vsel %vm3319, %v3327, %v3329
        %v3331 = vrot.slane %v3285, 4
        %v3332 = vsel %vm3319, %v3329, %v3331
        %v3333 = vrot.slane %v3286, 4
        %v3334 = vsel %vm3319, %v3331, %v3333
        %v3335 = vrot.slane %v3287, 4
        %v3336 = vsel %vm3319, %v3333, %v3335
        %v3337 = vrot.slane %v3288, 4
        %v3338 = vsel %vm3319, %v3335, %v3337
        %v3339 = vrot.slane %v3289, 4
        %v3340 = vsel %vm3319, %v3337, %v3339
        %v3341 = vrot.slane %v3290, 4
        %v3342 = vsel %vm3319, %v3339, %v3341
        %v3343 = vrot.slane %v3291, 4
        %v3344 = vsel %vm3319, %v3341, %v3343
        %v3345 = vrot.slane %v3292, 4
        %v3346 = vsel %vm3319, %v3343, %v3345
        %v3347 = vrot.slane %v3293, 4
        %v3348 = vsel %vm3319, %v3345, %v3347
        %v3349 = vrot.slane %v3294, 4
        %v3350 = vsel %vm3319, %v3347, %v3349
        %v3351 = vrot.slane %v3295, 4
        %v3352 = vsel %vm3319, %v3349, %v3351
        %v3353 = vrot.slane %v3296, 4
        %v3354 = vsel %vm3319, %v3351, %v3353
        %v3355 = vrot.slane %v3297, 4
        %v3356 = vsel %vm3319, %v3353, %v3355
        %v3357 = vrot.slane %v3298, 4
        %v3358 = vsel %vm3319, %v3355, %v3357
        %3380 = vst [vmem:[#allocation5] sm:$0xf0] %v3320
        %3381 = vst [vmem:[#allocation5 + $0x8] sm:$0xff] %v3322
        %3382 = vst [vmem:[#allocation5 + $0x10] sm:$0xff] %v3324
        %3383 = vst [vmem:[#allocation5 + $0x18] sm:$0xff] %v3326
        %3384 = vst [vmem:[#allocation5 + $0x20] sm:$0xff] %v3328
        %3385 = vst [vmem:[#allocation5 + $0x28] sm:$0xff] %v3330
        %3386 = vst [vmem:[#allocation5 + $0x30] sm:$0xff] %v3332
        %3387 = vst [vmem:[#allocation5 + $0x38] sm:$0xff] %v3334
        %3388 = vst [vmem:[#allocation5 + $0x40] sm:$0xff] %v3336
        %3389 = vst [vmem:[#allocation5 + $0x48] sm:$0xff] %v3338
        %3390 = vst [vmem:[#allocation5 + $0x50] sm:$0xff] %v3340
        %3391 = vst [vmem:[#allocation5 + $0x58] sm:$0xff] %v3342
        %3392 = vst [vmem:[#allocation5 + $0x60] sm:$0xff] %v3344
        %3393 = vst [vmem:[#allocation5 + $0x68] sm:$0xff] %v3346
        %3394 = vst [vmem:[#allocation5 + $0x70] sm:$0xff] %v3348
        %3395 = vst [vmem:[#allocation5 + $0x78] sm:$0xff] %v3350
        %3396 = vst [vmem:[#allocation5 + $0x80] sm:$0xff] %v3352
        %3397 = vst [vmem:[#allocation5 + $0x88] sm:$0xff] %v3354
        %3398 = vst [vmem:[#allocation5 + $0x90] sm:$0xff] %v3356
        %3399 = vst [vmem:[#allocation5 + $0x98] sm:$0xff] %v3358
        %3400 = vst [vmem:[#allocation5 + $0xa0] sm:$0xf] %v3357
        %v3401 = vld [vmem:[#allocation5] sm:$0xf8]
        %v3402 = vld [vmem:[#allocation5 + $0x8] sm:$0xff]
        %v3403 = vld [vmem:[#allocation5 + $0x10] sm:$0xff]
        %v3404 = vld [vmem:[#allocation5 + $0x18] sm:$0xff]
        %v3405 = vld [vmem:[#allocation5 + $0x20] sm:$0xff]
        %v3406 = vld [vmem:[#allocation5 + $0x28] sm:$0xff]
        %v3407 = vld [vmem:[#allocation5 + $0x30] sm:$0xff]
        %v3408 = vld [vmem:[#allocation5 + $0x38] sm:$0xff]
        %v3409 = vld [vmem:[#allocation5 + $0x40] sm:$0xff]
        %v3410 = vld [vmem:[#allocation5 + $0x48] sm:$0xff]
        %v3411 = vld [vmem:[#allocation5 + $0x50] sm:$0xff]
        %v3412 = vld [vmem:[#allocation5 + $0x58] sm:$0xff]
        %v3413 = vld [vmem:[#allocation5 + $0x60] sm:$0xff]
        %v3414 = vld [vmem:[#allocation5 + $0x68] sm:$0xff]
        %v3415 = vld [vmem:[#allocation5 + $0x70] sm:$0xff]
        %v3416 = vld [vmem:[#allocation5 + $0x78] sm:$0xff]
        %v3417 = vld [vmem:[#allocation5 + $0x80] sm:$0xff]
        %v3418 = vld [vmem:[#allocation5 + $0x88] sm:$0xff]
        %v3419 = vld [vmem:[#allocation5 + $0x90] sm:$0xff]
        %v3420 = vld [vmem:[#allocation5 + $0x98] sm:$0xff]
        %v3421 = vld [vmem:[#allocation5 + $0xa0] sm:$0x7]
        %vm3443 = vcmask 1044480
        %v3444 = vrot.slane %v3401, 3
        %v3445 = vrot.slane %v3402, 3
        %v3446 = vsel %vm3443, %v3444, %v3445
        %v3447 = vrot.slane %v3403, 3
        %v3448 = vsel %vm3443, %v3445, %v3447
        %v3449 = vrot.slane %v3404, 3
        %v3450 = vsel %vm3443, %v3447, %v3449
        %v3451 = vrot.slane %v3405, 3
        %v3452 = vsel %vm3443, %v3449, %v3451
        %v3453 = vrot.slane %v3406, 3
        %v3454 = vsel %vm3443, %v3451, %v3453
        %v3455 = vrot.slane %v3407, 3
        %v3456 = vsel %vm3443, %v3453, %v3455
        %v3457 = vrot.slane %v3408, 3
        %v3458 = vsel %vm3443, %v3455, %v3457
        %v3459 = vrot.slane %v3409, 3
        %v3460 = vsel %vm3443, %v3457, %v3459
        %v3461 = vrot.slane %v3410, 3
        %v3462 = vsel %vm3443, %v3459, %v3461
        %v3463 = vrot.slane %v3411, 3
        %v3464 = vsel %vm3443, %v3461, %v3463
        %v3465 = vrot.slane %v3412, 3
        %v3466 = vsel %vm3443, %v3463, %v3465
        %v3467 = vrot.slane %v3413, 3
        %v3468 = vsel %vm3443, %v3465, %v3467
        %v3469 = vrot.slane %v3414, 3
        %v3470 = vsel %vm3443, %v3467, %v3469
        %v3471 = vrot.slane %v3415, 3
        %v3472 = vsel %vm3443, %v3469, %v3471
        %v3473 = vrot.slane %v3416, 3
        %v3474 = vsel %vm3443, %v3471, %v3473
        %v3475 = vrot.slane %v3417, 3
        %v3476 = vsel %vm3443, %v3473, %v3475
        %v3477 = vrot.slane %v3418, 3
        %v3478 = vsel %vm3443, %v3475, %v3477
        %v3479 = vrot.slane %v3419, 3
        %v3480 = vsel %vm3443, %v3477, %v3479
        %v3481 = vrot.slane %v3420, 3
        %v3482 = vsel %vm3443, %v3479, %v3481
        %v3483 = vrot.slane %v3421, 3
        %v3484 = vsel %vm3443, %v3481, %v3483
        %3505 = vst [vmem:[#allocation6] sm:$0xff] %v3446
        %3506 = vst [vmem:[#allocation6 + $0x18] sm:$0xff] %v3448
        %3507 = vst [vmem:[#allocation6 + $0x30] sm:$0xff] %v3450
        %3508 = vst [vmem:[#allocation6 + $0x48] sm:$0xff] %v3452
        %3509 = vst [vmem:[#allocation6 + $0x60] sm:$0xff] %v3454
        %3510 = vst [vmem:[#allocation6 + $0x78] sm:$0xff] %v3456
        %3511 = vst [vmem:[#allocation6 + $0x90] sm:$0xff] %v3458
        %3512 = vst [vmem:[#allocation6 + $0xa8] sm:$0xff] %v3460
        %3513 = vst [vmem:[#allocation6 + $0xc0] sm:$0xff] %v3462
        %3514 = vst [vmem:[#allocation6 + $0xd8] sm:$0xff] %v3464
        %3515 = vst [vmem:[#allocation6 + $0xf0] sm:$0xff] %v3466
        %3516 = vst [vmem:[#allocation6 + $0x108] sm:$0xff] %v3468
        %3517 = vst [vmem:[#allocation6 + $0x120] sm:$0xff] %v3470
        %3518 = vst [vmem:[#allocation6 + $0x138] sm:$0xff] %v3472
        %3519 = vst [vmem:[#allocation6 + $0x150] sm:$0xff] %v3474
        %3520 = vst [vmem:[#allocation6 + $0x168] sm:$0xff] %v3476
        %3521 = vst [vmem:[#allocation6 + $0x180] sm:$0xff] %v3478
        %3522 = vst [vmem:[#allocation6 + $0x198] sm:$0xff] %v3480
        %3523 = vst [vmem:[#allocation6 + $0x1b0] sm:$0xff] %v3482
        %3524 = vst [vmem:[#allocation6 + $0x1c8] sm:$0xff] %v3484
        %v3525 = vld [vmem:[#allocation5] sm:$0xf0]
        %v3526 = vld [vmem:[#allocation5 + $0x8] sm:$0xff]
        %v3527 = vld [vmem:[#allocation5 + $0x10] sm:$0xff]
        %v3528 = vld [vmem:[#allocation5 + $0x18] sm:$0xff]
        %v3529 = vld [vmem:[#allocation5 + $0x20] sm:$0xff]
        %v3530 = vld [vmem:[#allocation5 + $0x28] sm:$0xff]
        %v3531 = vld [vmem:[#allocation5 + $0x30] sm:$0xff]
        %v3532 = vld [vmem:[#allocation5 + $0x38] sm:$0xff]
        %v3533 = vld [vmem:[#allocation5 + $0x40] sm:$0xff]
        %v3534 = vld [vmem:[#allocation5 + $0x48] sm:$0xff]
        %v3535 = vld [vmem:[#allocation5 + $0x50] sm:$0xff]
        %v3536 = vld [vmem:[#allocation5 + $0x58] sm:$0xff]
        %v3537 = vld [vmem:[#allocation5 + $0x60] sm:$0xff]
        %v3538 = vld [vmem:[#allocation5 + $0x68] sm:$0xff]
        %v3539 = vld [vmem:[#allocation5 + $0x70] sm:$0xff]
        %v3540 = vld [vmem:[#allocation5 + $0x78] sm:$0xff]
        %v3541 = vld [vmem:[#allocation5 + $0x80] sm:$0xff]
        %v3542 = vld [vmem:[#allocation5 + $0x88] sm:$0xff]
        %v3543 = vld [vmem:[#allocation5 + $0x90] sm:$0xff]
        %v3544 = vld [vmem:[#allocation5 + $0x98] sm:$0xff]
        %v3545 = vld [vmem:[#allocation5 + $0xa0] sm:$0xf]
        %v3567 = vrot.slane %v3525, 4
        %v3568 = vrot.slane %v3526, 4
        %v3569 = vsel %vm3319, %v3567, %v3568
        %v3570 = vrot.slane %v3527, 4
        %v3571 = vsel %vm3319, %v3568, %v3570
        %v3572 = vrot.slane %v3528, 4
        %v3573 = vsel %vm3319, %v3570, %v3572
        %v3574 = vrot.slane %v3529, 4
        %v3575 = vsel %vm3319, %v3572, %v3574
        %v3576 = vrot.slane %v3530, 4
        %v3577 = vsel %vm3319, %v3574, %v3576
        %v3578 = vrot.slane %v3531, 4
        %v3579 = vsel %vm3319, %v3576, %v3578
        %v3580 = vrot.slane %v3532, 4
        %v3581 = vsel %vm3319, %v3578, %v3580
        %v3582 = vrot.slane %v3533, 4
        %v3583 = vsel %vm3319, %v3580, %v3582
        %v3584 = vrot.slane %v3534, 4
        %v3585 = vsel %vm3319, %v3582, %v3584
        %v3586 = vrot.slane %v3535, 4
        %v3587 = vsel %vm3319, %v3584, %v3586
        %v3588 = vrot.slane %v3536, 4
        %v3589 = vsel %vm3319, %v3586, %v3588
        %v3590 = vrot.slane %v3537, 4
        %v3591 = vsel %vm3319, %v3588, %v3590
        %v3592 = vrot.slane %v3538, 4
        %v3593 = vsel %vm3319, %v3590, %v3592
        %v3594 = vrot.slane %v3539, 4
        %v3595 = vsel %vm3319, %v3592, %v3594
        %v3596 = vrot.slane %v3540, 4
        %v3597 = vsel %vm3319, %v3594, %v3596
        %v3598 = vrot.slane %v3541, 4
        %v3599 = vsel %vm3319, %v3596, %v3598
        %v3600 = vrot.slane %v3542, 4
        %v3601 = vsel %vm3319, %v3598, %v3600
        %v3602 = vrot.slane %v3543, 4
        %v3603 = vsel %vm3319, %v3600, %v3602
        %v3604 = vrot.slane %v3544, 4
        %v3605 = vsel %vm3319, %v3602, %v3604
        %v3606 = vrot.slane %v3545, 4
        %v3607 = vsel %vm3319, %v3604, %v3606
        %3628 = vst [vmem:[#allocation6 + $0x8] sm:$0xff] %v3569
        %3629 = vst [vmem:[#allocation6 + $0x20] sm:$0xff] %v3571
        %3630 = vst [vmem:[#allocation6 + $0x38] sm:$0xff] %v3573
        %3631 = vst [vmem:[#allocation6 + $0x50] sm:$0xff] %v3575
        %3632 = vst [vmem:[#allocation6 + $0x68] sm:$0xff] %v3577
        %3633 = vst [vmem:[#allocation6 + $0x80] sm:$0xff] %v3579
        %3634 = vst [vmem:[#allocation6 + $0x98] sm:$0xff] %v3581
        %3635 = vst [vmem:[#allocation6 + $0xb0] sm:$0xff] %v3583
        %3636 = vst [vmem:[#allocation6 + $0xc8] sm:$0xff] %v3585
        %3637 = vst [vmem:[#allocation6 + $0xe0] sm:$0xff] %v3587
        %3638 = vst [vmem:[#allocation6 + $0xf8] sm:$0xff] %v3589
        %3639 = vst [vmem:[#allocation6 + $0x110] sm:$0xff] %v3591
        %3640 = vst [vmem:[#allocation6 + $0x128] sm:$0xff] %v3593
        %3641 = vst [vmem:[#allocation6 + $0x140] sm:$0xff] %v3595
        %3642 = vst [vmem:[#allocation6 + $0x158] sm:$0xff] %v3597
        %3643 = vst [vmem:[#allocation6 + $0x170] sm:$0xff] %v3599
        %3644 = vst [vmem:[#allocation6 + $0x188] sm:$0xff] %v3601
        %3645 = vst [vmem:[#allocation6 + $0x1a0] sm:$0xff] %v3603
        %3646 = vst [vmem:[#allocation6 + $0x1b8] sm:$0xff] %v3605
        %3647 = vst [vmem:[#allocation6 + $0x1d0] sm:$0xff] %v3607
        %v3648 = vld [vmem:[#allocation5] sm:$0xe0]
        %v3649 = vld [vmem:[#allocation5 + $0x8] sm:$0xff]
        %v3650 = vld [vmem:[#allocation5 + $0x10] sm:$0xff]
        %v3651 = vld [vmem:[#allocation5 + $0x18] sm:$0xff]
        %v3652 = vld [vmem:[#allocation5 + $0x20] sm:$0xff]
        %v3653 = vld [vmem:[#allocation5 + $0x28] sm:$0xff]
        %v3654 = vld [vmem:[#allocation5 + $0x30] sm:$0xff]
        %v3655 = vld [vmem:[#allocation5 + $0x38] sm:$0xff]
        %v3656 = vld [vmem:[#allocation5 + $0x40] sm:$0xff]
        %v3657 = vld [vmem:[#allocation5 + $0x48] sm:$0xff]
        %v3658 = vld [vmem:[#allocation5 + $0x50] sm:$0xff]
        %v3659 = vld [vmem:[#allocation5 + $0x58] sm:$0xff]
        %v3660 = vld [vmem:[#allocation5 + $0x60] sm:$0xff]
        %v3661 = vld [vmem:[#allocation5 + $0x68] sm:$0xff]
        %v3662 = vld [vmem:[#allocation5 + $0x70] sm:$0xff]
        %v3663 = vld [vmem:[#allocation5 + $0x78] sm:$0xff]
        %v3664 = vld [vmem:[#allocation5 + $0x80] sm:$0xff]
        %v3665 = vld [vmem:[#allocation5 + $0x88] sm:$0xff]
        %v3666 = vld [vmem:[#allocation5 + $0x90] sm:$0xff]
        %v3667 = vld [vmem:[#allocation5 + $0x98] sm:$0xff]
        %v3668 = vld [vmem:[#allocation5 + $0xa0] sm:$0x1f]
        %vm3690 = vcmask 1042432
        %v3691 = vrot.slane %v3648, 5
        %v3692 = vrot.slane %v3649, 5
        %v3693 = vsel %vm3690, %v3691, %v3692
        %v3694 = vrot.slane %v3650, 5
        %v3695 = vsel %vm3690, %v3692, %v3694
        %v3696 = vrot.slane %v3651, 5
        %v3697 = vsel %vm3690, %v3694, %v3696
        %v3698 = vrot.slane %v3652, 5
        %v3699 = vsel %vm3690, %v3696, %v3698
        %v3700 = vrot.slane %v3653, 5
        %v3701 = vsel %vm3690, %v3698, %v3700
        %v3702 = vrot.slane %v3654, 5
        %v3703 = vsel %vm3690, %v3700, %v3702
        %v3704 = vrot.slane %v3655, 5
        %v3705 = vsel %vm3690, %v3702, %v3704
        %v3706 = vrot.slane %v3656, 5
        %v3707 = vsel %vm3690, %v3704, %v3706
        %v3708 = vrot.slane %v3657, 5
        %v3709 = vsel %vm3690, %v3706, %v3708
        %v3710 = vrot.slane %v3658, 5
        %v3711 = vsel %vm3690, %v3708, %v3710
        %v3712 = vrot.slane %v3659, 5
        %v3713 = vsel %vm3690, %v3710, %v3712
        %v3714 = vrot.slane %v3660, 5
        %v3715 = vsel %vm3690, %v3712, %v3714
        %v3716 = vrot.slane %v3661, 5
        %v3717 = vsel %vm3690, %v3714, %v3716
        %v3718 = vrot.slane %v3662, 5
        %v3719 = vsel %vm3690, %v3716, %v3718
        %v3720 = vrot.slane %v3663, 5
        %v3721 = vsel %vm3690, %v3718, %v3720
        %v3722 = vrot.slane %v3664, 5
        %v3723 = vsel %vm3690, %v3720, %v3722
        %v3724 = vrot.slane %v3665, 5
        %v3725 = vsel %vm3690, %v3722, %v3724
        %v3726 = vrot.slane %v3666, 5
        %v3727 = vsel %vm3690, %v3724, %v3726
        %v3728 = vrot.slane %v3667, 5
        %v3729 = vsel %vm3690, %v3726, %v3728
        %v3730 = vrot.slane %v3668, 5
        %v3731 = vsel %vm3690, %v3728, %v3730
        %3752 = vst [vmem:[#allocation6 + $0x10] sm:$0xff] %v3693
        %3753 = vst [vmem:[#allocation6 + $0x28] sm:$0xff] %v3695
        %3754 = vst [vmem:[#allocation6 + $0x40] sm:$0xff] %v3697
        %3755 = vst [vmem:[#allocation6 + $0x58] sm:$0xff] %v3699
        %3756 = vst [vmem:[#allocation6 + $0x70] sm:$0xff] %v3701
        %3757 = vst [vmem:[#allocation6 + $0x88] sm:$0xff] %v3703
        %3758 = vst [vmem:[#allocation6 + $0xa0] sm:$0xff] %v3705
        %3759 = vst [vmem:[#allocation6 + $0xb8] sm:$0xff] %v3707
        %3760 = vst [vmem:[#allocation6 + $0xd0] sm:$0xff] %v3709
        %3761 = vst [vmem:[#allocation6 + $0xe8] sm:$0xff] %v3711
        %3762 = vst [vmem:[#allocation6 + $0x100] sm:$0xff] %v3713
        %3763 = vst [vmem:[#allocation6 + $0x118] sm:$0xff] %v3715
        %3764 = vst [vmem:[#allocation6 + $0x130] sm:$0xff] %v3717
        %3765 = vst [vmem:[#allocation6 + $0x148] sm:$0xff] %v3719
        %3766 = vst [vmem:[#allocation6 + $0x160] sm:$0xff] %v3721
        %3767 = vst [vmem:[#allocation6 + $0x178] sm:$0xff] %v3723
        %3768 = vst [vmem:[#allocation6 + $0x190] sm:$0xff] %v3725
        %3769 = vst [vmem:[#allocation6 + $0x1a8] sm:$0xff] %v3727
        %3770 = vst [vmem:[#allocation6 + $0x1c0] sm:$0xff] %v3729
        %3771 = vst [vmem:[#allocation6 + $0x1d8] sm:$0xff] %v3731
        %v3772 = vld [vmem:[#allocation6] sm:$0xff]
        %v3773 = vld [vmem:[#allocation6 + $0x8] sm:$0xff]
        %v3774 = vld [vmem:[#allocation6 + $0x10] sm:$0xff]
        %v3775 = vld [vmem:[#allocation6 + $0x18] sm:$0xff]
        %v3776 = vld [vmem:[#allocation6 + $0x20] sm:$0xff]
        %v3777 = vld [vmem:[#allocation6 + $0x28] sm:$0xff]
        %v3778 = vld [vmem:[#allocation6 + $0x30] sm:$0xff]
        %v3779 = vld [vmem:[#allocation6 + $0x38] sm:$0xff]
        %v3780 = vld [vmem:[#allocation6 + $0x40] sm:$0xff]
        %v3781 = vld [vmem:[#allocation6 + $0x48] sm:$0xff]
        %v3782 = vld [vmem:[#allocation6 + $0x50] sm:$0xff]
        %v3783 = vld [vmem:[#allocation6 + $0x58] sm:$0xff]
        %v3784 = vld [vmem:[#allocation6 + $0x60] sm:$0xff]
        %v3785 = vld [vmem:[#allocation6 + $0x68] sm:$0xff]
        %v3786 = vld [vmem:[#allocation6 + $0x70] sm:$0xff]
        %v3787 = vld [vmem:[#allocation6 + $0x78] sm:$0xff]
        %v3788 = vld [vmem:[#allocation6 + $0x80] sm:$0xff]
        %v3789 = vld [vmem:[#allocation6 + $0x88] sm:$0xff]
        %v3790 = vld [vmem:[#allocation6 + $0x90] sm:$0xff]
        %v3791 = vld [vmem:[#allocation6 + $0x98] sm:$0xff]
        %v3792 = vld [vmem:[#allocation6 + $0xa0] sm:$0xff]
        %v3793 = vld [vmem:[#allocation6 + $0xa8] sm:$0xff]
        %v3794 = vld [vmem:[#allocation6 + $0xb0] sm:$0xff]
        %v3795 = vld [vmem:[#allocation6 + $0xb8] sm:$0xff]
        %v3796 = vld [vmem:[#allocation6 + $0xc0] sm:$0xff]
        %v3797 = vld [vmem:[#allocation6 + $0xc8] sm:$0xff]
        %v3798 = vld [vmem:[#allocation6 + $0xd0] sm:$0xff]
        %v3799 = vld [vmem:[#allocation6 + $0xd8] sm:$0xff]
        %v3800 = vld [vmem:[#allocation6 + $0xe0] sm:$0xff]
        %v3801 = vld [vmem:[#allocation6 + $0xe8] sm:$0xff]
        %v3802 = vld [vmem:[#allocation6 + $0xf0] sm:$0xff]
        %v3803 = vld [vmem:[#allocation6 + $0xf8] sm:$0xff]
        %v3804 = vld [vmem:[#allocation6 + $0x100] sm:$0xff]
        %v3805 = vld [vmem:[#allocation6 + $0x108] sm:$0xff]
        %v3806 = vld [vmem:[#allocation6 + $0x110] sm:$0xff]
        %v3807 = vld [vmem:[#allocation6 + $0x118] sm:$0xff]
        %v3808 = vld [vmem:[#allocation6 + $0x120] sm:$0xff]
        %v3809 = vld [vmem:[#allocation6 + $0x128] sm:$0xff]
        %v3810 = vld [vmem:[#allocation6 + $0x130] sm:$0xff]
        %v3811 = vld [vmem:[#allocation6 + $0x138] sm:$0xff]
        %v3812 = vld [vmem:[#allocation6 + $0x140] sm:$0xff]
        %v3813 = vld [vmem:[#allocation6 + $0x148] sm:$0xff]
        %v3814 = vld [vmem:[#allocation6 + $0x150] sm:$0xff]
        %v3815 = vld [vmem:[#allocation6 + $0x158] sm:$0xff]
        %v3816 = vld [vmem:[#allocation6 + $0x160] sm:$0xff]
        %v3817 = vld [vmem:[#allocation6 + $0x168] sm:$0xff]
        %v3818 = vld [vmem:[#allocation6 + $0x170] sm:$0xff]
        %v3819 = vld [vmem:[#allocation6 + $0x178] sm:$0xff]
        %v3820 = vld [vmem:[#allocation6 + $0x180] sm:$0xff]
        %v3821 = vld [vmem:[#allocation6 + $0x188] sm:$0xff]
        %v3822 = vld [vmem:[#allocation6 + $0x190] sm:$0xff]
        %v3823 = vld [vmem:[#allocation6 + $0x198] sm:$0xff]
        %v3824 = vld [vmem:[#allocation6 + $0x1a0] sm:$0xff]
        %v3825 = vld [vmem:[#allocation6 + $0x1a8] sm:$0xff]
        %v3826 = vld [vmem:[#allocation6 + $0x1b0] sm:$0xff]
        %v3827 = vld [vmem:[#allocation6 + $0x1b8] sm:$0xff]
        %v3828 = vld [vmem:[#allocation6 + $0x1c0] sm:$0xff]
        %v3829 = vld [vmem:[#allocation6 + $0x1c8] sm:$0xff]
        %v3830 = vld [vmem:[#allocation6 + $0x1d0] sm:$0xff]
        %v3831 = vld [vmem:[#allocation6 + $0x1d8] sm:$0xff]
        %v3832 = vld [vmem:[%s3] sm:$0xff]
        %v3833 = vld [vmem:[%s3 + $0x8] sm:$0xff]
        %v3834 = vld [vmem:[%s3 + $0x10] sm:$0xff]
        %v3835 = vld [vmem:[%s3 + $0x18] sm:$0xff]
        %v3836 = vld [vmem:[%s3 + $0x20] sm:$0xff]
        %v3837 = vld [vmem:[%s3 + $0x28] sm:$0xff]
        %v3838 = vld [vmem:[%s3 + $0x30] sm:$0xff]
        %v3839 = vld [vmem:[%s3 + $0x38] sm:$0xff]
        %v3840 = vld [vmem:[%s3 + $0x40] sm:$0xff]
        %v3841 = vld [vmem:[%s3 + $0x48] sm:$0xff]
        %v3842 = vld [vmem:[%s3 + $0x50] sm:$0xff]
        %v3843 = vld [vmem:[%s3 + $0x58] sm:$0xff]
        %v3844 = vld [vmem:[%s3 + $0x60] sm:$0xff]
        %v3845 = vld [vmem:[%s3 + $0x68] sm:$0xff]
        %v3846 = vld [vmem:[%s3 + $0x70] sm:$0xff]
        %v3847 = vld [vmem:[%s3 + $0x78] sm:$0xff]
        %v3848 = vld [vmem:[%s3 + $0x80] sm:$0xff]
        %v3849 = vld [vmem:[%s3 + $0x88] sm:$0xff]
        %v3850 = vld [vmem:[%s3 + $0x90] sm:$0xff]
        %v3851 = vld [vmem:[%s3 + $0x98] sm:$0xff]
        %v3852 = vld [vmem:[%s3 + $0xa0] sm:$0xff]
        %v3853 = vld [vmem:[%s3 + $0xa8] sm:$0xff]
        %v3854 = vld [vmem:[%s3 + $0xb0] sm:$0xff]
        %v3855 = vld [vmem:[%s3 + $0xb8] sm:$0xff]
        %v3856 = vld [vmem:[%s3 + $0xc0] sm:$0xff]
        %v3857 = vld [vmem:[%s3 + $0xc8] sm:$0xff]
        %v3858 = vld [vmem:[%s3 + $0xd0] sm:$0xff]
        %v3859 = vld [vmem:[%s3 + $0xd8] sm:$0xff]
        %v3860 = vld [vmem:[%s3 + $0xe0] sm:$0xff]
        %v3861 = vld [vmem:[%s3 + $0xe8] sm:$0xff]
        %v3862 = vld [vmem:[%s3 + $0xf0] sm:$0xff]
        %v3863 = vld [vmem:[%s3 + $0xf8] sm:$0xff]
        %v3864 = vld [vmem:[%s3 + $0x100] sm:$0xff]
        %v3865 = vld [vmem:[%s3 + $0x108] sm:$0xff]
        %v3866 = vld [vmem:[%s3 + $0x110] sm:$0xff]
        %v3867 = vld [vmem:[%s3 + $0x118] sm:$0xff]
        %v3868 = vld [vmem:[%s3 + $0x120] sm:$0xff]
        %v3869 = vld [vmem:[%s3 + $0x128] sm:$0xff]
        %v3870 = vld [vmem:[%s3 + $0x130] sm:$0xff]
        %v3871 = vld [vmem:[%s3 + $0x138] sm:$0xff]
        %v3872 = vld [vmem:[%s3 + $0x140] sm:$0xff]
        %v3873 = vld [vmem:[%s3 + $0x148] sm:$0xff]
        %v3874 = vld [vmem:[%s3 + $0x150] sm:$0xff]
        %v3875 = vld [vmem:[%s3 + $0x158] sm:$0xff]
        %v3876 = vld [vmem:[%s3 + $0x160] sm:$0xff]
        %v3877 = vld [vmem:[%s3 + $0x168] sm:$0xff]
        %v3878 = vld [vmem:[%s3 + $0x170] sm:$0xff]
        %v3879 = vld [vmem:[%s3 + $0x178] sm:$0xff]
        %v3880 = vld [vmem:[%s4] sm:$0x3]
        %v3882 = vlaneseq
        %v3883 = vshrl.u32 %v3882, 7
        %v3884 = vsub.s32 0, %v3883
        %v3885 = vrot.slane %v3880, %v3884
        %v3886 = vlaneseq
        %v3887 = vshrl.u32 %v3886, 7
        %v3888 = vsub.s32 1, %v3887
        %v3889 = vrot.slane %v3880, %v3888
        %v3940 = vunpack.c.l.b16 %v3832
        %v3941 = vunpack.c.h.b16 %v3832
        %v3942 = vunpack.c.l.b16 %v3833
        %v3943 = vunpack.c.h.b16 %v3833
        %v3944 = vunpack.c.l.b16 %v3834
        %v3945 = vunpack.c.h.b16 %v3834
        %v3946 = vunpack.c.l.b16 %v3835
        %v3947 = vunpack.c.h.b16 %v3835
        %v3948 = vunpack.c.l.b16 %v3836
        %v3949 = vunpack.c.h.b16 %v3836
        %v3950 = vunpack.c.l.b16 %v3837
        %v3951 = vunpack.c.h.b16 %v3837
        %v3952 = vunpack.c.l.b16 %v3838
        %v3953 = vunpack.c.h.b16 %v3838
        %v3954 = vunpack.c.l.b16 %v3839
        %v3955 = vunpack.c.h.b16 %v3839
        %v3956 = vunpack.c.l.b16 %v3840
        %v3957 = vunpack.c.h.b16 %v3840
        %v3958 = vunpack.c.l.b16 %v3841
        %v3959 = vunpack.c.h.b16 %v3841
        %v3960 = vunpack.c.l.b16 %v3842
        %v3961 = vunpack.c.h.b16 %v3842
        %v3962 = vunpack.c.l.b16 %v3843
        %v3963 = vunpack.c.h.b16 %v3843
        %v3964 = vunpack.c.l.b16 %v3844
        %v3965 = vunpack.c.h.b16 %v3844
        %v3966 = vunpack.c.l.b16 %v3845
        %v3967 = vunpack.c.h.b16 %v3845
        %v3968 = vunpack.c.l.b16 %v3846
        %v3969 = vunpack.c.h.b16 %v3846
        %v3970 = vunpack.c.l.b16 %v3847
        %v3971 = vunpack.c.h.b16 %v3847
        %v3972 = vunpack.c.l.b16 %v3848
        %v3973 = vunpack.c.h.b16 %v3848
        %v3974 = vunpack.c.l.b16 %v3849
        %v3975 = vunpack.c.h.b16 %v3849
        %v3976 = vunpack.c.l.b16 %v3850
        %v3977 = vunpack.c.h.b16 %v3850
        %v3978 = vunpack.c.l.b16 %v3851
        %v3979 = vunpack.c.h.b16 %v3851
        %v3980 = vunpack.c.l.b16 %v3852
        %v3981 = vunpack.c.h.b16 %v3852
        %v3982 = vunpack.c.l.b16 %v3853
        %v3983 = vunpack.c.h.b16 %v3853
        %v3984 = vunpack.c.l.b16 %v3854
        %v3985 = vunpack.c.h.b16 %v3854
        %v3986 = vunpack.c.l.b16 %v3855
        %v3987 = vunpack.c.h.b16 %v3855
        %v3988 = vunpack.c.l.b16 %v3856
        %v3989 = vunpack.c.h.b16 %v3856
        %v3990 = vunpack.c.l.b16 %v3857
        %v3991 = vunpack.c.h.b16 %v3857
        %v3992 = vunpack.c.l.b16 %v3858
        %v3993 = vunpack.c.h.b16 %v3858
        %v3994 = vunpack.c.l.b16 %v3859
        %v3995 = vunpack.c.h.b16 %v3859
        %v3996 = vunpack.c.l.b16 %v3860
        %v3997 = vunpack.c.h.b16 %v3860
        %v3998 = vunpack.c.l.b16 %v3861
        %v3999 = vunpack.c.h.b16 %v3861
        %v4000 = vunpack.c.l.b16 %v3862
        %v4001 = vunpack.c.h.b16 %v3862
        %v4002 = vunpack.c.l.b16 %v3863
        %v4003 = vunpack.c.h.b16 %v3863
        %v4004 = vunpack.c.l.b16 %v3864
        %v4005 = vunpack.c.h.b16 %v3864
        %v4006 = vunpack.c.l.b16 %v3865
        %v4007 = vunpack.c.h.b16 %v3865
        %v4008 = vunpack.c.l.b16 %v3866
        %v4009 = vunpack.c.h.b16 %v3866
        %v4010 = vunpack.c.l.b16 %v3867
        %v4011 = vunpack.c.h.b16 %v3867
        %v4012 = vunpack.c.l.b16 %v3868
        %v4013 = vunpack.c.h.b16 %v3868
        %v4014 = vunpack.c.l.b16 %v3869
        %v4015 = vunpack.c.h.b16 %v3869
        %v4016 = vunpack.c.l.b16 %v3870
        %v4017 = vunpack.c.h.b16 %v3870
        %v4018 = vunpack.c.l.b16 %v3871
        %v4019 = vunpack.c.h.b16 %v3871
        %v4020 = vunpack.c.l.b16 %v3872
        %v4021 = vunpack.c.h.b16 %v3872
        %v4022 = vunpack.c.l.b16 %v3873
        %v4023 = vunpack.c.h.b16 %v3873
        %v4024 = vunpack.c.l.b16 %v3874
        %v4025 = vunpack.c.h.b16 %v3874
        %v4026 = vunpack.c.l.b16 %v3875
        %v4027 = vunpack.c.h.b16 %v3875
        %v4028 = vunpack.c.l.b16 %v3876
        %v4029 = vunpack.c.h.b16 %v3876
        %v4030 = vunpack.c.l.b16 %v3877
        %v4031 = vunpack.c.h.b16 %v3877
        %v4032 = vunpack.c.l.b16 %v3878
        %v4033 = vunpack.c.h.b16 %v3878
        %v4034 = vunpack.c.l.b16 %v3879
        %v4035 = vunpack.c.h.b16 %v3879
        %v4036 = vpack.c.b16 %v3942, %v3940
        %v4037 = vpack.c.b16 %v3943, %v3941
        %v4038 = vpack.c.b16 %v3946, %v3944
        %v4039 = vpack.c.b16 %v3947, %v3945
        %v4040 = vpack.c.b16 %v3950, %v3948
        %v4041 = vpack.c.b16 %v3951, %v3949
        %v4042 = vpack.c.b16 %v3954, %v3952
        %v4043 = vpack.c.b16 %v3955, %v3953
        %v4044 = vpack.c.b16 %v3958, %v3956
        %v4045 = vpack.c.b16 %v3959, %v3957
        %v4046 = vpack.c.b16 %v3962, %v3960
        %v4047 = vpack.c.b16 %v3963, %v3961
        %v4048 = vpack.c.b16 %v3966, %v3964
        %v4049 = vpack.c.b16 %v3967, %v3965
        %v4050 = vpack.c.b16 %v3970, %v3968
        %v4051 = vpack.c.b16 %v3971, %v3969
        %v4052 = vpack.c.b16 %v3974, %v3972
        %v4053 = vpack.c.b16 %v3975, %v3973
        %v4054 = vpack.c.b16 %v3978, %v3976
        %v4055 = vpack.c.b16 %v3979, %v3977
        %v4056 = vpack.c.b16 %v3982, %v3980
        %v4057 = vpack.c.b16 %v3983, %v3981
        %v4058 = vpack.c.b16 %v3986, %v3984
        %v4059 = vpack.c.b16 %v3987, %v3985
        %v4060 = vpack.c.b16 %v3990, %v3988
        %v4061 = vpack.c.b16 %v3991, %v3989
        %v4062 = vpack.c.b16 %v3994, %v3992
        %v4063 = vpack.c.b16 %v3995, %v3993
        %v4064 = vpack.c.b16 %v3998, %v3996
        %v4065 = vpack.c.b16 %v3999, %v3997
        %v4066 = vpack.c.b16 %v4002, %v4000
        %v4067 = vpack.c.b16 %v4003, %v4001
        %v4068 = vpack.c.b16 %v4006, %v4004
        %v4069 = vpack.c.b16 %v4007, %v4005
        %v4070 = vpack.c.b16 %v4010, %v4008
        %v4071 = vpack.c.b16 %v4011, %v4009
        %v4072 = vpack.c.b16 %v4014, %v4012
        %v4073 = vpack.c.b16 %v4015, %v4013
        %v4074 = vpack.c.b16 %v4018, %v4016
        %v4075 = vpack.c.b16 %v4019, %v4017
        %v4076 = vpack.c.b16 %v4022, %v4020
        %v4077 = vpack.c.b16 %v4023, %v4021
        %v4078 = vpack.c.b16 %v4026, %v4024
        %v4079 = vpack.c.b16 %v4027, %v4025
        %v4080 = vpack.c.b16 %v4030, %v4028
        %v4081 = vpack.c.b16 %v4031, %v4029
        %v4082 = vpack.c.b16 %v4034, %v4032
        %v4083 = vpack.c.b16 %v4035, %v4033
        %4132 = vmatprep.subr.bf16.mxu0 %v4037
        %4133 = vmatpush1.bf16.msra.mxu0 %v4036
        %4134 = vmatprep.subr.bf16.mxu0 %v4039
        %4135 = vmatpush1.bf16.msra.mxu0 %v4038
        %4136 = vmatprep.subr.bf16.mxu0 %v4041
        %4137 = vmatpush1.bf16.msra.mxu0 %v4040
        %4138 = vmatprep.subr.bf16.mxu0 %v4043
        %4139 = vmatpush1.bf16.msra.mxu0 %v4042
        %4140 = vmatprep.subr.bf16.mxu0 %v4045
        %4141 = vmatpush1.bf16.msra.mxu0 %v4044
        %4142 = vmatprep.subr.bf16.mxu0 %v4047
        %4143 = vmatpush1.bf16.msra.mxu0 %v4046
        %4144 = vmatprep.subr.bf16.mxu0 %v4049
        %4145 = vmatpush1.bf16.msra.mxu0 %v4048
        %4146 = vmatprep.subr.bf16.mxu0 %v4051
        %4147 = vmatpush1.bf16.msra.mxu0 %v4050
        %4148 = vmatprep.subr.bf16.mxu0 %v4053
        %4149 = vmatpush1.bf16.msra.mxu0 %v4052
        %4150 = vmatprep.subr.bf16.mxu0 %v4055
        %4151 = vmatpush1.bf16.msra.mxu0 %v4054
        %4152 = vmatprep.subr.bf16.mxu0 %v4057
        %4153 = vmatpush1.bf16.msra.mxu0 %v4056
        %4154 = vmatprep.subr.bf16.mxu0 %v4059
        %4155 = vmatpush1.bf16.msra.mxu0 %v4058
        %4156 = vmatprep.subr.bf16.mxu0 %v4061
        %4157 = vmatpush1.bf16.msra.mxu0 %v4060
        %4158 = vmatprep.subr.bf16.mxu0 %v4063
        %4159 = vmatpush1.bf16.msra.mxu0 %v4062
        %4160 = vmatprep.subr.bf16.mxu0 %v4065
        %4161 = vmatpush1.bf16.msra.mxu0 %v4064
        %4162 = vmatprep.subr.bf16.mxu0 %v4067
        %4163 = vmatpush1.bf16.msra.mxu0 %v4066
        %4164 = vmatprep.mubr.bf16.mxu0 %v3773
        %4165 = vmatmul.mubr.bf16.gmra.mrb[0].mxu0 %v3772
        %v4166 = vpop.f32.mrb[0].mxu0
        %v4167 = vadd.f32 %v3885, %v4166
        %v4168 = vpop.f32.mrb[0].mxu0
        %v4169 = vadd.f32 %v3889, %v4168
        %v4170 = vpop.f32.mrb[0].mxu0
        %v4171 = vadd.f32 %v3885, %v4170
        %v4172 = vpop.f32.mrb[0].mxu0
        %v4173 = vadd.f32 %v3889, %v4172
        %4174 = vmatprep.mubr.bf16.mxu0 %v3776
        %4175 = vmatmul.mubr.bf16.gmra.mrb[0].mxu0 %v3775
        %v4176 = vpop.f32.mrb[0].mxu0
        %v4177 = vadd.f32 %v3885, %v4176
        %v4178 = vpop.f32.mrb[0].mxu0
        %v4179 = vadd.f32 %v3889, %v4178
        %v4180 = vpop.f32.mrb[0].mxu0
        %v4181 = vadd.f32 %v3885, %v4180
        %v4182 = vpop.f32.mrb[0].mxu0
        %v4183 = vadd.f32 %v3889, %v4182
        %4184 = vmatprep.mubr.bf16.mxu0 %v3779
        %4185 = vmatmul.mubr.bf16.gmra.mrb[0].mxu0 %v3778
        %v4186 = vpop.f32.mrb[0].mxu0
        %v4187 = vadd.f32 %v3885, %v4186
        %v4188 = vpop.f32.mrb[0].mxu0
        %v4189 = vadd.f32 %v3889, %v4188
        %v4190 = vpop.f32.mrb[0].mxu0
        %v4191 = vadd.f32 %v3885, %v4190
        %v4192 = vpop.f32.mrb[0].mxu0
        %v4193 = vadd.f32 %v3889, %v4192
        %4194 = vmatprep.mubr.bf16.mxu0 %v3782
        %4195 = vmatmul.mubr.bf16.gmra.mrb[0].mxu0 %v3781
        %v4196 = vpop.f32.mrb[0].mxu0
        %v4197 = vadd.f32 %v3885, %v4196
        %v4198 = vpop.f32.mrb[0].mxu0
        %v4199 = vadd.f32 %v3889, %v4198
        %v4200 = vpop.f32.mrb[0].mxu0
        %v4201 = vadd.f32 %v3885, %v4200
        %v4202 = vpop.f32.mrb[0].mxu0
        %v4203 = vadd.f32 %v3889, %v4202
        %4204 = vmatprep.mubr.bf16.mxu0 %v3785
        %4205 = vmatmul.mubr.bf16.gmra.mrb[0].mxu0 %v3784
        %v4206 = vpop.f32.mrb[0].mxu0
        %v4207 = vadd.f32 %v3885, %v4206
        %v4208 = vpop.f32.mrb[0].mxu0
        %v4209 = vadd.f32 %v3889, %v4208
        %v4210 = vpop.f32.mrb[0].mxu0
        %v4211 = vadd.f32 %v3885, %v4210
        %v4212 = vpop.f32.mrb[0].mxu0
        %v4213 = vadd.f32 %v3889, %v4212
        %4214 = vmatprep.mubr.bf16.mxu0 %v3788
        %4215 = vmatmul.mubr.bf16.gmra.mrb[0].mxu0 %v3787
        %v4216 = vpop.f32.mrb[0].mxu0
        %v4217 = vadd.f32 %v3885, %v4216
        %v4218 = vpop.f32.mrb[0].mxu0
        %v4219 = vadd.f32 %v3889, %v4218
        %v4220 = vpop.f32.mrb[0].mxu0
        %v4221 = vadd.f32 %v3885, %v4220
        %v4222 = vpop.f32.mrb[0].mxu0
        %v4223 = vadd.f32 %v3889, %v4222
        %4224 = vmatprep.mubr.bf16.mxu0 %v3791
        %4225 = vmatmul.mubr.bf16.gmra.mrb[0].mxu0 %v3790
        %v4226 = vpop.f32.mrb[0].mxu0
        %v4227 = vadd.f32 %v3885, %v4226
        %v4228 = vpop.f32.mrb[0].mxu0
        %v4229 = vadd.f32 %v3889, %v4228
        %v4230 = vpop.f32.mrb[0].mxu0
        %v4231 = vadd.f32 %v3885, %v4230
        %v4232 = vpop.f32.mrb[0].mxu0
        %v4233 = vadd.f32 %v3889, %v4232
        %4234 = vmatprep.mubr.bf16.mxu0 %v3794
        %4235 = vmatmul.mubr.bf16.gmra.mrb[0].mxu0 %v3793
        %v4236 = vpop.f32.mrb[0].mxu0
        %v4237 = vadd.f32 %v3885, %v4236
        %v4238 = vpop.f32.mrb[0].mxu0
        %v4239 = vadd.f32 %v3889, %v4238
        %v4240 = vpop.f32.mrb[0].mxu0
        %v4241 = vadd.f32 %v3885, %v4240
        %v4242 = vpop.f32.mrb[0].mxu0
        %v4243 = vadd.f32 %v3889, %v4242
        %4244 = vmatprep.mubr.bf16.mxu0 %v3797
        %4245 = vmatmul.mubr.bf16.gmra.mrb[0].mxu0 %v3796
        %v4246 = vpop.f32.mrb[0].mxu0
        %v4247 = vadd.f32 %v3885, %v4246
        %v4248 = vpop.f32.mrb[0].mxu0
        %v4249 = vadd.f32 %v3889, %v4248
        %v4250 = vpop.f32.mrb[0].mxu0
        %v4251 = vadd.f32 %v3885, %v4250
        %v4252 = vpop.f32.mrb[0].mxu0
        %v4253 = vadd.f32 %v3889, %v4252
        %4254 = vmatprep.mubr.bf16.mxu0 %v3800
        %4255 = vmatmul.mubr.bf16.gmra.mrb[0].mxu0 %v3799
        %v4256 = vpop.f32.mrb[0].mxu0
        %v4257 = vadd.f32 %v3885, %v4256
        %v4258 = vpop.f32.mrb[0].mxu0
        %v4259 = vadd.f32 %v3889, %v4258
        %v4260 = vpop.f32.mrb[0].mxu0
        %v4261 = vadd.f32 %v3885, %v4260
        %v4262 = vpop.f32.mrb[0].mxu0
        %v4263 = vadd.f32 %v3889, %v4262
        %4264 = vmatprep.mubr.bf16.mxu0 %v3803
        %4265 = vmatmul.mubr.bf16.gmra.mrb[0].mxu0 %v3802
        %v4266 = vpop.f32.mrb[0].mxu0
        %v4267 = vadd.f32 %v3885, %v4266
        %v4268 = vpop.f32.mrb[0].mxu0
        %v4269 = vadd.f32 %v3889, %v4268
        %v4270 = vpop.f32.mrb[0].mxu0
        %v4271 = vadd.f32 %v3885, %v4270
        %v4272 = vpop.f32.mrb[0].mxu0
        %v4273 = vadd.f32 %v3889, %v4272
        %4274 = vmatprep.mubr.bf16.mxu0 %v3806
        %4275 = vmatmul.mubr.bf16.gmra.mrb[0].mxu0 %v3805
        %v4276 = vpop.f32.mrb[0].mxu0
        %v4277 = vadd.f32 %v3885, %v4276
        %v4278 = vpop.f32.mrb[0].mxu0
        %v4279 = vadd.f32 %v3889, %v4278
        %v4280 = vpop.f32.mrb[0].mxu0
        %v4281 = vadd.f32 %v3885, %v4280
        %v4282 = vpop.f32.mrb[0].mxu0
        %v4283 = vadd.f32 %v3889, %v4282
        %4284 = vmatprep.mubr.bf16.mxu0 %v3809
        %4285 = vmatmul.mubr.bf16.gmra.mrb[0].mxu0 %v3808
        %v4286 = vpop.f32.mrb[0].mxu0
        %v4287 = vadd.f32 %v3885, %v4286
        %v4288 = vpop.f32.mrb[0].mxu0
        %v4289 = vadd.f32 %v3889, %v4288
        %v4290 = vpop.f32.mrb[0].mxu0
        %v4291 = vadd.f32 %v3885, %v4290
        %v4292 = vpop.f32.mrb[0].mxu0
        %v4293 = vadd.f32 %v3889, %v4292
        %4294 = vmatprep.mubr.bf16.mxu0 %v3812
        %4295 = vmatmul.mubr.bf16.gmra.mrb[0].mxu0 %v3811
        %v4296 = vpop.f32.mrb[0].mxu0
        %v4297 = vadd.f32 %v3885, %v4296
        %v4298 = vpop.f32.mrb[0].mxu0
        %v4299 = vadd.f32 %v3889, %v4298
        %v4300 = vpop.f32.mrb[0].mxu0
        %v4301 = vadd.f32 %v3885, %v4300
        %v4302 = vpop.f32.mrb[0].mxu0
        %v4303 = vadd.f32 %v3889, %v4302
        %4304 = vmatprep.mubr.bf16.mxu0 %v3815
        %4305 = vmatmul.mubr.bf16.gmra.mrb[0].mxu0 %v3814
        %v4306 = vpop.f32.mrb[0].mxu0
        %v4307 = vadd.f32 %v3885, %v4306
        %v4308 = vpop.f32.mrb[0].mxu0
        %v4309 = vadd.f32 %v3889, %v4308
        %v4310 = vpop.f32.mrb[0].mxu0
        %v4311 = vadd.f32 %v3885, %v4310
        %v4312 = vpop.f32.mrb[0].mxu0
        %v4313 = vadd.f32 %v3889, %v4312
        %4314 = vmatprep.mubr.bf16.mxu0 %v3818
        %4315 = vmatmul.mubr.bf16.gmra.mrb[0].mxu0 %v3817
        %v4316 = vpop.f32.mrb[0].mxu0
        %v4317 = vadd.f32 %v3885, %v4316
        %v4318 = vpop.f32.mrb[0].mxu0
        %v4319 = vadd.f32 %v3889, %v4318
        %v4320 = vpop.f32.mrb[0].mxu0
        %v4321 = vadd.f32 %v3885, %v4320
        %v4322 = vpop.f32.mrb[0].mxu0
        %v4323 = vadd.f32 %v3889, %v4322
        %4324 = vmatprep.mubr.bf16.mxu0 %v3821
        %4325 = vmatmul.mubr.bf16.gmra.mrb[0].mxu0 %v3820
        %v4326 = vpop.f32.mrb[0].mxu0
        %v4327 = vadd.f32 %v3885, %v4326
        %v4328 = vpop.f32.mrb[0].mxu0
        %v4329 = vadd.f32 %v3889, %v4328
        %v4330 = vpop.f32.mrb[0].mxu0
        %v4331 = vadd.f32 %v3885, %v4330
        %v4332 = vpop.f32.mrb[0].mxu0
        %v4333 = vadd.f32 %v3889, %v4332
        %4334 = vmatprep.mubr.bf16.mxu0 %v3824
        %4335 = vmatmul.mubr.bf16.gmra.mrb[0].mxu0 %v3823
        %v4336 = vpop.f32.mrb[0].mxu0
        %v4337 = vadd.f32 %v3885, %v4336
        %v4338 = vpop.f32.mrb[0].mxu0
        %v4339 = vadd.f32 %v3889, %v4338
        %v4340 = vpop.f32.mrb[0].mxu0
        %v4341 = vadd.f32 %v3885, %v4340
        %v4342 = vpop.f32.mrb[0].mxu0
        %v4343 = vadd.f32 %v3889, %v4342
        %4344 = vmatprep.mubr.bf16.mxu0 %v3827
        %4345 = vmatmul.mubr.bf16.gmra.mrb[0].mxu0 %v3826
        %v4346 = vpop.f32.mrb[0].mxu0
        %v4347 = vadd.f32 %v3885, %v4346
        %v4348 = vpop.f32.mrb[0].mxu0
        %v4349 = vadd.f32 %v3889, %v4348
        %v4350 = vpop.f32.mrb[0].mxu0
        %v4351 = vadd.f32 %v3885, %v4350
        %v4352 = vpop.f32.mrb[0].mxu0
        %v4353 = vadd.f32 %v3889, %v4352
        %4354 = vmatprep.mubr.bf16.mxu0 %v3830
        %4355 = vmatmul.mubr.bf16.gmra.mrb[0].mxu0 %v3829
        %v4356 = vpop.f32.mrb[0].mxu0
        %v4357 = vadd.f32 %v3885, %v4356
        %v4358 = vpop.f32.mrb[0].mxu0
        %v4359 = vadd.f32 %v3889, %v4358
        %v4360 = vpop.f32.mrb[0].mxu0
        %v4361 = vadd.f32 %v3885, %v4360
        %v4362 = vpop.f32.mrb[0].mxu0
        %v4363 = vadd.f32 %v3889, %v4362
        %4364 = vdwg.mxu0
        %4365 = vmatprep.subr.bf16.mxu0 %v4069
        %4366 = vmatpush1.bf16.msra.mxu0 %v4068
        %4367 = vmatprep.subr.bf16.mxu0 %v4071
        %4368 = vmatpush1.bf16.msra.mxu0 %v4070
        %4369 = vmatprep.subr.bf16.mxu0 %v4073
        %4370 = vmatpush1.bf16.msra.mxu0 %v4072
        %4371 = vmatprep.subr.bf16.mxu0 %v4075
        %4372 = vmatpush1.bf16.msra.mxu0 %v4074
        %4373 = vmatprep.subr.bf16.mxu0 %v4077
        %4374 = vmatpush1.bf16.msra.mxu0 %v4076
        %4375 = vmatprep.subr.bf16.mxu0 %v4079
        %4376 = vmatpush1.bf16.msra.mxu0 %v4078
        %4377 = vmatprep.subr.bf16.mxu0 %v4081
        %4378 = vmatpush1.bf16.msra.mxu0 %v4080
        %4379 = vmatprep.subr.bf16.mxu0 %v4083
        %4380 = vmatpush1.bf16.msra.mxu0 %v4082
        %4381 = vmatprep.subr.bf16.mxu0 0
        %4382 = vmatpush1.bf16.msra.mxu0 0
        %4383 = vmatprep.subr.bf16.mxu0 0
        %4384 = vmatpush1.bf16.msra.mxu0 0
        %4385 = vmatprep.subr.bf16.mxu0 0
        %4386 = vmatpush1.bf16.msra.mxu0 0
        %4387 = vmatprep.subr.bf16.mxu0 0
        %4388 = vmatpush1.bf16.msra.mxu0 0
        %4389 = vmatprep.subr.bf16.mxu0 0
        %4390 = vmatpush1.bf16.msra.mxu0 0
        %4391 = vmatprep.subr.bf16.mxu0 0
        %4392 = vmatpush1.bf16.msra.mxu0 0
        %4393 = vmatprep.subr.bf16.mxu0 0
        %4394 = vmatpush1.bf16.msra.mxu0 0
        %4395 = vmatprep.subr.bf16.mxu0 0
        %4396 = vmatpush1.bf16.msra.mxu0 0
        %4397 = vmatprep.mubr.bf16.mxu0 0
        %4398 = vmatmul.mubr.bf16.gmra.mrb[0].mxu0 %v3774
        %v4399 = vpop.f32.mrb[0].mxu0
        %v4400 = vadd.f32 %v4167, %v4399
        %v4401 = vpop.f32.mrb[0].mxu0
        %v4402 = vadd.f32 %v4169, %v4401
        %v4403 = vpop.f32.mrb[0].mxu0
        %v4404 = vadd.f32 %v4171, %v4403
        %v4405 = vpop.f32.mrb[0].mxu0
        %v4406 = vadd.f32 %v4173, %v4405
        %4407 = vmatprep.mubr.bf16.mxu0 0
        %4408 = vmatmul.mubr.bf16.gmra.mrb[0].mxu0 %v3777
        %v4409 = vpop.f32.mrb[0].mxu0
        %v4410 = vadd.f32 %v4177, %v4409
        %v4411 = vpop.f32.mrb[0].mxu0
        %v4412 = vadd.f32 %v4179, %v4411
        %v4413 = vpop.f32.mrb[0].mxu0
        %v4414 = vadd.f32 %v4181, %v4413
        %v4415 = vpop.f32.mrb[0].mxu0
        %v4416 = vadd.f32 %v4183, %v4415
        %4417 = vmatprep.mubr.bf16.mxu0 0
        %4418 = vmatmul.mubr.bf16.gmra.mrb[0].mxu0 %v3780
        %v4419 = vpop.f32.mrb[0].mxu0
        %v4420 = vadd.f32 %v4187, %v4419
        %v4421 = vpop.f32.mrb[0].mxu0
        %v4422 = vadd.f32 %v4189, %v4421
        %v4423 = vpop.f32.mrb[0].mxu0
        %v4424 = vadd.f32 %v4191, %v4423
        %v4425 = vpop.f32.mrb[0].mxu0
        %v4426 = vadd.f32 %v4193, %v4425
        %4427 = vmatprep.mubr.bf16.mxu0 0
        %4428 = vmatmul.mubr.bf16.gmra.mrb[0].mxu0 %v3783
        %v4429 = vpop.f32.mrb[0].mxu0
        %v4430 = vadd.f32 %v4197, %v4429
        %v4431 = vpop.f32.mrb[0].mxu0
        %v4432 = vadd.f32 %v4199, %v4431
        %v4433 = vpop.f32.mrb[0].mxu0
        %v4434 = vadd.f32 %v4201, %v4433
        %v4435 = vpop.f32.mrb[0].mxu0
        %v4436 = vadd.f32 %v4203, %v4435
        %4437 = vmatprep.mubr.bf16.mxu0 0
        %4438 = vmatmul.mubr.bf16.gmra.mrb[0].mxu0 %v3786
        %v4439 = vpop.f32.mrb[0].mxu0
        %v4440 = vadd.f32 %v4207, %v4439
        %v4441 = vpop.f32.mrb[0].mxu0
        %v4442 = vadd.f32 %v4209, %v4441
        %v4443 = vpop.f32.mrb[0].mxu0
        %v4444 = vadd.f32 %v4211, %v4443
        %v4445 = vpop.f32.mrb[0].mxu0
        %v4446 = vadd.f32 %v4213, %v4445
        %4447 = vmatprep.mubr.bf16.mxu0 0
        %4448 = vmatmul.mubr.bf16.gmra.mrb[0].mxu0 %v3789
        %v4449 = vpop.f32.mrb[0].mxu0
        %v4450 = vadd.f32 %v4217, %v4449
        %v4451 = vpop.f32.mrb[0].mxu0
        %v4452 = vadd.f32 %v4219, %v4451
        %v4453 = vpop.f32.mrb[0].mxu0
        %v4454 = vadd.f32 %v4221, %v4453
        %v4455 = vpop.f32.mrb[0].mxu0
        %v4456 = vadd.f32 %v4223, %v4455
        %4457 = vmatprep.mubr.bf16.mxu0 0
        %4458 = vmatmul.mubr.bf16.gmra.mrb[0].mxu0 %v3792
        %v4459 = vpop.f32.mrb[0].mxu0
        %v4460 = vadd.f32 %v4227, %v4459
        %v4461 = vpop.f32.mrb[0].mxu0
        %v4462 = vadd.f32 %v4229, %v4461
        %v4463 = vpop.f32.mrb[0].mxu0
        %v4464 = vadd.f32 %v4231, %v4463
        %v4465 = vpop.f32.mrb[0].mxu0
        %v4466 = vadd.f32 %v4233, %v4465
        %4467 = vmatprep.mubr.bf16.mxu0 0
        %4468 = vmatmul.mubr.bf16.gmra.mrb[0].mxu0 %v3795
        %v4469 = vpop.f32.mrb[0].mxu0
        %v4470 = vadd.f32 %v4237, %v4469
        %v4471 = vpop.f32.mrb[0].mxu0
        %v4472 = vadd.f32 %v4239, %v4471
        %v4473 = vpop.f32.mrb[0].mxu0
        %v4474 = vadd.f32 %v4241, %v4473
        %v4475 = vpop.f32.mrb[0].mxu0
        %v4476 = vadd.f32 %v4243, %v4475
        %4477 = vmatprep.mubr.bf16.mxu0 0
        %4478 = vmatmul.mubr.bf16.gmra.mrb[0].mxu0 %v3798
        %v4479 = vpop.f32.mrb[0].mxu0
        %v4480 = vadd.f32 %v4247, %v4479
        %v4481 = vpop.f32.mrb[0].mxu0
        %v4482 = vadd.f32 %v4249, %v4481
        %v4483 = vpop.f32.mrb[0].mxu0
        %v4484 = vadd.f32 %v4251, %v4483
        %v4485 = vpop.f32.mrb[0].mxu0
        %v4486 = vadd.f32 %v4253, %v4485
        %4487 = vmatprep.mubr.bf16.mxu0 0
        %4488 = vmatmul.mubr.bf16.gmra.mrb[0].mxu0 %v3801
        %v4489 = vpop.f32.mrb[0].mxu0
        %v4490 = vadd.f32 %v4257, %v4489
        %v4491 = vpop.f32.mrb[0].mxu0
        %v4492 = vadd.f32 %v4259, %v4491
        %v4493 = vpop.f32.mrb[0].mxu0
        %v4494 = vadd.f32 %v4261, %v4493
        %v4495 = vpop.f32.mrb[0].mxu0
        %v4496 = vadd.f32 %v4263, %v4495
        %4497 = vmatprep.mubr.bf16.mxu0 0
        %4498 = vmatmul.mubr.bf16.gmra.mrb[0].mxu0 %v3804
        %v4499 = vpop.f32.mrb[0].mxu0
        %v4500 = vadd.f32 %v4267, %v4499
        %v4501 = vpop.f32.mrb[0].mxu0
        %v4502 = vadd.f32 %v4269, %v4501
        %v4503 = vpop.f32.mrb[0].mxu0
        %v4504 = vadd.f32 %v4271, %v4503
        %v4505 = vpop.f32.mrb[0].mxu0
        %v4506 = vadd.f32 %v4273, %v4505
        %4507 = vmatprep.mubr.bf16.mxu0 0
        %4508 = vmatmul.mubr.bf16.gmra.mrb[0].mxu0 %v3807
        %v4509 = vpop.f32.mrb[0].mxu0
        %v4510 = vadd.f32 %v4277, %v4509
        %v4511 = vpop.f32.mrb[0].mxu0
        %v4512 = vadd.f32 %v4279, %v4511
        %v4513 = vpop.f32.mrb[0].mxu0
        %v4514 = vadd.f32 %v4281, %v4513
        %v4515 = vpop.f32.mrb[0].mxu0
        %v4516 = vadd.f32 %v4283, %v4515
        %4517 = vmatprep.mubr.bf16.mxu0 0
        %4518 = vmatmul.mubr.bf16.gmra.mrb[0].mxu0 %v3810
        %v4519 = vpop.f32.mrb[0].mxu0
        %v4520 = vadd.f32 %v4287, %v4519
        %v4521 = vpop.f32.mrb[0].mxu0
        %v4522 = vadd.f32 %v4289, %v4521
        %v4523 = vpop.f32.mrb[0].mxu0
        %v4524 = vadd.f32 %v4291, %v4523
        %v4525 = vpop.f32.mrb[0].mxu0
        %v4526 = vadd.f32 %v4293, %v4525
        %4527 = vmatprep.mubr.bf16.mxu0 0
        %4528 = vmatmul.mubr.bf16.gmra.mrb[0].mxu0 %v3813
        %v4529 = vpop.f32.mrb[0].mxu0
        %v4530 = vadd.f32 %v4297, %v4529
        %v4531 = vpop.f32.mrb[0].mxu0
        %v4532 = vadd.f32 %v4299, %v4531
        %v4533 = vpop.f32.mrb[0].mxu0
        %v4534 = vadd.f32 %v4301, %v4533
        %v4535 = vpop.f32.mrb[0].mxu0
        %v4536 = vadd.f32 %v4303, %v4535
        %4537 = vmatprep.mubr.bf16.mxu0 0
        %4538 = vmatmul.mubr.bf16.gmra.mrb[0].mxu0 %v3816
        %v4539 = vpop.f32.mrb[0].mxu0
        %v4540 = vadd.f32 %v4307, %v4539
        %v4541 = vpop.f32.mrb[0].mxu0
        %v4542 = vadd.f32 %v4309, %v4541
        %v4543 = vpop.f32.mrb[0].mxu0
        %v4544 = vadd.f32 %v4311, %v4543
        %v4545 = vpop.f32.mrb[0].mxu0
        %v4546 = vadd.f32 %v4313, %v4545
        %4547 = vmatprep.mubr.bf16.mxu0 0
        %4548 = vmatmul.mubr.bf16.gmra.mrb[0].mxu0 %v3819
        %v4549 = vpop.f32.mrb[0].mxu0
        %v4550 = vadd.f32 %v4317, %v4549
        %v4551 = vpop.f32.mrb[0].mxu0
        %v4552 = vadd.f32 %v4319, %v4551
        %v4553 = vpop.f32.mrb[0].mxu0
        %v4554 = vadd.f32 %v4321, %v4553
        %v4555 = vpop.f32.mrb[0].mxu0
        %v4556 = vadd.f32 %v4323, %v4555
        %4557 = vmatprep.mubr.bf16.mxu0 0
        %4558 = vmatmul.mubr.bf16.gmra.mrb[0].mxu0 %v3822
        %v4559 = vpop.f32.mrb[0].mxu0
        %v4560 = vadd.f32 %v4327, %v4559
        %v4561 = vpop.f32.mrb[0].mxu0
        %v4562 = vadd.f32 %v4329, %v4561
        %v4563 = vpop.f32.mrb[0].mxu0
        %v4564 = vadd.f32 %v4331, %v4563
        %v4565 = vpop.f32.mrb[0].mxu0
        %v4566 = vadd.f32 %v4333, %v4565
        %4567 = vmatprep.mubr.bf16.mxu0 0
        %4568 = vmatmul.mubr.bf16.gmra.mrb[0].mxu0 %v3825
        %v4569 = vpop.f32.mrb[0].mxu0
        %v4570 = vadd.f32 %v4337, %v4569
        %v4571 = vpop.f32.mrb[0].mxu0
        %v4572 = vadd.f32 %v4339, %v4571
        %v4573 = vpop.f32.mrb[0].mxu0
        %v4574 = vadd.f32 %v4341, %v4573
        %v4575 = vpop.f32.mrb[0].mxu0
        %v4576 = vadd.f32 %v4343, %v4575
        %4577 = vmatprep.mubr.bf16.mxu0 0
        %4578 = vmatmul.mubr.bf16.gmra.mrb[0].mxu0 %v3828
        %v4579 = vpop.f32.mrb[0].mxu0
        %v4580 = vadd.f32 %v4347, %v4579
        %v4581 = vpop.f32.mrb[0].mxu0
        %v4582 = vadd.f32 %v4349, %v4581
        %v4583 = vpop.f32.mrb[0].mxu0
        %v4584 = vadd.f32 %v4351, %v4583
        %v4585 = vpop.f32.mrb[0].mxu0
        %v4586 = vadd.f32 %v4353, %v4585
        %4587 = vmatprep.mubr.bf16.mxu0 0
        %4588 = vmatmul.mubr.bf16.gmra.mrb[0].mxu0 %v3831
        %v4589 = vpop.f32.mrb[0].mxu0
        %v4590 = vadd.f32 %v4357, %v4589
        %v4591 = vpop.f32.mrb[0].mxu0
        %v4592 = vadd.f32 %v4359, %v4591
        %v4593 = vpop.f32.mrb[0].mxu0
        %v4594 = vadd.f32 %v4361, %v4593
        %v4595 = vpop.f32.mrb[0].mxu0
        %v4596 = vadd.f32 %v4363, %v4595
        %4597 = vdwg.mxu0
        %v4598 = vmax.f32 %v4400, 0.0
        %v4599 = vmax.f32 %v4402, 0.0
        %v4600 = vmax.f32 %v4404, 0.0
        %v4601 = vmax.f32 %v4406, 0.0
        %v4602 = vmax.f32 %v4410, 0.0
        %v4603 = vmax.f32 %v4412, 0.0
        %v4604 = vmax.f32 %v4414, 0.0
        %v4605 = vmax.f32 %v4416, 0.0
        %v4606 = vmax.f32 %v4420, 0.0
        %v4607 = vmax.f32 %v4422, 0.0
        %v4608 = vmax.f32 %v4424, 0.0
        %v4609 = vmax.f32 %v4426, 0.0
        %v4610 = vmax.f32 %v4430, 0.0
        %v4611 = vmax.f32 %v4432, 0.0
        %v4612 = vmax.f32 %v4434, 0.0
        %v4613 = vmax.f32 %v4436, 0.0
        %v4614 = vmax.f32 %v4440, 0.0
        %v4615 = vmax.f32 %v4442, 0.0
        %v4616 = vmax.f32 %v4444, 0.0
        %v4617 = vmax.f32 %v4446, 0.0
        %v4618 = vmax.f32 %v4450, 0.0
        %v4619 = vmax.f32 %v4452, 0.0
        %v4620 = vmax.f32 %v4454, 0.0
        %v4621 = vmax.f32 %v4456, 0.0
        %v4622 = vmax.f32 %v4460, 0.0
        %v4623 = vmax.f32 %v4462, 0.0
        %v4624 = vmax.f32 %v4464, 0.0
        %v4625 = vmax.f32 %v4466, 0.0
        %v4626 = vmax.f32 %v4470, 0.0
        %v4627 = vmax.f32 %v4472, 0.0
        %v4628 = vmax.f32 %v4474, 0.0
        %v4629 = vmax.f32 %v4476, 0.0
        %v4630 = vmax.f32 %v4480, 0.0
        %v4631 = vmax.f32 %v4482, 0.0
        %v4632 = vmax.f32 %v4484, 0.0
        %v4633 = vmax.f32 %v4486, 0.0
        %v4634 = vmax.f32 %v4490, 0.0
        %v4635 = vmax.f32 %v4492, 0.0
        %v4636 = vmax.f32 %v4494, 0.0
        %v4637 = vmax.f32 %v4496, 0.0
        %v4638 = vmax.f32 %v4500, 0.0
        %v4639 = vmax.f32 %v4502, 0.0
        %v4640 = vmax.f32 %v4504, 0.0
        %v4641 = vmax.f32 %v4506, 0.0
        %v4642 = vmax.f32 %v4510, 0.0
        %v4643 = vmax.f32 %v4512, 0.0
        %v4644 = vmax.f32 %v4514, 0.0
        %v4645 = vmax.f32 %v4516, 0.0
        %v4646 = vmax.f32 %v4520, 0.0
        %v4647 = vmax.f32 %v4522, 0.0
        %v4648 = vmax.f32 %v4524, 0.0
        %v4649 = vmax.f32 %v4526, 0.0
        %v4650 = vmax.f32 %v4530, 0.0
        %v4651 = vmax.f32 %v4532, 0.0
        %v4652 = vmax.f32 %v4534, 0.0
        %v4653 = vmax.f32 %v4536, 0.0
        %v4654 = vmax.f32 %v4540, 0.0
        %v4655 = vmax.f32 %v4542, 0.0
        %v4656 = vmax.f32 %v4544, 0.0
        %v4657 = vmax.f32 %v4546, 0.0
        %v4658 = vmax.f32 %v4550, 0.0
        %v4659 = vmax.f32 %v4552, 0.0
        %v4660 = vmax.f32 %v4554, 0.0
        %v4661 = vmax.f32 %v4556, 0.0
        %v4662 = vmax.f32 %v4560, 0.0
        %v4663 = vmax.f32 %v4562, 0.0
        %v4664 = vmax.f32 %v4564, 0.0
        %v4665 = vmax.f32 %v4566, 0.0
        %v4666 = vmax.f32 %v4570, 0.0
        %v4667 = vmax.f32 %v4572, 0.0
        %v4668 = vmax.f32 %v4574, 0.0
        %v4669 = vmax.f32 %v4576, 0.0
        %v4670 = vmax.f32 %v4580, 0.0
        %v4671 = vmax.f32 %v4582, 0.0
        %v4672 = vmax.f32 %v4584, 0.0
        %v4673 = vmax.f32 %v4586, 0.0
        %v4674 = vmax.f32 %v4590, 0.0
        %v4675 = vmax.f32 %v4592, 0.0
        %v4676 = vmax.f32 %v4594, 0.0
        %v4677 = vmax.f32 %v4596, 0.0
        %v4678 = vmax.f32 %v4598, %v4599
        %v4679 = vmax.f32 %v4600, %v4601
        %v4680 = vmax.f32 %v4602, %v4603
        %v4681 = vmax.f32 %v4604, %v4605
        %v4682 = vmax.f32 %v4606, %v4607
        %v4683 = vmax.f32 %v4608, %v4609
        %v4684 = vmax.f32 %v4610, %v4611
        %v4685 = vmax.f32 %v4612, %v4613
        %v4686 = vmax.f32 %v4614, %v4615
        %v4687 = vmax.f32 %v4616, %v4617
        %v4688 = vmax.f32 %v4618, %v4619
        %v4689 = vmax.f32 %v4620, %v4621
        %v4690 = vmax.f32 %v4622, %v4623
        %v4691 = vmax.f32 %v4624, %v4625
        %v4692 = vmax.f32 %v4626, %v4627
        %v4693 = vmax.f32 %v4628, %v4629
        %v4694 = vmax.f32 %v4630, %v4631
        %v4695 = vmax.f32 %v4632, %v4633
        %v4696 = vmax.f32 %v4634, %v4635
        %v4697 = vmax.f32 %v4636, %v4637
        %v4698 = vmax.f32 %v4638, %v4639
        %v4699 = vmax.f32 %v4640, %v4641
        %v4700 = vmax.f32 %v4642, %v4643
        %v4701 = vmax.f32 %v4644, %v4645
        %v4702 = vmax.f32 %v4646, %v4647
        %v4703 = vmax.f32 %v4648, %v4649
        %v4704 = vmax.f32 %v4650, %v4651
        %v4705 = vmax.f32 %v4652, %v4653
        %v4706 = vmax.f32 %v4654, %v4655
        %v4707 = vmax.f32 %v4656, %v4657
        %v4708 = vmax.f32 %v4658, %v4659
        %v4709 = vmax.f32 %v4660, %v4661
        %v4710 = vmax.f32 %v4662, %v4663
        %v4711 = vmax.f32 %v4664, %v4665
        %v4712 = vmax.f32 %v4666, %v4667
        %v4713 = vmax.f32 %v4668, %v4669
        %v4714 = vmax.f32 %v4670, %v4671
        %v4715 = vmax.f32 %v4672, %v4673
        %v4716 = vmax.f32 %v4674, %v4675
        %v4717 = vmax.f32 %v4676, %v4677
        %4718 = vst [vmem:[#allocation7] sm:$0xff] %v4678
        %4719 = vst [vmem:[#allocation7 + $0x8] sm:$0xff] %v4679
        %4720 = vst [vmem:[#allocation7 + $0x10] sm:$0xff] %v4680
        %4721 = vst [vmem:[#allocation7 + $0x18] sm:$0xff] %v4681
        %4722 = vst [vmem:[#allocation7 + $0x20] sm:$0xff] %v4682
        %4723 = vst [vmem:[#allocation7 + $0x28] sm:$0xff] %v4683
        %4724 = vst [vmem:[#allocation7 + $0x30] sm:$0xff] %v4684
        %4725 = vst [vmem:[#allocation7 + $0x38] sm:$0xff] %v4685
        %4726 = vst [vmem:[#allocation7 + $0x40] sm:$0xff] %v4686
        %4727 = vst [vmem:[#allocation7 + $0x48] sm:$0xff] %v4687
        %4728 = vst [vmem:[#allocation7 + $0x50] sm:$0xff] %v4688
        %4729 = vst [vmem:[#allocation7 + $0x58] sm:$0xff] %v4689
        %4730 = vst [vmem:[#allocation7 + $0x60] sm:$0xff] %v4690
        %4731 = vst [vmem:[#allocation7 + $0x68] sm:$0xff] %v4691
        %4732 = vst [vmem:[#allocation7 + $0x70] sm:$0xff] %v4692
        %4733 = vst [vmem:[#allocation7 + $0x78] sm:$0xff] %v4693
        %4734 = vst [vmem:[#allocation7 + $0x80] sm:$0xff] %v4694
        %4735 = vst [vmem:[#allocation7 + $0x88] sm:$0xff] %v4695
        %4736 = vst [vmem:[#allocation7 + $0x90] sm:$0xff] %v4696
        %4737 = vst [vmem:[#allocation7 + $0x98] sm:$0xff] %v4697
        %4738 = vst [vmem:[#allocation7 + $0xa0] sm:$0xff] %v4698
        %4739 = vst [vmem:[#allocation7 + $0xa8] sm:$0xff] %v4699
        %4740 = vst [vmem:[#allocation7 + $0xb0] sm:$0xff] %v4700
        %4741 = vst [vmem:[#allocation7 + $0xb8] sm:$0xff] %v4701
        %4742 = vst [vmem:[#allocation7 + $0xc0] sm:$0xff] %v4702
        %4743 = vst [vmem:[#allocation7 + $0xc8] sm:$0xff] %v4703
        %4744 = vst [vmem:[#allocation7 + $0xd0] sm:$0xff] %v4704
        %4745 = vst [vmem:[#allocation7 + $0xd8] sm:$0xff] %v4705
        %4746 = vst [vmem:[#allocation7 + $0xe0] sm:$0xff] %v4706
        %4747 = vst [vmem:[#allocation7 + $0xe8] sm:$0xff] %v4707
        %4748 = vst [vmem:[#allocation7 + $0xf0] sm:$0xff] %v4708
        %4749 = vst [vmem:[#allocation7 + $0xf8] sm:$0xff] %v4709
        %4750 = vst [vmem:[#allocation7 + $0x100] sm:$0xff] %v4710
        %4751 = vst [vmem:[#allocation7 + $0x108] sm:$0xff] %v4711
        %4752 = vst [vmem:[#allocation7 + $0x110] sm:$0xff] %v4712
        %4753 = vst [vmem:[#allocation7 + $0x118] sm:$0xff] %v4713
        %4754 = vst [vmem:[#allocation7 + $0x120] sm:$0xff] %v4714
        %4755 = vst [vmem:[#allocation7 + $0x128] sm:$0xff] %v4715
        %4756 = vst [vmem:[#allocation7 + $0x130] sm:$0xff] %v4716
        %4757 = vst [vmem:[#allocation7 + $0x138] sm:$0xff] %v4717
        %s4758 = scalar_lea.vmem [#allocation7], 1
        %v4759 = vld [vmem:[%s4758] ss:$10 sm:$0xff]
        %s4760 = scalar_lea.vmem [#allocation7], 81
        %v4761 = vld [vmem:[%s4760] ss:$10 sm:$0xff]
        %s4762 = scalar_lea.vmem [#allocation7], 161
        %v4763 = vld [vmem:[%s4762] ss:$10 sm:$0xff]
        %s4764 = scalar_lea.vmem [#allocation7], 241
        %v4765 = vld [vmem:[%s4764] ss:$10 sm:$0xff]
        %s4766 = scalar_lea.vmem [#allocation7], 3
        %v4767 = vld [vmem:[%s4766] ss:$10 sm:$0xff]
        %s4768 = scalar_lea.vmem [#allocation7], 83
        %v4769 = vld [vmem:[%s4768] ss:$10 sm:$0xff]
        %s4770 = scalar_lea.vmem [#allocation7], 163
        %v4771 = vld [vmem:[%s4770] ss:$10 sm:$0xff]
        %s4772 = scalar_lea.vmem [#allocation7], 243
        %v4773 = vld [vmem:[%s4772] ss:$10 sm:$0xff]
        %s4774 = scalar_lea.vmem [#allocation7], 5
        %v4775 = vld [vmem:[%s4774] ss:$10 sm:$0xff]
        %s4776 = scalar_lea.vmem [#allocation7], 85
        %v4777 = vld [vmem:[%s4776] ss:$10 sm:$0xff]
        %s4778 = scalar_lea.vmem [#allocation7], 165
        %v4779 = vld [vmem:[%s4778] ss:$10 sm:$0xff]
        %s4780 = scalar_lea.vmem [#allocation7], 245
        %v4781 = vld [vmem:[%s4780] ss:$10 sm:$0xff]
        %s4782 = scalar_lea.vmem [#allocation7], 7
        %v4783 = vld [vmem:[%s4782] ss:$10 sm:$0xff]
        %s4784 = scalar_lea.vmem [#allocation7], 87
        %v4785 = vld [vmem:[%s4784] ss:$10 sm:$0xff]
        %s4786 = scalar_lea.vmem [#allocation7], 167
        %v4787 = vld [vmem:[%s4786] ss:$10 sm:$0xff]
        %s4788 = scalar_lea.vmem [#allocation7], 247
        %v4789 = vld [vmem:[%s4788] ss:$10 sm:$0xff]
        %v4790 = vmax.f32 %v4759, %v4767
        %v4791 = vmax.f32 %v4761, %v4769
        %v4792 = vmax.f32 %v4763, %v4771
        %v4793 = vmax.f32 %v4765, %v4773
        %v4794 = vpack.c.bf16 %v4791, %v4790
        %v4795 = vpack.c.bf16 %v4793, %v4792
        %v4796 = vmax.f32 %v4775, %v4783
        %v4797 = vmax.f32 %v4777, %v4785
        %v4798 = vmax.f32 %v4779, %v4787
        %v4799 = vmax.f32 %v4781, %v4789
        %v4800 = vpack.c.bf16 %v4797, %v4796
        %v4801 = vpack.c.bf16 %v4799, %v4798
        %v4802 = vld [vmem:[%s5] sm:$0xf]
        %v4803 = vld [vmem:[%s5 + $0x4] sm:$0xf]
        %v4804 = vld [vmem:[%s5 + $0x8] sm:$0xf]
        %v4805 = vld [vmem:[%s5 + $0xc] sm:$0xf]
        %v4806 = vld [vmem:[%s5 + $0x10] sm:$0xf]
        %v4807 = vld [vmem:[%s5 + $0x14] sm:$0xf]
        %v4808 = vld [vmem:[%s5 + $0x18] sm:$0xf]
        %v4809 = vld [vmem:[%s5 + $0x1c] sm:$0xf]
        %v4810 = vld [vmem:[%s5 + $0x20] sm:$0xf]
        %v4811 = vld [vmem:[%s5 + $0x24] sm:$0xf]
        %v4812 = vld [vmem:[%s5 + $0x28] sm:$0xf]
        %v4813 = vld [vmem:[%s5 + $0x2c] sm:$0xf]
        %v4814 = vld [vmem:[%s5 + $0x30] sm:$0xf]
        %v4815 = vld [vmem:[%s5 + $0x34] sm:$0xf]
        %v4816 = vld [vmem:[%s5 + $0x38] sm:$0xf]
        %v4817 = vld [vmem:[%s5 + $0x3c] sm:$0xf]
        %v4818 = vld [vmem:[%s6] sm:$0xf]
        %v4819 = vld [vmem:[%s6 + $0x4] sm:$0xf]
        %v4820 = vld [vmem:[%s6 + $0x8] sm:$0xf]
        %v4821 = vld [vmem:[%s6 + $0xc] sm:$0xf]
        %v4822 = vld [vmem:[%s6 + $0x10] sm:$0xf]
        %v4823 = vld [vmem:[%s6 + $0x14] sm:$0xf]
        %v4824 = vld [vmem:[%s6 + $0x18] sm:$0xf]
        %v4825 = vld [vmem:[%s6 + $0x1c] sm:$0xf]
        %v4826 = vld [vmem:[%s6 + $0x20] sm:$0xf]
        %v4827 = vld [vmem:[%s6 + $0x24] sm:$0xf]
        %v4828 = vld [vmem:[%s6 + $0x28] sm:$0xf]
        %v4829 = vld [vmem:[%s6 + $0x2c] sm:$0xf]
        %v4830 = vld [vmem:[%s6 + $0x30] sm:$0xf]
        %v4831 = vld [vmem:[%s6 + $0x34] sm:$0xf]
        %v4832 = vld [vmem:[%s6 + $0x38] sm:$0xf]
        %v4833 = vld [vmem:[%s6 + $0x3c] sm:$0xf]
        %v4850 = vunpack.c.l.b16 %v4818
        %v4851 = vunpack.c.l.b16 %v4819
        %v4852 = vunpack.c.l.b16 %v4820
        %v4853 = vunpack.c.l.b16 %v4821
        %v4854 = vunpack.c.l.b16 %v4822
        %v4855 = vunpack.c.l.b16 %v4823
        %v4856 = vunpack.c.l.b16 %v4824
        %v4857 = vunpack.c.l.b16 %v4825
        %v4858 = vunpack.c.l.b16 %v4826
        %v4859 = vunpack.c.l.b16 %v4827
        %v4860 = vunpack.c.l.b16 %v4828
        %v4861 = vunpack.c.l.b16 %v4829
        %v4862 = vunpack.c.l.b16 %v4830
        %v4863 = vunpack.c.l.b16 %v4831
        %v4864 = vunpack.c.l.b16 %v4832
        %v4865 = vunpack.c.l.b16 %v4833
        %v4866 = vpack.c.b16 %v4851, %v4850
        %v4867 = vpack.c.b16 %v4853, %v4852
        %v4868 = vpack.c.b16 %v4855, %v4854
        %v4869 = vpack.c.b16 %v4857, %v4856
        %v4870 = vpack.c.b16 %v4859, %v4858
        %v4871 = vpack.c.b16 %v4861, %v4860
        %v4872 = vpack.c.b16 %v4863, %v4862
        %v4873 = vpack.c.b16 %v4865, %v4864
        %4882 = vmatprep.subr.bf16.mxu0 0
        %4883 = vmatpush1.bf16.msra.mxu0 %v4866
        %4884 = vmatprep.subr.bf16.mxu0 0
        %4885 = vmatpush1.bf16.msra.mxu0 %v4867
        %4886 = vmatprep.subr.bf16.mxu0 0
        %4887 = vmatpush1.bf16.msra.mxu0 %v4868
        %4888 = vmatprep.subr.bf16.mxu0 0
        %4889 = vmatpush1.bf16.msra.mxu0 %v4869
        %4890 = vmatprep.subr.bf16.mxu0 0
        %4891 = vmatpush1.bf16.msra.mxu0 %v4870
        %4892 = vmatprep.subr.bf16.mxu0 0
        %4893 = vmatpush1.bf16.msra.mxu0 %v4871
        %4894 = vmatprep.subr.bf16.mxu0 0
        %4895 = vmatpush1.bf16.msra.mxu0 %v4872
        %4896 = vmatprep.subr.bf16.mxu0 0
        %4897 = vmatpush1.bf16.msra.mxu0 %v4873
        %4898 = vmatprep.subr.bf16.mxu0 0
        %4899 = vmatpush1.bf16.msra.mxu0 0
        %4900 = vmatprep.subr.bf16.mxu0 0
        %4901 = vmatpush1.bf16.msra.mxu0 0
        %4902 = vmatprep.subr.bf16.mxu0 0
        %4903 = vmatpush1.bf16.msra.mxu0 0
        %4904 = vmatprep.subr.bf16.mxu0 0
        %4905 = vmatpush1.bf16.msra.mxu0 0
        %4906 = vmatprep.subr.bf16.mxu0 0
        %4907 = vmatpush1.bf16.msra.mxu0 0
        %4908 = vmatprep.subr.bf16.mxu0 0
        %4909 = vmatpush1.bf16.msra.mxu0 0
        %4910 = vmatprep.subr.bf16.mxu0 0
        %4911 = vmatpush1.bf16.msra.mxu0 0
        %4912 = vmatprep.subr.bf16.mxu0 0
        %4913 = vmatpush1.bf16.msra.mxu0 0
        %4914 = vmatprep.mubr.bf16.mxu0 0
        %4915 = vmatmul.mubr.bf16.gmra.mrb[0].mxu0 %v4800
        %v4916 = vpop.f32.mrb[0].mxu0
        %v4917 = vadd.f32 0.0, %v4916
        %v4918 = vpop.f32.mrb[0].mxu0
        %v4919 = vpop.f32.mrb[0].mxu0
        %v4920 = vadd.f32 0.0, %v4919
        %v4921 = vpop.f32.mrb[0].mxu0
        %4922 = vmatprep.mubr.bf16.mxu0 0
        %4923 = vmatmul.mubr.bf16.gmra.mrb[0].mxu0 %v4801
        %v4924 = vpop.f32.mrb[0].mxu0
        %v4925 = vadd.f32 0.0, %v4924
        %v4926 = vpop.f32.mrb[0].mxu0
        %v4927 = vpop.f32.mrb[0].mxu0
        %v4928 = vadd.f32 0.0, %v4927
        %v4929 = vpop.f32.mrb[0].mxu0
        %4930 = vdwg.mxu0
        %v4947 = vunpack.c.l.b16 %v4802
        %v4948 = vunpack.c.l.b16 %v4803
        %v4949 = vunpack.c.l.b16 %v4804
        %v4950 = vunpack.c.l.b16 %v4805
        %v4951 = vunpack.c.l.b16 %v4806
        %v4952 = vunpack.c.l.b16 %v4807
        %v4953 = vunpack.c.l.b16 %v4808
        %v4954 = vunpack.c.l.b16 %v4809
        %v4955 = vunpack.c.l.b16 %v4810
        %v4956 = vunpack.c.l.b16 %v4811
        %v4957 = vunpack.c.l.b16 %v4812
        %v4958 = vunpack.c.l.b16 %v4813
        %v4959 = vunpack.c.l.b16 %v4814
        %v4960 = vunpack.c.l.b16 %v4815
        %v4961 = vunpack.c.l.b16 %v4816
        %v4962 = vunpack.c.l.b16 %v4817
        %v4963 = vpack.c.b16 %v4948, %v4947
        %v4964 = vpack.c.b16 %v4950, %v4949
        %v4965 = vpack.c.b16 %v4952, %v4951
        %v4966 = vpack.c.b16 %v4954, %v4953
        %v4967 = vpack.c.b16 %v4956, %v4955
        %v4968 = vpack.c.b16 %v4958, %v4957
        %v4969 = vpack.c.b16 %v4960, %v4959
        %v4970 = vpack.c.b16 %v4962, %v4961
        %4979 = vmatprep.subr.bf16.mxu0 0
        %4980 = vmatpush1.bf16.msra.mxu0 %v4963
        %4981 = vmatprep.subr.bf16.mxu0 0
        %4982 = vmatpush1.bf16.msra.mxu0 %v4964
        %4983 = vmatprep.subr.bf16.mxu0 0
        %4984 = vmatpush1.bf16.msra.mxu0 %v4965
        %4985 = vmatprep.subr.bf16.mxu0 0
        %4986 = vmatpush1.bf16.msra.mxu0 %v4966
        %4987 = vmatprep.subr.bf16.mxu0 0
        %4988 = vmatpush1.bf16.msra.mxu0 %v4967
        %4989 = vmatprep.subr.bf16.mxu0 0
        %4990 = vmatpush1.bf16.msra.mxu0 %v4968
        %4991 = vmatprep.subr.bf16.mxu0 0
        %4992 = vmatpush1.bf16.msra.mxu0 %v4969
        %4993 = vmatprep.subr.bf16.mxu0 0
        %4994 = vmatpush1.bf16.msra.mxu0 %v4970
        %4995 = vmatprep.subr.bf16.mxu0 0
        %4996 = vmatpush1.bf16.msra.mxu0 0
        %4997 = vmatprep.subr.bf16.mxu0 0
        %4998 = vmatpush1.bf16.msra.mxu0 0
        %4999 = vmatprep.subr.bf16.mxu0 0
        %5000 = vmatpush1.bf16.msra.mxu0 0
        %5001 = vmatprep.subr.bf16.mxu0 0
        %5002 = vmatpush1.bf16.msra.mxu0 0
        %5003 = vmatprep.subr.bf16.mxu0 0
        %5004 = vmatpush1.bf16.msra.mxu0 0
        %5005 = vmatprep.subr.bf16.mxu0 0
        %5006 = vmatpush1.bf16.msra.mxu0 0
        %5007 = vmatprep.subr.bf16.mxu0 0
        %5008 = vmatpush1.bf16.msra.mxu0 0
        %5009 = vmatprep.subr.bf16.mxu0 0
        %5010 = vmatpush1.bf16.msra.mxu0 0
        %5011 = vmatprep.mubr.bf16.mxu0 0
        %5012 = vmatmul.mubr.bf16.gmra.mrb[0].mxu0 %v4794
        %v5013 = vpop.f32.mrb[0].mxu0
        %v5014 = vadd.f32 %v4917, %v5013
        %v5015 = vpop.f32.mrb[0].mxu0
        %v5016 = vpop.f32.mrb[0].mxu0
        %v5017 = vadd.f32 %v4920, %v5016
        %v5018 = vpop.f32.mrb[0].mxu0
        %5019 = vmatprep.mubr.bf16.mxu0 0
        %5020 = vmatmul.mubr.bf16.gmra.mrb[0].mxu0 %v4795
        %v5021 = vpop.f32.mrb[0].mxu0
        %v5022 = vadd.f32 %v4925, %v5021
        %v5023 = vpop.f32.mrb[0].mxu0
        %v5024 = vpop.f32.mrb[0].mxu0
        %v5025 = vadd.f32 %v4928, %v5024
        %v5026 = vpop.f32.mrb[0].mxu0
        %5027 = vdwg.mxu0
        %v5028 = vld [vmem:[%s7] sm:$0x1]
        %v5030 = vlaneseq
        %v5031 = vshrl.u32 %v5030, 7
        %v5032 = vsub.s32 0, %v5031
        %v5033 = vrot.slane %v5028, %v5032
        %v5035 = vadd.f32 %v5014, %v5033
        %v5036 = vadd.f32 %v5017, %v5033
        %v5037 = vadd.f32 %v5022, %v5033
        %v5038 = vadd.f32 %v5025, %v5033
        %5039 = vst [vmem:[%s299] sm:$0xff] %v5035
        %5040 = vst [vmem:[%s299 + $0x8] sm:$0xff] %v5036
        %5041 = vst [vmem:[%s299 + $0x10] sm:$0xff] %v5037
        %5042 = vst [vmem:[%s299 + $0x18] sm:$0xff] %v5038
        %s5043 = sand.u32 %s203, 1
        %s5044 = scalar_lea.sflag [#allocation9], %s5043
        %s5045 = sand.u32 %s203, 1
        %s5046 = smul.addr %s5045, 32
        %s5047 = scalar_lea.vmem [#allocation8], %s5046
        // Predicated region
        $region53: #{tpu_custom_call.1} parent=51 // pred_check
          %p5048 = pneg %p213
        $region54: #{tpu_custom_call.1} parent=51 // pred_check_branch
          %5050 = sbr.rel (%p5048) target = $region56
        $region55: #{tpu_custom_call.1} parent=51 // pred_region
          %s5051 = smul.u32 4, %s22
          %s5053 = ssub.s32 512, 512
          %5054 = vsyncadd %s5044, %s5053
          %s5055 = smul.addr %s5051, 128
          %s5056 = scalar_lea.hbm %s8, %s5055
          %s5057 = sshll.u32 %s5047, 4
          %s5058 = int_to_ptr.vmem [resolvable:$true] %s5057
          %5063 = dma.vmem_to_hbm [thread:$0]  %s5058, 512, %s5056, %s5044, 128, 128, 8
        $region56: #{tpu_custom_call.1} parent=51 // pred_fallthru
          _
      $region52: #{tpu_custom_call.1} parent=5 // pred_fallthru
        _
      %p5064 = scmp.le.s32.totalorder 2, %s17
      // Predicated region
      $region57: #{tpu_custom_call.1} parent=5 // pred_check
        %p5065 = pneg %p5064
      $region58: #{tpu_custom_call.1} parent=5 // pred_check_branch
        %5067 = sbr.rel (%p5065) target = $region60
      $region59: #{tpu_custom_call.1} parent=5 // pred_region
        %s5068 = ssub.s32 %s17, 2
        // Predicated region
        $region61: #{tpu_custom_call.1} parent=59 // pred_check
          %p5069 = pneg %p219
        $region62: #{tpu_custom_call.1} parent=59 // pred_check_branch
          %5071 = sbr.rel (%p5069) target = $region64
        $region63: #{tpu_custom_call.1} parent=59 // pred_region
          %s5072 = sand.u32 %s204, 1
          %s5073 = scalar_lea.sflag [#allocation9], %s5072
          %s5074 = sand.u32 %s204, 1
          %s5075 = smul.addr %s5074, 32
          %s5076 = scalar_lea.vmem [#allocation8], %s5075
          %5077 = dma.done %s5073, 512
        $region64: #{tpu_custom_call.1} parent=59 // pred_fallthru
          _
      $region60: #{tpu_custom_call.1} parent=5 // pred_fallthru
        _
    $region6: #{tpu_custom_call.1} parent=1 // loop_footer
      %s21 = sadd.s32 1, %s17
    $region7: #{tpu_custom_call.1} parent=1 // loop_footer_branch
      %16 = sbr.rel target = $region3
    $region8: #{tpu_custom_call.1} parent=1 // loop_exit
      _
    %5078 = vsyncpa [#allocation9], 1
    %s5079 = scalar_lea.sflag [#allocation9], 1
    %5080 = vsyncpa %s5079, 1

</llo_original>
